<compile_context>
chip_gen: v7x
topology: tpu7x:2x2x1
jax: 0.10.0
libtpu: 0.0.40
codegen_flags: <defaults>
</compile_context>

<pallas_src>
import functools
import math

import jax
import jax.numpy as jnp
from jax.experimental import pallas as pl
from jax.experimental.pallas import tpu as pltpu


def _round_up(a, b):
    return ((a + b - 1) // b) * b


# --------------------------------------------------------------------------
# Phase 1: fused projection (all heads + el logits in ONE MXU matmul).
# --------------------------------------------------------------------------
def src_project_kernel(x_ref, wcat_ref, feat_ref, el_ref, *, hf):
    # x_ref [TS, Din]   wcat_ref [Din, H*F + H] = [W_all | W @ attn_l]
    # feat_ref [TS, H*F] (bf16)   el_ref [TS, H] (f32)
    y = jnp.dot(x_ref[...], wcat_ref[...], preferred_element_type=jnp.float32)
    feat_ref[...] = y[:, :hf].astype(feat_ref.dtype)
    el_ref[...] = y[:, hf:]


def dst_logit_kernel(x_ref, war_ref, er_ref):
    # x_ref [TD, Din]   war_ref [Din, H]   er_ref [TD, H]
    er_ref[...] = jnp.dot(x_ref[...], war_ref[...],
                          preferred_element_type=jnp.float32)


# --------------------------------------------------------------------------
# Phase 2: tiled edge-softmax + aggregation with lane-dense VMEM accumulators.
# --------------------------------------------------------------------------
def gat_attn_kernel(fs_ref, el_ref, er_ref, adj_ref, out_ref, acc_ref, den_ref,
                    *, num_heads, out_feats, negative_slope):
    # fs_ref [TS, H*F] (bf16)  el_ref [H, TS]  er_ref [TD, H]  adj_ref [TD, TS] (int8)
    # out_ref [TD, H*F]
    # acc_ref [TD, H*F]  den_ref [TD, H*F]   (VMEM scratch, persist over src axis)
    s_idx = pl.program_id(1)
    n_s = pl.num_programs(1)

    @pl.when(s_idx == 0)
    def _init():
        acc_ref[...] = jnp.zeros_like(acc_ref)
        den_ref[...] = jnp.zeros_like(den_ref)

    edge = adj_ref[...] != 0                             # int8 compare, no f32 cast
    fs = fs_ref[...]                                     # [TS, H*F] bf16
    el = el_ref[...]                                     # [H, TS]   f32
    er = er_ref[...]                                     # [TD, H]   f32

    F = out_feats
    # H is small (2) so a static unroll is fine; for H >= 4-8 with large tiles
    # switch to lax.fori_loop to bound the live ranges of the [TD,TS] temporaries.
    for h in range(num_heads):
        e = er[:, h:h + 1] + el[h:h + 1, :]              # [TD, TS]  (u_add_v)
        e = jnp.where(e > 0.0, e, negative_slope * e)    # leaky_relu (f32, v5e-safe)
        # Masked exp: non-edge / padded entries are exactly 0 (no inf*0 NaN).
        s = jnp.where(edge, jnp.exp(e), 0.0)             # [TD, TS]  f32
        # Denominator, broadcast across the head's F lanes (keeps finalize
        # fully elementwise and lane-dense).
        den_ref[:, h * F:(h + 1) * F] += jnp.sum(s, axis=-1, keepdims=True)
        # bf16 x bf16 -> f32 accumulate (MXU-native operands).
        acc_ref[:, h * F:(h + 1) * F] += jnp.dot(
            s.astype(fs.dtype), fs[:, h * F:(h + 1) * F],
            preferred_element_type=jnp.float32)

    @pl.when(s_idx == n_s - 1)
    def _finalize():
        den = den_ref[...]                               # [TD, H*F]
        den_safe = jnp.where(den > 0.0, den, 1.0)
        # Guard zero in-degree (and padded dst rows): emit 0, not NaN.
        inv = jnp.where(den > 0.0, pl.reciprocal(den_safe, approx=True), 0.0)
        out_ref[...] = (acc_ref[...] * inv).astype(out_ref.dtype)


# --------------------------------------------------------------------------
# Wrapper
# --------------------------------------------------------------------------
def gat_layer_pallas(x_src, x_dst, W, attn_l, attn_r, adj,
                     negative_slope=0.2, tile_dst=256, tile_src=256):
    """x_src [N_src, Din], x_dst [N_dst, Din], W [H, Din, F],
    attn_l/attn_r [H, 1, F], adj [N_dst, N_src] (nonzero -> edge u->v).
    Returns [N_dst, H, F] (same as the PyTorch module)."""
    H, Din, F = W.shape
    HF = H * F
    N_src, N_dst = x_src.shape[0], x_dst.shape[0]
    TD, TS = tile_dst, tile_src

    # Parameter-side fusions (tiny, done once):
    #   W_all packs all heads onto the lane axis; w_al / w_ar fold the
    #   attention-logit reduction into the projection; W_cat fuses W_all and
    #   w_al into ONE matmul operand.
    W_all = jnp.transpose(W, (1, 0, 2)).reshape(Din, HF)           # [Din, H*F]
    w_al = jnp.einsum('hdf,hf->dh', W, attn_l[:, 0, :])            # [Din, H]
    w_ar = jnp.einsum('hdf,hf->dh', W, attn_r[:, 0, :])            # [Din, H]
    W_cat = jnp.concatenate([W_all, w_al], axis=1)                 # [Din, H*F + H]

    # Pad node counts to tile multiples (padded entries are masked by adj == 0).
    Ns_p = _round_up(N_src, TS)
    Nd_p = _round_up(N_dst, TD)
    x_src_p = jnp.pad(x_src, ((0, Ns_p - N_src), (0, 0)))
    x_dst_p = jnp.pad(x_dst, ((0, Nd_p - N_dst), (0, 0)))
    adj_p = jnp.pad(adj.astype(jnp.int8),
                    ((0, Nd_p - N_dst), (0, Ns_p - N_src)))        # int8 stream

    # ---- Phase 1: src projection + el, fused into one matmul ----
    feat_src, el = pl.pallas_call(
        functools.partial(src_project_kernel, hf=HF),
        out_shape=(jax.ShapeDtypeStruct((Ns_p, HF), jnp.bfloat16),
                   jax.ShapeDtypeStruct((Ns_p, H), jnp.float32)),
        grid=(Ns_p // TS,),
        in_specs=[
            pl.BlockSpec((TS, Din), lambda i: (i, 0)),
            pl.BlockSpec((Din, HF + H), lambda i: (0, 0)),
        ],
        out_specs=(
            pl.BlockSpec((TS, HF), lambda i: (i, 0)),
            pl.BlockSpec((TS, H), lambda i: (i, 0)),
        ),
        compiler_params=pltpu.CompilerParams(dimension_semantics=("parallel",)),
    )(x_src_p, W_cat)

    # ---- Phase 1b: er logits for destination nodes ----
    er = pl.pallas_call(
        dst_logit_kernel,
        out_shape=jax.ShapeDtypeStruct((Nd_p, H), jnp.float32),
        grid=(Nd_p // TD,),
        in_specs=[
            pl.BlockSpec((TD, Din), lambda i: (i, 0)),
            pl.BlockSpec((Din, H), lambda i: (0, 0)),
        ],
        out_specs=pl.BlockSpec((TD, H), lambda i: (i, 0)),
        compiler_params=pltpu.CompilerParams(dimension_semantics=("parallel",)),
    )(x_dst_p, w_ar)

    # Row-orient el once, outside the hot kernel (tiny [Ns_p, H] -> [H, Ns_p]).
    el_t = el.T

    # ---- Phase 2: tiled edge softmax + aggregation ----
    kernel = functools.partial(gat_attn_kernel, num_heads=H, out_feats=F,
                               negative_slope=negative_slope)
    out = pl.pallas_call(
        kernel,
        out_shape=jax.ShapeDtypeStruct((Nd_p, HF), jnp.float32),
        grid=(Nd_p // TD, Ns_p // TS),                    # src axis innermost (reduction)
        in_specs=[
            pl.BlockSpec((TS, HF), lambda d, s: (s, 0)),      # feat_src tile (bf16)
            pl.BlockSpec((H, TS), lambda d, s: (0, s)),       # el (row oriented)
            pl.BlockSpec((TD, H), lambda d, s: (d, 0)),       # er
            pl.BlockSpec((TD, TS), lambda d, s: (d, s)),      # adj (int8)
        ],
        out_specs=pl.BlockSpec((TD, HF), lambda d, s: (d, 0)),
        scratch_shapes=[
            pltpu.VMEM((TD, HF), jnp.float32),                # numerator (lane-dense)
            pltpu.VMEM((TD, HF), jnp.float32),                # denominator (broadcast)
        ],
        compiler_params=pltpu.CompilerParams(
            dimension_semantics=("parallel", "arbitrary"),
            vmem_limit_bytes=32 * 1024 * 1024),
    )(feat_src, el_t, er, adj_p)

    # Drop padded rows; [N_dst, H*F] -> [N_dst, H, F] is a free contiguous reshape.
    return out[:N_dst].reshape(N_dst, H, F)


# --------------------------------------------------------------------------
# Pure-JAX reference mirroring the PyTorch/DGL forward (f32 throughout).
# --------------------------------------------------------------------------
def gat_layer_ref(x_src, x_dst, W, attn_l, attn_r, adj):
    fs = jnp.einsum('nd,hdf->nhf', x_src, W)                 # [N_src, H, F]
    fd = jnp.einsum('nd,hdf->nhf', x_dst, W)                 # [N_dst, H, F]
    al = attn_l[:, 0, :]
    ar = attn_r[:, 0, :]
    el = jnp.sum(fs * al[None], axis=-1)                     # [N_src, H]
    er = jnp.sum(fd * ar[None], axis=-1)                     # [N_dst, H]
    e = er[:, None, :] + el[None, :, :]                      # [N_dst, N_src, H]
    e = jnp.where(e > 0, e, 0.2 * e)
    s = jnp.exp(e) * adj[:, :, None]
    out_sum = jnp.sum(s, axis=1, keepdims=True)
    a = s / out_sum
    return jnp.einsum('vuh,uhf->vhf', a, fs)                 # [N_dst, H, F]


def xavier_normal(key, shape, fan_in, fan_out, gain):
    std = gain * math.sqrt(2.0 / (fan_in + fan_out))
    return std * jax.random.normal(key, shape, dtype=jnp.float32)


if __name__ == "__main__":
    # Shapes consistent with the module; large enough to exercise a multi-tile
    # grid (2 dst tiles x 3 src tiles at the 256 default) plus padding.
    N_src, N_dst = 600, 400
    in_feats, out_feats, num_heads = 32, 32, 2
    gain = math.sqrt(2.0)  # calculate_gain('relu')

    key = jax.random.PRNGKey(0)
    k_xs, k_xd, k_w, k_al, k_ar, k_adj = jax.random.split(key, 6)

    x_src = jax.random.normal(k_xs, (N_src, in_feats), dtype=jnp.float32)
    x_dst = jax.random.normal(k_xd, (N_dst, in_feats), dtype=jnp.float32)

    # fc.weight: torch shape [H*F, Din]; stored per-head as [H, Din, F] (y = x @ W_h).
    W = xavier_normal(k_w, (num_heads, in_feats, out_feats),
                      fan_in=in_feats, fan_out=out_feats * num_heads, gain=gain)
    # attn params: torch shape (1, H, F); stored as [H, 1, F].
    attn_l = xavier_normal(k_al, (num_heads, 1, out_feats),
                           fan_in=num_heads * out_feats, fan_out=out_feats, gain=gain)
    attn_r = xavier_normal(k_ar, (num_heads, 1, out_feats),
                           fan_in=num_heads * out_feats, fan_out=out_feats, gain=gain)

    # Sparse-ish bipartite adjacency adj[v, u] as int8; each dst gets >=1 edge
    # (so the reference softmax has no division by zero).
    adj = (jax.random.uniform(k_adj, (N_dst, N_src)) < 0.03).astype(jnp.int8)
    adj = adj.at[jnp.arange(N_dst), jnp.arange(N_dst) % N_src].set(1)

    # TODO(synk): feat_drop / attn_drop are identity at the module defaults (p=0);
    # dropout masks are not implemented in-kernel.
    gat = jax.jit(gat_layer_pallas)
    out = gat(x_src, x_dst, W, attn_l, attn_r, adj)
    out = jax.block_until_ready(out)

    ref = gat_layer_ref(x_src, x_dst, W, attn_l, attn_r, adj.astype(jnp.float32))
    assert out.shape == (N_dst, num_heads, out_feats)
    max_err = float(jnp.max(jnp.abs(out - ref)))
    # bf16 matmul operands (f32 accumulation) -> ~1e-2 relative tolerance.
    assert jnp.allclose(out, ref, rtol=2e-2, atol=2e-2), \
        f"mismatch vs JAX reference (max abs err {max_err})"

    print("KERNEL_OK")
</pallas_src>

<mosaic_0001>
module attributes {stable_mosaic.version = 11 : i64} {
  func.func @src_project_kernel(%arg0: i32, %arg1: memref<256x32xf32, #tpu.memory_space<vmem>>, %arg2: memref<32x66xf32, #tpu.memory_space<vmem>>, %arg3: memref<256x64xbf16, #tpu.memory_space<vmem>>, %arg4: memref<256x2xf32, #tpu.memory_space<vmem>>) attributes {dimension_semantics = [#tpu.dimension_semantics<parallel>], iteration_bounds = array<i64: 3>, scalar_prefetch = 0 : i64, scratch_operands = 0 : i64, tpu.core_type = #tpu.core_type<tc>, window_params = [{transform_indices = @transform_0, window_bounds = array<i64: 256, 32>}, {pipeline_mode = #tpu.pipeline_mode<synchronous>, transform_indices = @transform_1, window_bounds = array<i64: 32, 66>}, {transform_indices = @transform_2, window_bounds = array<i64: 256, 64>}, {transform_indices = @transform_3, window_bounds = array<i64: 256, 2>}]} {
    %c0 = arith.constant 0 : index
    %c0_0 = arith.constant 0 : index
    %0 = vector.load %arg1[%c0, %c0_0] : memref<256x32xf32, #tpu.memory_space<vmem>>, vector<256x32xf32>
    %c0_1 = arith.constant 0 : index
    %c0_2 = arith.constant 0 : index
    %1 = vector.load %arg2[%c0_1, %c0_2] : memref<32x66xf32, #tpu.memory_space<vmem>>, vector<32x66xf32>
    %cst = arith.constant dense<0.000000e+00> : vector<256x66xf32>
    %2 = tpu.matmul %0, %1, %cst {dimension_numbers = #tpu.dot_dimension_numbers<[1], [0], [0], [1], [0, 0, 1, 1], [], []>} : vector<256x32xf32>, vector<32x66xf32>, vector<256x66xf32> -> vector<256x66xf32>
    %3 = vector.extract_strided_slice %2 {offsets = [0, 0], sizes = [256, 64], strides = [1, 1]} : vector<256x66xf32> to vector<256x64xf32>
    %4 = arith.truncf %3 : vector<256x64xf32> to vector<256x64xbf16>
    %c0_3 = arith.constant 0 : index
    %c0_4 = arith.constant 0 : index
    %5 = vector.load %arg3[%c0_3, %c0_4] : memref<256x64xbf16, #tpu.memory_space<vmem>>, vector<256x64xbf16>
    tpu.vector_store %arg3[%c0_3, %c0_4], %4 {strides = array<i32>} : memref<256x64xbf16, #tpu.memory_space<vmem>>, vector<256x64xbf16>,
    %6 = vector.extract_strided_slice %2 {offsets = [0, 64], sizes = [256, 2], strides = [1, 1]} : vector<256x66xf32> to vector<256x2xf32>
    %c0_5 = arith.constant 0 : index
    %c0_6 = arith.constant 0 : index
    %7 = vector.load %arg4[%c0_5, %c0_6] : memref<256x2xf32, #tpu.memory_space<vmem>>, vector<256x2xf32>
    tpu.vector_store %arg4[%c0_5, %c0_6], %6 {strides = array<i32>} : memref<256x2xf32, #tpu.memory_space<vmem>>, vector<256x2xf32>,
    return
  }
  func.func @transform_0(%arg0: i32) -> (i32, i32) {
    %c0_i32 = arith.constant 0 : i32
    %c0_i32_0 = arith.constant 0 : i32
    return %arg0, %c0_i32 : i32, i32
  }
  func.func @transform_1(%arg0: i32) -> (i32, i32) {
    %c0_i32 = arith.constant 0 : i32
    %c0_i32_0 = arith.constant 0 : i32
    %c0_i32_1 = arith.constant 0 : i32
    return %c0_i32, %c0_i32_0 : i32, i32
  }
  func.func @transform_2(%arg0: i32) -> (i32, i32) {
    %c0_i32 = arith.constant 0 : i32
    %c0_i32_0 = arith.constant 0 : i32
    return %arg0, %c0_i32 : i32, i32
  }
  func.func @transform_3(%arg0: i32) -> (i32, i32) {
    %c0_i32 = arith.constant 0 : i32
    %c0_i32_0 = arith.constant 0 : i32
    return %arg0, %c0_i32 : i32, i32
  }
}

module attributes {stable_mosaic.version = 11 : i64} {
  func.func @dst_logit_kernel(%arg0: i32, %arg1: memref<256x32xf32, #tpu.memory_space<vmem>>, %arg2: memref<32x2xf32, #tpu.memory_space<vmem>>, %arg3: memref<256x2xf32, #tpu.memory_space<vmem>>) attributes {dimension_semantics = [#tpu.dimension_semantics<parallel>], iteration_bounds = array<i64: 2>, scalar_prefetch = 0 : i64, scratch_operands = 0 : i64, tpu.core_type = #tpu.core_type<tc>, window_params = [{transform_indices = @transform_0, window_bounds = array<i64: 256, 32>}, {pipeline_mode = #tpu.pipeline_mode<synchronous>, transform_indices = @transform_1, window_bounds = array<i64: 32, 2>}, {transform_indices = @transform_2, window_bounds = array<i64: 256, 2>}]} {
    %c0 = arith.constant 0 : index
    %c0_0 = arith.constant 0 : index
    %0 = vector.load %arg1[%c0, %c0_0] : memref<256x32xf32, #tpu.memory_space<vmem>>, vector<256x32xf32>
    %c0_1 = arith.constant 0 : index
    %c0_2 = arith.constant 0 : index
    %1 = vector.load %arg2[%c0_1, %c0_2] : memref<32x2xf32, #tpu.memory_space<vmem>>, vector<32x2xf32>
    %cst = arith.constant dense<0.000000e+00> : vector<256x2xf32>
    %2 = tpu.matmul %0, %1, %cst {dimension_numbers = #tpu.dot_dimension_numbers<[1], [0], [0], [1], [0, 0, 1, 1], [], []>} : vector<256x32xf32>, vector<32x2xf32>, vector<256x2xf32> -> vector<256x2xf32>
    %c0_3 = arith.constant 0 : index
    %c0_4 = arith.constant 0 : index
    %3 = vector.load %arg3[%c0_3, %c0_4] : memref<256x2xf32, #tpu.memory_space<vmem>>, vector<256x2xf32>
    tpu.vector_store %arg3[%c0_3, %c0_4], %2 {strides = array<i32>} : memref<256x2xf32, #tpu.memory_space<vmem>>, vector<256x2xf32>,
    return
  }
  func.func @transform_0(%arg0: i32) -> (i32, i32) {
    %c0_i32 = arith.constant 0 : i32
    %c0_i32_0 = arith.constant 0 : i32
    return %arg0, %c0_i32 : i32, i32
  }
  func.func @transform_1(%arg0: i32) -> (i32, i32) {
    %c0_i32 = arith.constant 0 : i32
    %c0_i32_0 = arith.constant 0 : i32
    %c0_i32_1 = arith.constant 0 : i32
    return %c0_i32, %c0_i32_0 : i32, i32
  }
  func.func @transform_2(%arg0: i32) -> (i32, i32) {
    %c0_i32 = arith.constant 0 : i32
    %c0_i32_0 = arith.constant 0 : i32
    return %arg0, %c0_i32 : i32, i32
  }
}

module attributes {stable_mosaic.version = 11 : i64} {
  func.func @gat_attn_kernel(%arg0: i32, %arg1: i32, %arg2: memref<256x64xbf16, #tpu.memory_space<vmem>>, %arg3: memref<2x256xf32, #tpu.memory_space<vmem>>, %arg4: memref<256x2xf32, #tpu.memory_space<vmem>>, %arg5: memref<256x256xi8, #tpu.memory_space<vmem>>, %arg6: memref<256x64xf32, #tpu.memory_space<vmem>>, %arg7: memref<256x64xf32, #tpu.memory_space<vmem>>, %arg8: memref<256x64xf32, #tpu.memory_space<vmem>>) attributes {dimension_semantics = [#tpu.dimension_semantics<parallel>, #tpu.dimension_semantics<arbitrary>], iteration_bounds = array<i64: 2, 3>, scalar_prefetch = 0 : i64, scratch_operands = 2 : i64, tpu.core_type = #tpu.core_type<tc>, window_params = [{transform_indices = @transform_0, window_bounds = array<i64: 256, 64>}, {transform_indices = @transform_1, window_bounds = array<i64: 2, 256>}, {transform_indices = @transform_2, window_bounds = array<i64: 256, 2>}, {transform_indices = @transform_3, window_bounds = array<i64: 256, 256>}, {transform_indices = @transform_4, window_bounds = array<i64: 256, 64>}]} {
    %c0_i32 = arith.constant 0 : i32
    %0 = arith.cmpi eq, %arg1, %c0_i32 : i32
    %1 = arith.extui %0 : i1 to i32
    %c0_i32_0 = arith.constant 0 : i32
    %2 = arith.cmpi ne, %1, %c0_i32_0 : i32
    scf.if %2 {
      %cst_33 = arith.constant 0.000000e+00 : f32
      %62 = vector.broadcast %cst_33 : f32 to vector<256x64xf32>
      %c0_34 = arith.constant 0 : index
      %c0_35 = arith.constant 0 : index
      %63 = vector.load %arg7[%c0_34, %c0_35] : memref<256x64xf32, #tpu.memory_space<vmem>>, vector<256x64xf32>
      tpu.vector_store %arg7[%c0_34, %c0_35], %62 {strides = array<i32>} : memref<256x64xf32, #tpu.memory_space<vmem>>, vector<256x64xf32>,
      %cst_36 = arith.constant 0.000000e+00 : f32
      %64 = vector.broadcast %cst_36 : f32 to vector<256x64xf32>
      %c0_37 = arith.constant 0 : index
      %c0_38 = arith.constant 0 : index
      %65 = vector.load %arg8[%c0_37, %c0_38] : memref<256x64xf32, #tpu.memory_space<vmem>>, vector<256x64xf32>
      tpu.vector_store %arg8[%c0_37, %c0_38], %64 {strides = array<i32>} : memref<256x64xf32, #tpu.memory_space<vmem>>, vector<256x64xf32>,
    } else {
    }
    %c0 = arith.constant 0 : index
    %c0_1 = arith.constant 0 : index
    %3 = vector.load %arg5[%c0, %c0_1] : memref<256x256xi8, #tpu.memory_space<vmem>>, vector<256x256xi8>
    %c0_i8 = arith.constant 0 : i8
    %4 = vector.broadcast %c0_i8 : i8 to vector<256x256xi8>
    %5 = arith.cmpi ne, %3, %4 : vector<256x256xi8>
    %c0_2 = arith.constant 0 : index
    %c0_3 = arith.constant 0 : index
    %6 = vector.load %arg2[%c0_2, %c0_3] : memref<256x64xbf16, #tpu.memory_space<vmem>>, vector<256x64xbf16>
    %c0_4 = arith.constant 0 : index
    %c0_5 = arith.constant 0 : index
    %7 = vector.load %arg3[%c0_4, %c0_5] : memref<2x256xf32, #tpu.memory_space<vmem>>, vector<2x256xf32>
    %c0_6 = arith.constant 0 : index
    %c0_7 = arith.constant 0 : index
    %8 = vector.load %arg4[%c0_6, %c0_7] : memref<256x2xf32, #tpu.memory_space<vmem>>, vector<256x2xf32>
    %9 = vector.extract_strided_slice %8 {offsets = [0, 0], sizes = [256, 1], strides = [1, 1]} : vector<256x2xf32> to vector<256x1xf32>
    %10 = vector.extract_strided_slice %7 {offsets = [0, 0], sizes = [1, 256], strides = [1, 1]} : vector<2x256xf32> to vector<1x256xf32>
    %11 = vector.broadcast %9 : vector<256x1xf32> to vector<256x256xf32>
    %12 = vector.broadcast %10 : vector<1x256xf32> to vector<256x256xf32>
    %13 = arith.addf %11, %12 : vector<256x256xf32>
    %cst = arith.constant 0.000000e+00 : f32
    %14 = vector.broadcast %cst : f32 to vector<256x256xf32>
    %15 = arith.cmpf ogt, %13, %14 : vector<256x256xf32>
    %cst_8 = arith.constant 2.000000e-01 : f32
    %16 = vector.broadcast %cst_8 : f32 to vector<256x256xf32>
    %17 = arith.mulf %16, %13 : vector<256x256xf32>
    %18 = arith.select %15, %13, %17 : vector<256x256xi1>, vector<256x256xf32>
    %19 = math.exp %18 : vector<256x256xf32>
    %cst_9 = arith.constant 0.000000e+00 : f32
    %20 = vector.broadcast %cst_9 : f32 to vector<256x256xf32>
    %21 = arith.select %5, %19, %20 : vector<256x256xi1>, vector<256x256xf32>
    %c0_10 = arith.constant 0 : index
    %c0_11 = arith.constant 0 : index
    %22 = vector.load %arg8[%c0_10, %c0_11] : memref<256x64xf32, #tpu.memory_space<vmem>>, vector<256x32xf32>
    %cst_12 = arith.constant dense<0.000000e+00> : vector<256xf32>
    %23 = vector.multi_reduction <add>, %21, %cst_12 [1] : vector<256x256xf32> to vector<256xf32>
    %24 = vector.shape_cast %23 : vector<256xf32> to vector<256x1xf32>
    %25 = vector.broadcast %24 : vector<256x1xf32> to vector<256x32xf32>
    %26 = arith.addf %22, %25 : vector<256x32xf32>
    %c0_13 = arith.constant 0 : index
    %c0_14 = arith.constant 0 : index
    %27 = vector.load %arg8[%c0_13, %c0_14] : memref<256x64xf32, #tpu.memory_space<vmem>>, vector<256x32xf32>
    tpu.vector_store %arg8[%c0_13, %c0_14], %26 {strides = array<i32>} : memref<256x64xf32, #tpu.memory_space<vmem>>, vector<256x32xf32>,
    %c0_15 = arith.constant 0 : index
    %c0_16 = arith.constant 0 : index
    %28 = vector.load %arg7[%c0_15, %c0_16] : memref<256x64xf32, #tpu.memory_space<vmem>>, vector<256x32xf32>
    %29 = arith.truncf %21 : vector<256x256xf32> to vector<256x256xbf16>
    %30 = vector.extract_strided_slice %6 {offsets = [0, 0], sizes = [256, 32], strides = [1, 1]} : vector<256x64xbf16> to vector<256x32xbf16>
    %cst_17 = arith.constant dense<0.000000e+00> : vector<256x32xf32>
    %31 = tpu.matmul %29, %30, %cst_17 {dimension_numbers = #tpu.dot_dimension_numbers<[1], [0], [0], [1], [0, 0, 1, 1], [], []>} : vector<256x256xbf16>, vector<256x32xbf16>, vector<256x32xf32> -> vector<256x32xf32>
    %32 = arith.addf %28, %31 : vector<256x32xf32>
    %c0_18 = arith.constant 0 : index
    %c0_19 = arith.constant 0 : index
    %33 = vector.load %arg7[%c0_18, %c0_19] : memref<256x64xf32, #tpu.memory_space<vmem>>, vector<256x32xf32>
    tpu.vector_store %arg7[%c0_18, %c0_19], %32 {strides = array<i32>} : memref<256x64xf32, #tpu.memory_space<vmem>>, vector<256x32xf32>,
    %34 = vector.extract_strided_slice %8 {offsets = [0, 1], sizes = [256, 1], strides = [1, 1]} : vector<256x2xf32> to vector<256x1xf32>
    %35 = vector.extract_strided_slice %7 {offsets = [1, 0], sizes = [1, 256], strides = [1, 1]} : vector<2x256xf32> to vector<1x256xf32>
    %36 = vector.broadcast %34 : vector<256x1xf32> to vector<256x256xf32>
    %37 = vector.broadcast %35 : vector<1x256xf32> to vector<256x256xf32>
    %38 = arith.addf %36, %37 : vector<256x256xf32>
    %cst_20 = arith.constant 0.000000e+00 : f32
    %39 = vector.broadcast %cst_20 : f32 to vector<256x256xf32>
    %40 = arith.cmpf ogt, %38, %39 : vector<256x256xf32>
    %cst_21 = arith.constant 2.000000e-01 : f32
    %41 = vector.broadcast %cst_21 : f32 to vector<256x256xf32>
    %42 = arith.mulf %41, %38 : vector<256x256xf32>
    %43 = arith.select %40, %38, %42 : vector<256x256xi1>, vector<256x256xf32>
    %44 = math.exp %43 : vector<256x256xf32>
    %cst_22 = arith.constant 0.000000e+00 : f32
    %45 = vector.broadcast %cst_22 : f32 to vector<256x256xf32>
    %46 = arith.select %5, %44, %45 : vector<256x256xi1>, vector<256x256xf32>
    %c0_23 = arith.constant 0 : index
    %c32 = arith.constant 32 : index
    %47 = vector.load %arg8[%c0_23, %c32] : memref<256x64xf32, #tpu.memory_space<vmem>>, vector<256x32xf32>
    %cst_24 = arith.constant dense<0.000000e+00> : vector<256xf32>
    %48 = vector.multi_reduction <add>, %46, %cst_24 [1] : vector<256x256xf32> to vector<256xf32>
    %49 = vector.shape_cast %48 : vector<256xf32> to vector<256x1xf32>
    %50 = vector.broadcast %49 : vector<256x1xf32> to vector<256x32xf32>
    %51 = arith.addf %47, %50 : vector<256x32xf32>
    %c0_25 = arith.constant 0 : index
    %c32_26 = arith.constant 32 : index
    %52 = vector.load %arg8[%c0_25, %c32_26] : memref<256x64xf32, #tpu.memory_space<vmem>>, vector<256x32xf32>
    tpu.vector_store %arg8[%c0_25, %c32_26], %51 {strides = array<i32>} : memref<256x64xf32, #tpu.memory_space<vmem>>, vector<256x32xf32>,
    %c0_27 = arith.constant 0 : index
    %c32_28 = arith.constant 32 : index
    %53 = vector.load %arg7[%c0_27, %c32_28] : memref<256x64xf32, #tpu.memory_space<vmem>>, vector<256x32xf32>
    %54 = arith.truncf %46 : vector<256x256xf32> to vector<256x256xbf16>
    %55 = vector.extract_strided_slice %6 {offsets = [0, 32], sizes = [256, 32], strides = [1, 1]} : vector<256x64xbf16> to vector<256x32xbf16>
    %cst_29 = arith.constant dense<0.000000e+00> : vector<256x32xf32>
    %56 = tpu.matmul %54, %55, %cst_29 {dimension_numbers = #tpu.dot_dimension_numbers<[1], [0], [0], [1], [0, 0, 1, 1], [], []>} : vector<256x256xbf16>, vector<256x32xbf16>, vector<256x32xf32> -> vector<256x32xf32>
    %57 = arith.addf %53, %56 : vector<256x32xf32>
    %c0_30 = arith.constant 0 : index
    %c32_31 = arith.constant 32 : index
    %58 = vector.load %arg7[%c0_30, %c32_31] : memref<256x64xf32, #tpu.memory_space<vmem>>, vector<256x32xf32>
    tpu.vector_store %arg7[%c0_30, %c32_31], %57 {strides = array<i32>} : memref<256x64xf32, #tpu.memory_space<vmem>>, vector<256x32xf32>,
    %c2_i32 = arith.constant 2 : i32
    %59 = arith.cmpi eq, %arg1, %c2_i32 : i32
    %60 = arith.extui %59 : i1 to i32
    %c0_i32_32 = arith.constant 0 : i32
    %61 = arith.cmpi ne, %60, %c0_i32_32 : i32
    scf.if %61 {
      %c0_33 = arith.constant 0 : index
      %c0_34 = arith.constant 0 : index
      %62 = vector.load %arg8[%c0_33, %c0_34] : memref<256x64xf32, #tpu.memory_space<vmem>>, vector<256x64xf32>
      %cst_35 = arith.constant 0.000000e+00 : f32
      %63 = vector.broadcast %cst_35 : f32 to vector<256x64xf32>
      %64 = arith.cmpf ogt, %62, %63 : vector<256x64xf32>
      %cst_36 = arith.constant 1.000000e+00 : f32
      %65 = vector.broadcast %cst_36 : f32 to vector<256x64xf32>
      %66 = arith.select %64, %62, %65 : vector<256x64xi1>, vector<256x64xf32>
      %cst_37 = arith.constant 0.000000e+00 : f32
      %67 = vector.broadcast %cst_37 : f32 to vector<256x64xf32>
      %68 = arith.cmpf ogt, %62, %67 : vector<256x64xf32>
      %69 = tpu.reciprocal %66 {approx = true} : vector<256x64xf32> -> vector<256x64xf32>
      %cst_38 = arith.constant 0.000000e+00 : f32
      %70 = vector.broadcast %cst_38 : f32 to vector<256x64xf32>
      %71 = arith.select %68, %69, %70 : vector<256x64xi1>, vector<256x64xf32>
      %c0_39 = arith.constant 0 : index
      %c0_40 = arith.constant 0 : index
      %72 = vector.load %arg7[%c0_39, %c0_40] : memref<256x64xf32, #tpu.memory_space<vmem>>, vector<256x64xf32>
      %73 = arith.mulf %72, %71 : vector<256x64xf32>
      %c0_41 = arith.constant 0 : index
      %c0_42 = arith.constant 0 : index
      %74 = vector.load %arg6[%c0_41, %c0_42] : memref<256x64xf32, #tpu.memory_space<vmem>>, vector<256x64xf32>
      tpu.vector_store %arg6[%c0_41, %c0_42], %73 {strides = array<i32>} : memref<256x64xf32, #tpu.memory_space<vmem>>, vector<256x64xf32>,
    } else {
    }
    return
  }
  func.func @transform_0(%arg0: i32, %arg1: i32) -> (i32, i32) {
    %c0_i32 = arith.constant 0 : i32
    %c0_i32_0 = arith.constant 0 : i32
    return %arg1, %c0_i32 : i32, i32
  }
  func.func @transform_1(%arg0: i32, %arg1: i32) -> (i32, i32) {
    %c0_i32 = arith.constant 0 : i32
    %c0_i32_0 = arith.constant 0 : i32
    return %c0_i32, %arg1 : i32, i32
  }
  func.func @transform_2(%arg0: i32, %arg1: i32) -> (i32, i32) {
    %c0_i32 = arith.constant 0 : i32
    %c0_i32_0 = arith.constant 0 : i32
    return %arg0, %c0_i32 : i32, i32
  }
  func.func @transform_3(%arg0: i32, %arg1: i32) -> (i32, i32) {
    %c0_i32 = arith.constant 0 : i32
    return %arg0, %arg1 : i32, i32
  }
  func.func @transform_4(%arg0: i32, %arg1: i32) -> (i32, i32) {
    %c0_i32 = arith.constant 0 : i32
    %c0_i32_0 = arith.constant 0 : i32
    return %arg0, %c0_i32 : i32, i32
  }
}

</mosaic_0001>

<llo_original>
// kernel: gat_layer_pallas.4
$region0: #{gat_layer_pallas.4}
  #allocation0 [shape = 'u32[]', space=smem, size = 0x4, offset = 0x4, fixed_abs, tag = 'smem constant byte address 0x4 - core index']
  #allocation1 [shape = 'u32[144,128]{1,0:T(1,128)}', space=vmem, size = 0x12000, scoped, tag = 'internal scratch']
  %s0 = inlined_call_operand.vmem [shape: f32[512,32], index: 0, kind: input, shape index: {}]
  %s1 = inlined_call_operand.vmem [shape: f32[32,2], index: 1, kind: input, shape index: {}]
  %s2 = inlined_call_operand.vmem [shape: f32[512,2], index: 2, kind: output, shape index: {}]
  %s3 = sld [smem:[#allocation0]]
  $region41: #{gat_layer_pallas.4} parent=0
    _
  %s5 = ssub.s32 1, %s3
  %s6 = scalar_select 0, %s5, %s3
  loop: start=0, step=1, limit=4
  $region2: #{gat_layer_pallas.4} parent=0 // loop_pre_header
    _
  $region3: #{gat_layer_pallas.4} parent=0 // loop_header
    %s8 = sphi 0, %s12
    %p9 = scmp.ge.s32.totalorder %s8, 4
    %s18 = sphi 0, %s20
    %s21 = sphi 0, %s18
    %s22 = sphi 0, %s21
    %s38 = sphi 0, %s22
    %s42 = sphi 0, %s42
    %s44 = sphi 0, %s42
    %s45 = sphi 0, %s44
    %s59 = sphi 0, %s45
    %s65 = sphi 0, %s67
    %s68 = sphi 0, %s65
    %s69 = sphi 0, %s68
    %s85 = sphi 0, %s69
  $region4: #{gat_layer_pallas.4} parent=0 // loop_header_branch
    %11 = sbr.rel (%p9) target = $region8
  $region5: #{gat_layer_pallas.4} parent=0 // loop_body
    %s13 = ssub.s32 %s8, 1
    %s14 = ssub.s32 %s8, 2
    %s15 = sadd.s32 %s8, 1
    %s16 = ssub.s32 %s8, %s15
    %p17 = scmp.eq.s32.totalorder %s16, 0
    %s19 = sadd.s32 %s18, 1
    %s20 = scalar_select %p17, %s18, %s19
    %p23 = pneg %p17
    %p24 = scmp.eq.s32.totalorder %s8, 1
    %p25 = por %p23, %p24
    %p26 = scmp.ne.s32.totalorder %s18, %s21
    %p27 = scmp.eq.s32.totalorder %s8, 0
    %p28 = por %p26, %p27
    %p29 = scmp.ne.s32.totalorder %s18, %s21
    %p30 = scmp.eq.s32.totalorder %s13, 1
    %p31 = por %p29, %p30
    %p32 = scmp.ne.s32.totalorder %s21, %s22
    %p33 = scmp.eq.s32.totalorder %s13, 0
    %p34 = por %p32, %p33
    %p35 = scmp.ne.s32.totalorder %s21, %s22
    %p36 = scmp.eq.s32.totalorder %s14, 1
    %p37 = por %p35, %p36
    %p39 = scmp.ne.s32.totalorder %s22, %s38
    %p40 = scmp.eq.s32.totalorder %s14, 0
    %p41 = por %p39, %p40
    %s43 = sadd.s32 %s42, 1
    %p46 = scmp.eq.s32.totalorder %s8, 1
    %p47 = scmp.ne.s32.totalorder %s42, %s44
    %p48 = scmp.eq.s32.totalorder %s8, 0
    %p49 = por %p47, %p48
    %p50 = scmp.ne.s32.totalorder %s42, %s44
    %p51 = scmp.eq.s32.totalorder %s13, 1
    %p52 = por %p50, %p51
    %p53 = scmp.ne.s32.totalorder %s44, %s45
    %p54 = scmp.eq.s32.totalorder %s13, 0
    %p55 = por %p53, %p54
    %p56 = scmp.ne.s32.totalorder %s44, %s45
    %p57 = scmp.eq.s32.totalorder %s14, 1
    %p58 = por %p56, %p57
    %p60 = scmp.ne.s32.totalorder %s45, %s59
    %p61 = scmp.eq.s32.totalorder %s14, 0
    %p62 = por %p60, %p61
    %s63 = ssub.s32 %s8, %s15
    %p64 = scmp.eq.s32.totalorder %s63, 0
    %s66 = sadd.s32 %s65, 1
    %s67 = scalar_select %p64, %s65, %s66
    %p70 = pneg %p64
    %p71 = scmp.eq.s32.totalorder %s8, 1
    %p72 = por %p70, %p71
    %p73 = scmp.ne.s32.totalorder %s65, %s68
    %p74 = scmp.eq.s32.totalorder %s8, 0
    %p75 = por %p73, %p74
    %p76 = scmp.ne.s32.totalorder %s65, %s68
    %p77 = scmp.eq.s32.totalorder %s13, 1
    %p78 = por %p76, %p77
    %p79 = scmp.ne.s32.totalorder %s68, %s69
    %p80 = scmp.eq.s32.totalorder %s13, 0
    %p81 = por %p79, %p80
    %p82 = scmp.ne.s32.totalorder %s68, %s69
    %p83 = scmp.eq.s32.totalorder %s14, 1
    %p84 = por %p82, %p83
    %p86 = scmp.ne.s32.totalorder %s69, %s85
    %p87 = scmp.eq.s32.totalorder %s14, 0
    %p88 = por %p86, %p87
    %p89 = scmp.le.s32.totalorder 1, %s8
    %p90 = scmp.lt.s32.totalorder %s8, 3
    %p91 = pnand %p89, %p90
    %p92 = pneg %p91
    // Predicated region
    $region9: #{gat_layer_pallas.4} parent=5 // pred_check
      _
    $region10: #{gat_layer_pallas.4} parent=5 // pred_check_branch
      %94 = sbr.rel (%p91) target = $region12
    $region11: #{gat_layer_pallas.4} parent=5 // pred_region
      %s95 = ssub.s32 %s8, 1
      // Predicated region
      $region13: #{gat_layer_pallas.4} parent=11 // pred_check
        %p96 = pneg %p55
      $region14: #{gat_layer_pallas.4} parent=11 // pred_check_branch
        %98 = sbr.rel (%p96) target = $region16
      $region15: #{gat_layer_pallas.4} parent=11 // pred_region
        _
      $region16: #{gat_layer_pallas.4} parent=11 // pred_fallthru
        _
    $region12: #{gat_layer_pallas.4} parent=5 // pred_fallthru
      _
    %p99 = scmp.lt.s32.totalorder %s8, 2
    // Predicated region
    $region17: #{gat_layer_pallas.4} parent=5 // pred_check
      %p100 = pneg %p99
    $region18: #{gat_layer_pallas.4} parent=5 // pred_check_branch
      %102 = sbr.rel (%p100) target = $region20
    $region19: #{gat_layer_pallas.4} parent=5 // pred_region
      // Predicated region
      $region21: #{gat_layer_pallas.4} parent=19 // pred_check
        %p103 = pneg %p28
      $region22: #{gat_layer_pallas.4} parent=19 // pred_check_branch
        %105 = sbr.rel (%p103) target = $region24
      $region23: #{gat_layer_pallas.4} parent=19 // pred_region
        %s106 = smul.u32 32, %s8
        %p107 = scmp.lt.s32.totalorder %s106, 63
        %s108 = scalar_select %p107, %s106, 63
        %s109 = smul.addr %s108, 8
        %s110 = scalar_lea.vmem %s0, %s109
        %s111 = smul.u32 32, %s8
      $region24: #{gat_layer_pallas.4} parent=19 // pred_fallthru
        _
    $region20: #{gat_layer_pallas.4} parent=5 // pred_fallthru
      _
    %p112 = scmp.le.s32.totalorder 1, %s8
    %p113 = scmp.lt.s32.totalorder %s8, 3
    %p114 = pnand %p112, %p113
    %p115 = pneg %p114
    // Predicated region
    $region25: #{gat_layer_pallas.4} parent=5 // pred_check
      _
    $region26: #{gat_layer_pallas.4} parent=5 // pred_check_branch
      %117 = sbr.rel (%p114) target = $region28
    $region27: #{gat_layer_pallas.4} parent=5 // pred_region
      %s118 = ssub.s32 %s8, 1
      %s119 = smul.u32 32, %s13
      %p120 = scmp.lt.s32.totalorder %s119, 63
      %s121 = scalar_select %p120, %s119, 63
      %s122 = smul.addr %s121, 8
      %s123 = scalar_lea.vmem %s0, %s122
      %p124 = pneg %p34
      %p125 = pneg %p31
      %p126 = pneg %p55
      %p127 = pneg %p52
      %p128 = pneg %p81
      %p129 = pneg %p78
      %s130 = smul.u32 32, %s13
      %p131 = scmp.lt.s32.totalorder %s130, 63
      %s132 = scalar_select %p131, %s130, 63
      %s133 = smul.addr %s132, 8
      %s134 = scalar_lea.vmem %s2, %s133
      %s135 = smul.u32 32, %s13
      %p136 = scmp.lt.s32.totalorder %s135, 63
      %s137 = scalar_select %p136, %s135, 63
      %s138 = smul.addr %s137, 8
      %s139 = scalar_lea.vmem %s0, %s138
      %s140 = smul.u32 32, %s13
      %s141 = smul.u32 32, %s13
      %p142 = scmp.lt.s32.totalorder %s141, 63
      %s143 = scalar_select %p142, %s141, 63
      %s144 = smul.addr %s143, 8
      %s145 = scalar_lea.vmem %s2, %s144
      %s146 = smul.u32 32, %s13
      %v147 = vld [vmem:[%s139] sm:$0xff]
      %v148 = vld [vmem:[%s139 + $0x8] sm:$0xff]
      %v149 = vld [vmem:[%s139 + $0x10] sm:$0xff]
      %v150 = vld [vmem:[%s139 + $0x18] sm:$0xff]
      %v151 = vld [vmem:[%s139 + $0x20] sm:$0xff]
      %v152 = vld [vmem:[%s139 + $0x28] sm:$0xff]
      %v153 = vld [vmem:[%s139 + $0x30] sm:$0xff]
      %v154 = vld [vmem:[%s139 + $0x38] sm:$0xff]
      %v155 = vld [vmem:[%s139 + $0x40] sm:$0xff]
      %v156 = vld [vmem:[%s139 + $0x48] sm:$0xff]
      %v157 = vld [vmem:[%s139 + $0x50] sm:$0xff]
      %v158 = vld [vmem:[%s139 + $0x58] sm:$0xff]
      %v159 = vld [vmem:[%s139 + $0x60] sm:$0xff]
      %v160 = vld [vmem:[%s139 + $0x68] sm:$0xff]
      %v161 = vld [vmem:[%s139 + $0x70] sm:$0xff]
      %v162 = vld [vmem:[%s139 + $0x78] sm:$0xff]
      %v163 = vld [vmem:[%s139 + $0x80] sm:$0xff]
      %v164 = vld [vmem:[%s139 + $0x88] sm:$0xff]
      %v165 = vld [vmem:[%s139 + $0x90] sm:$0xff]
      %v166 = vld [vmem:[%s139 + $0x98] sm:$0xff]
      %v167 = vld [vmem:[%s139 + $0xa0] sm:$0xff]
      %v168 = vld [vmem:[%s139 + $0xa8] sm:$0xff]
      %v169 = vld [vmem:[%s139 + $0xb0] sm:$0xff]
      %v170 = vld [vmem:[%s139 + $0xb8] sm:$0xff]
      %v171 = vld [vmem:[%s139 + $0xc0] sm:$0xff]
      %v172 = vld [vmem:[%s139 + $0xc8] sm:$0xff]
      %v173 = vld [vmem:[%s139 + $0xd0] sm:$0xff]
      %v174 = vld [vmem:[%s139 + $0xd8] sm:$0xff]
      %v175 = vld [vmem:[%s139 + $0xe0] sm:$0xff]
      %v176 = vld [vmem:[%s139 + $0xe8] sm:$0xff]
      %v177 = vld [vmem:[%s139 + $0xf0] sm:$0xff]
      %v178 = vld [vmem:[%s139 + $0xf8] sm:$0xff]
      %v179 = vld [vmem:[%s1] sm:$0xff]
      %v180 = vld [vmem:[%s1 + $0x8] sm:$0xff]
      %v181 = vld [vmem:[%s1 + $0x10] sm:$0xff]
      %v182 = vld [vmem:[%s1 + $0x18] sm:$0xff]
      %vm183 = vcmask 261120
      %v185 = vsel %vm183, %v147, 0
      %v188 = vsel %vm183, %v148, 0
      %v191 = vsel %vm183, %v149, 0
      %v194 = vsel %vm183, %v150, 0
      %v197 = vsel %vm183, %v151, 0
      %v200 = vsel %vm183, %v152, 0
      %v203 = vsel %vm183, %v153, 0
      %v206 = vsel %vm183, %v154, 0
      %v209 = vsel %vm183, %v155, 0
      %v212 = vsel %vm183, %v156, 0
      %v215 = vsel %vm183, %v157, 0
      %v218 = vsel %vm183, %v158, 0
      %v221 = vsel %vm183, %v159, 0
      %v224 = vsel %vm183, %v160, 0
      %v227 = vsel %vm183, %v161, 0
      %v230 = vsel %vm183, %v162, 0
      %v233 = vsel %vm183, %v163, 0
      %v236 = vsel %vm183, %v164, 0
      %v239 = vsel %vm183, %v165, 0
      %v242 = vsel %vm183, %v166, 0
      %v245 = vsel %vm183, %v167, 0
      %v248 = vsel %vm183, %v168, 0
      %v251 = vsel %vm183, %v169, 0
      %v254 = vsel %vm183, %v170, 0
      %v257 = vsel %vm183, %v171, 0
      %v260 = vsel %vm183, %v172, 0
      %v263 = vsel %vm183, %v173, 0
      %v266 = vsel %vm183, %v174, 0
      %v269 = vsel %vm183, %v175, 0
      %v272 = vsel %vm183, %v176, 0
      %v275 = vsel %vm183, %v177, 0
      %v278 = vsel %vm183, %v178, 0
      %280 = vmatprep.subr.mxu0 0.0
      %281 = vmatpush1.msra.mxu0 %v179
      %282 = vmatprep.subr.mxu0 0.0
      %283 = vmatpush1.msra.mxu0 %v180
      %284 = vmatprep.subr.mxu0 0.0
      %285 = vmatpush1.msra.mxu0 %v181
      %286 = vmatprep.subr.mxu0 0.0
      %287 = vmatpush1.msra.mxu0 %v182
      %288 = vmatprep.subr.mxu0 0.0
      %289 = vmatpush1.msra.mxu0 0.0
      %290 = vmatprep.subr.mxu0 0.0
      %291 = vmatpush1.msra.mxu0 0.0
      %292 = vmatprep.subr.mxu0 0.0
      %293 = vmatpush1.msra.mxu0 0.0
      %294 = vmatprep.subr.mxu0 0.0
      %295 = vmatpush1.msra.mxu0 0.0
      %296 = vmatprep.subr.mxu0 0.0
      %297 = vmatpush1.msra.mxu0 0.0
      %298 = vmatprep.subr.mxu0 0.0
      %299 = vmatpush1.msra.mxu0 0.0
      %300 = vmatprep.subr.mxu0 0.0
      %301 = vmatpush1.msra.mxu0 0.0
      %302 = vmatprep.subr.mxu0 0.0
      %303 = vmatpush1.msra.mxu0 0.0
      %304 = vmatprep.subr.mxu0 0.0
      %305 = vmatpush1.msra.mxu0 0.0
      %306 = vmatprep.subr.mxu0 0.0
      %307 = vmatpush1.msra.mxu0 0.0
      %308 = vmatprep.subr.mxu0 0.0
      %309 = vmatpush1.msra.mxu0 0.0
      %310 = vmatprep.subr.mxu0 0.0
      %311 = vmatpush1.msra.mxu0 0.0
      %312 = vmatprep.subr.mxu0 0.0
      %313 = vmatpush1.msra.mxu0 0.0
      %314 = vmatprep.subr.mxu0 0.0
      %315 = vmatpush1.msra.mxu0 0.0
      %316 = vmatprep.subr.mxu0 0.0
      %317 = vmatpush1.msra.mxu0 0.0
      %318 = vmatprep.subr.mxu0 0.0
      %319 = vmatpush1.msra.mxu0 0.0
      %320 = vmatprep.subr.mxu0 0.0
      %321 = vmatpush1.msra.mxu0 0.0
      %322 = vmatprep.subr.mxu0 0.0
      %323 = vmatpush1.msra.mxu0 0.0
      %324 = vmatprep.subr.mxu0 0.0
      %325 = vmatpush1.msra.mxu0 0.0
      %326 = vmatprep.subr.mxu0 0.0
      %327 = vmatpush1.msra.mxu0 0.0
      %328 = vmatprep.subr.mxu0 0.0
      %329 = vmatpush1.msra.mxu0 0.0
      %330 = vmatprep.subr.mxu0 0.0
      %331 = vmatpush1.msra.mxu0 0.0
      %332 = vmatprep.subr.mxu0 0.0
      %333 = vmatpush1.msra.mxu0 0.0
      %334 = vmatprep.subr.mxu0 0.0
      %335 = vmatpush1.msra.mxu0 0.0
      %336 = vmatprep.subr.mxu0 0.0
      %337 = vmatpush1.msra.mxu0 0.0
      %338 = vmatprep.subr.mxu0 0.0
      %339 = vmatpush1.msra.mxu0 0.0
      %340 = vmatprep.subr.mxu0 0.0
      %341 = vmatpush1.msra.mxu0 0.0
      %342 = vmatprep.subr.mxu0 0.0
      %343 = vmatpush1.msra.mxu0 0.0
      %344 = vmatprep.mubr.f32.mxu0 0.0
      %345 = vmatmul.mubr.f32.gmra.mrb[0].mxu0 %v185
      %v346 = vpop.f32.mrb[0].mxu0
      %v347 = vadd.f32 0.0, %v346
      %v348 = vpop.f32.mrb[0].mxu0
      %349 = vmatprep.mubr.f32.mxu0 0.0
      %350 = vmatmul.mubr.f32.gmra.mrb[0].mxu0 %v188
      %v351 = vpop.f32.mrb[0].mxu0
      %v352 = vadd.f32 0.0, %v351
      %v353 = vpop.f32.mrb[0].mxu0
      %354 = vmatprep.mubr.f32.mxu0 0.0
      %355 = vmatmul.mubr.f32.gmra.mrb[0].mxu0 %v191
      %v356 = vpop.f32.mrb[0].mxu0
      %v357 = vadd.f32 0.0, %v356
      %v358 = vpop.f32.mrb[0].mxu0
      %359 = vmatprep.mubr.f32.mxu0 0.0
      %360 = vmatmul.mubr.f32.gmra.mrb[0].mxu0 %v194
      %v361 = vpop.f32.mrb[0].mxu0
      %v362 = vadd.f32 0.0, %v361
      %v363 = vpop.f32.mrb[0].mxu0
      %364 = vmatprep.mubr.f32.mxu0 0.0
      %365 = vmatmul.mubr.f32.gmra.mrb[0].mxu0 %v197
      %v366 = vpop.f32.mrb[0].mxu0
      %v367 = vadd.f32 0.0, %v366
      %v368 = vpop.f32.mrb[0].mxu0
      %369 = vmatprep.mubr.f32.mxu0 0.0
      %370 = vmatmul.mubr.f32.gmra.mrb[0].mxu0 %v200
      %v371 = vpop.f32.mrb[0].mxu0
      %v372 = vadd.f32 0.0, %v371
      %v373 = vpop.f32.mrb[0].mxu0
      %374 = vmatprep.mubr.f32.mxu0 0.0
      %375 = vmatmul.mubr.f32.gmra.mrb[0].mxu0 %v203
      %v376 = vpop.f32.mrb[0].mxu0
      %v377 = vadd.f32 0.0, %v376
      %v378 = vpop.f32.mrb[0].mxu0
      %379 = vmatprep.mubr.f32.mxu0 0.0
      %380 = vmatmul.mubr.f32.gmra.mrb[0].mxu0 %v206
      %v381 = vpop.f32.mrb[0].mxu0
      %v382 = vadd.f32 0.0, %v381
      %v383 = vpop.f32.mrb[0].mxu0
      %384 = vmatprep.mubr.f32.mxu0 0.0
      %385 = vmatmul.mubr.f32.gmra.mrb[0].mxu0 %v209
      %v386 = vpop.f32.mrb[0].mxu0
      %v387 = vadd.f32 0.0, %v386
      %v388 = vpop.f32.mrb[0].mxu0
      %389 = vmatprep.mubr.f32.mxu0 0.0
      %390 = vmatmul.mubr.f32.gmra.mrb[0].mxu0 %v212
      %v391 = vpop.f32.mrb[0].mxu0
      %v392 = vadd.f32 0.0, %v391
      %v393 = vpop.f32.mrb[0].mxu0
      %394 = vmatprep.mubr.f32.mxu0 0.0
      %395 = vmatmul.mubr.f32.gmra.mrb[0].mxu0 %v215
      %v396 = vpop.f32.mrb[0].mxu0
      %v397 = vadd.f32 0.0, %v396
      %v398 = vpop.f32.mrb[0].mxu0
      %399 = vmatprep.mubr.f32.mxu0 0.0
      %400 = vmatmul.mubr.f32.gmra.mrb[0].mxu0 %v218
      %v401 = vpop.f32.mrb[0].mxu0
      %v402 = vadd.f32 0.0, %v401
      %v403 = vpop.f32.mrb[0].mxu0
      %404 = vmatprep.mubr.f32.mxu0 0.0
      %405 = vmatmul.mubr.f32.gmra.mrb[0].mxu0 %v221
      %v406 = vpop.f32.mrb[0].mxu0
      %v407 = vadd.f32 0.0, %v406
      %v408 = vpop.f32.mrb[0].mxu0
      %409 = vmatprep.mubr.f32.mxu0 0.0
      %410 = vmatmul.mubr.f32.gmra.mrb[0].mxu0 %v224
      %v411 = vpop.f32.mrb[0].mxu0
      %v412 = vadd.f32 0.0, %v411
      %v413 = vpop.f32.mrb[0].mxu0
      %414 = vmatprep.mubr.f32.mxu0 0.0
      %415 = vmatmul.mubr.f32.gmra.mrb[0].mxu0 %v227
      %v416 = vpop.f32.mrb[0].mxu0
      %v417 = vadd.f32 0.0, %v416
      %v418 = vpop.f32.mrb[0].mxu0
      %419 = vmatprep.mubr.f32.mxu0 0.0
      %420 = vmatmul.mubr.f32.gmra.mrb[0].mxu0 %v230
      %v421 = vpop.f32.mrb[0].mxu0
      %v422 = vadd.f32 0.0, %v421
      %v423 = vpop.f32.mrb[0].mxu0
      %424 = vmatprep.mubr.f32.mxu0 0.0
      %425 = vmatmul.mubr.f32.gmra.mrb[0].mxu0 %v233
      %v426 = vpop.f32.mrb[0].mxu0
      %v427 = vadd.f32 0.0, %v426
      %v428 = vpop.f32.mrb[0].mxu0
      %429 = vmatprep.mubr.f32.mxu0 0.0
      %430 = vmatmul.mubr.f32.gmra.mrb[0].mxu0 %v236
      %v431 = vpop.f32.mrb[0].mxu0
      %v432 = vadd.f32 0.0, %v431
      %v433 = vpop.f32.mrb[0].mxu0
      %434 = vmatprep.mubr.f32.mxu0 0.0
      %435 = vmatmul.mubr.f32.gmra.mrb[0].mxu0 %v239
      %v436 = vpop.f32.mrb[0].mxu0
      %v437 = vadd.f32 0.0, %v436
      %v438 = vpop.f32.mrb[0].mxu0
      %439 = vmatprep.mubr.f32.mxu0 0.0
      %440 = vmatmul.mubr.f32.gmra.mrb[0].mxu0 %v242
      %v441 = vpop.f32.mrb[0].mxu0
      %v442 = vadd.f32 0.0, %v441
      %v443 = vpop.f32.mrb[0].mxu0
      %444 = vmatprep.mubr.f32.mxu0 0.0
      %445 = vmatmul.mubr.f32.gmra.mrb[0].mxu0 %v245
      %v446 = vpop.f32.mrb[0].mxu0
      %v447 = vadd.f32 0.0, %v446
      %v448 = vpop.f32.mrb[0].mxu0
      %449 = vmatprep.mubr.f32.mxu0 0.0
      %450 = vmatmul.mubr.f32.gmra.mrb[0].mxu0 %v248
      %v451 = vpop.f32.mrb[0].mxu0
      %v452 = vadd.f32 0.0, %v451
      %v453 = vpop.f32.mrb[0].mxu0
      %454 = vmatprep.mubr.f32.mxu0 0.0
      %455 = vmatmul.mubr.f32.gmra.mrb[0].mxu0 %v251
      %v456 = vpop.f32.mrb[0].mxu0
      %v457 = vadd.f32 0.0, %v456
      %v458 = vpop.f32.mrb[0].mxu0
      %459 = vmatprep.mubr.f32.mxu0 0.0
      %460 = vmatmul.mubr.f32.gmra.mrb[0].mxu0 %v254
      %v461 = vpop.f32.mrb[0].mxu0
      %v462 = vadd.f32 0.0, %v461
      %v463 = vpop.f32.mrb[0].mxu0
      %464 = vmatprep.mubr.f32.mxu0 0.0
      %465 = vmatmul.mubr.f32.gmra.mrb[0].mxu0 %v257
      %v466 = vpop.f32.mrb[0].mxu0
      %v467 = vadd.f32 0.0, %v466
      %v468 = vpop.f32.mrb[0].mxu0
      %469 = vmatprep.mubr.f32.mxu0 0.0
      %470 = vmatmul.mubr.f32.gmra.mrb[0].mxu0 %v260
      %v471 = vpop.f32.mrb[0].mxu0
      %v472 = vadd.f32 0.0, %v471
      %v473 = vpop.f32.mrb[0].mxu0
      %474 = vmatprep.mubr.f32.mxu0 0.0
      %475 = vmatmul.mubr.f32.gmra.mrb[0].mxu0 %v263
      %v476 = vpop.f32.mrb[0].mxu0
      %v477 = vadd.f32 0.0, %v476
      %v478 = vpop.f32.mrb[0].mxu0
      %479 = vmatprep.mubr.f32.mxu0 0.0
      %480 = vmatmul.mubr.f32.gmra.mrb[0].mxu0 %v266
      %v481 = vpop.f32.mrb[0].mxu0
      %v482 = vadd.f32 0.0, %v481
      %v483 = vpop.f32.mrb[0].mxu0
      %484 = vmatprep.mubr.f32.mxu0 0.0
      %485 = vmatmul.mubr.f32.gmra.mrb[0].mxu0 %v269
      %v486 = vpop.f32.mrb[0].mxu0
      %v487 = vadd.f32 0.0, %v486
      %v488 = vpop.f32.mrb[0].mxu0
      %489 = vmatprep.mubr.f32.mxu0 0.0
      %490 = vmatmul.mubr.f32.gmra.mrb[0].mxu0 %v272
      %v491 = vpop.f32.mrb[0].mxu0
      %v492 = vadd.f32 0.0, %v491
      %v493 = vpop.f32.mrb[0].mxu0
      %494 = vmatprep.mubr.f32.mxu0 0.0
      %495 = vmatmul.mubr.f32.gmra.mrb[0].mxu0 %v275
      %v496 = vpop.f32.mrb[0].mxu0
      %v497 = vadd.f32 0.0, %v496
      %v498 = vpop.f32.mrb[0].mxu0
      %499 = vmatprep.mubr.f32.mxu0 0.0
      %500 = vmatmul.mubr.f32.gmra.mrb[0].mxu0 %v278
      %v501 = vpop.f32.mrb[0].mxu0
      %v502 = vadd.f32 0.0, %v501
      %v503 = vpop.f32.mrb[0].mxu0
      %504 = vdwg.mxu0
      %vm505 = vcmask 15360
      %506 = vst.msk [vmem:[%s145] sm:$0xff] %vm505, %v347
      %507 = vst.msk [vmem:[%s145 + $0x8] sm:$0xff] %vm505, %v352
      %508 = vst.msk [vmem:[%s145 + $0x10] sm:$0xff] %vm505, %v357
      %509 = vst.msk [vmem:[%s145 + $0x18] sm:$0xff] %vm505, %v362
      %510 = vst.msk [vmem:[%s145 + $0x20] sm:$0xff] %vm505, %v367
      %511 = vst.msk [vmem:[%s145 + $0x28] sm:$0xff] %vm505, %v372
      %512 = vst.msk [vmem:[%s145 + $0x30] sm:$0xff] %vm505, %v377
      %513 = vst.msk [vmem:[%s145 + $0x38] sm:$0xff] %vm505, %v382
      %514 = vst.msk [vmem:[%s145 + $0x40] sm:$0xff] %vm505, %v387
      %515 = vst.msk [vmem:[%s145 + $0x48] sm:$0xff] %vm505, %v392
      %516 = vst.msk [vmem:[%s145 + $0x50] sm:$0xff] %vm505, %v397
      %517 = vst.msk [vmem:[%s145 + $0x58] sm:$0xff] %vm505, %v402
      %518 = vst.msk [vmem:[%s145 + $0x60] sm:$0xff] %vm505, %v407
      %519 = vst.msk [vmem:[%s145 + $0x68] sm:$0xff] %vm505, %v412
      %520 = vst.msk [vmem:[%s145 + $0x70] sm:$0xff] %vm505, %v417
      %521 = vst.msk [vmem:[%s145 + $0x78] sm:$0xff] %vm505, %v422
      %522 = vst.msk [vmem:[%s145 + $0x80] sm:$0xff] %vm505, %v427
      %523 = vst.msk [vmem:[%s145 + $0x88] sm:$0xff] %vm505, %v432
      %524 = vst.msk [vmem:[%s145 + $0x90] sm:$0xff] %vm505, %v437
      %525 = vst.msk [vmem:[%s145 + $0x98] sm:$0xff] %vm505, %v442
      %526 = vst.msk [vmem:[%s145 + $0xa0] sm:$0xff] %vm505, %v447
      %527 = vst.msk [vmem:[%s145 + $0xa8] sm:$0xff] %vm505, %v452
      %528 = vst.msk [vmem:[%s145 + $0xb0] sm:$0xff] %vm505, %v457
      %529 = vst.msk [vmem:[%s145 + $0xb8] sm:$0xff] %vm505, %v462
      %530 = vst.msk [vmem:[%s145 + $0xc0] sm:$0xff] %vm505, %v467
      %531 = vst.msk [vmem:[%s145 + $0xc8] sm:$0xff] %vm505, %v472
      %532 = vst.msk [vmem:[%s145 + $0xd0] sm:$0xff] %vm505, %v477
      %533 = vst.msk [vmem:[%s145 + $0xd8] sm:$0xff] %vm505, %v482
      %534 = vst.msk [vmem:[%s145 + $0xe0] sm:$0xff] %vm505, %v487
      %535 = vst.msk [vmem:[%s145 + $0xe8] sm:$0xff] %vm505, %v492
      %536 = vst.msk [vmem:[%s145 + $0xf0] sm:$0xff] %vm505, %v497
      %537 = vst.msk [vmem:[%s145 + $0xf8] sm:$0xff] %vm505, %v502
      %s538 = smul.u32 32, %s13
      %p539 = scmp.lt.s32.totalorder %s538, 63
      %s540 = scalar_select %p539, %s538, 63
      %s541 = smul.addr %s540, 8
      %s542 = scalar_lea.vmem %s2, %s541
      // Predicated region
      $region29: #{gat_layer_pallas.4} parent=27 // pred_check
        %p543 = pneg %p78
      $region30: #{gat_layer_pallas.4} parent=27 // pred_check_branch
        %545 = sbr.rel (%p543) target = $region32
      $region31: #{gat_layer_pallas.4} parent=27 // pred_region
        %s546 = smul.u32 32, %s13
      $region32: #{gat_layer_pallas.4} parent=27 // pred_fallthru
        _
    $region28: #{gat_layer_pallas.4} parent=5 // pred_fallthru
      _
    %p547 = scmp.le.s32.totalorder 2, %s8
    // Predicated region
    $region33: #{gat_layer_pallas.4} parent=5 // pred_check
      %p548 = pneg %p547
    $region34: #{gat_layer_pallas.4} parent=5 // pred_check_branch
      %550 = sbr.rel (%p548) target = $region36
    $region35: #{gat_layer_pallas.4} parent=5 // pred_region
      %s551 = ssub.s32 %s8, 2
      // Predicated region
      $region37: #{gat_layer_pallas.4} parent=35 // pred_check
        %p552 = pneg %p84
      $region38: #{gat_layer_pallas.4} parent=35 // pred_check_branch
        %554 = sbr.rel (%p552) target = $region40
      $region39: #{gat_layer_pallas.4} parent=35 // pred_region
        %s555 = smul.u32 32, %s14
        %p556 = scmp.lt.s32.totalorder %s555, 63
        %s557 = scalar_select %p556, %s555, 63
        %s558 = smul.addr %s557, 8
        %s559 = scalar_lea.vmem %s2, %s558
      $region40: #{gat_layer_pallas.4} parent=35 // pred_fallthru
        _
    $region36: #{gat_layer_pallas.4} parent=5 // pred_fallthru
      _
  $region6: #{gat_layer_pallas.4} parent=0 // loop_footer
    %s12 = sadd.s32 1, %s8
  $region7: #{gat_layer_pallas.4} parent=0 // loop_footer_branch
    %7 = sbr.rel target = $region3
  $region8: #{gat_layer_pallas.4} parent=0 // loop_exit
    _

// kernel: gat_layer_pallas.3
$region0: #{gat_layer_pallas.3}
  #allocation0 [shape = 'u32[]', space=smem, size = 0x4, offset = 0x4, fixed_abs, tag = 'smem constant byte address 0x4 - core index']
  #allocation1 [shape = 'u32[144,128]{1,0:T(1,128)}', space=vmem, size = 0x12000, scoped, tag = 'internal scratch']
  %s0 = inlined_call_operand.vmem [shape: f32[768,32], index: 0, kind: input, shape index: {}]
  %s1 = inlined_call_operand.vmem [shape: f32[32,66], index: 1, kind: input, shape index: {}]
  %s2 = inlined_call_operand.vmem [shape: bf16[768,64], index: 2, kind: output, shape index: {0}]
  %s3 = inlined_call_operand.vmem [shape: f32[768,2], index: 3, kind: output, shape index: {1}]
  %4 = xla_tuple %s2, %s3
  %s5 = sld [smem:[#allocation0]]
  $region49: #{gat_layer_pallas.3} parent=0
    _
  %s7 = ssub.s32 1, %s5
  %s8 = scalar_select 0, %s7, %s5
  loop: start=0, step=1, limit=5
  $region2: #{gat_layer_pallas.3} parent=0 // loop_pre_header
    _
  $region3: #{gat_layer_pallas.3} parent=0 // loop_header
    %s10 = sphi 0, %s14
    %p11 = scmp.ge.s32.totalorder %s10, 5
    %s20 = sphi 0, %s22
    %s23 = sphi 0, %s20
    %s24 = sphi 0, %s23
    %s40 = sphi 0, %s24
    %s44 = sphi 0, %s44
    %s46 = sphi 0, %s44
    %s47 = sphi 0, %s46
    %s61 = sphi 0, %s47
    %s67 = sphi 0, %s69
    %s70 = sphi 0, %s67
    %s71 = sphi 0, %s70
    %s87 = sphi 0, %s71
    %s93 = sphi 0, %s95
    %s96 = sphi 0, %s93
    %s97 = sphi 0, %s96
    %s113 = sphi 0, %s97
  $region4: #{gat_layer_pallas.3} parent=0 // loop_header_branch
    %13 = sbr.rel (%p11) target = $region8
  $region5: #{gat_layer_pallas.3} parent=0 // loop_body
    %s15 = ssub.s32 %s10, 1
    %s16 = ssub.s32 %s10, 2
    %s17 = sadd.s32 %s10, 1
    %s18 = ssub.s32 %s10, %s17
    %p19 = scmp.eq.s32.totalorder %s18, 0
    %s21 = sadd.s32 %s20, 1
    %s22 = scalar_select %p19, %s20, %s21
    %p25 = pneg %p19
    %p26 = scmp.eq.s32.totalorder %s10, 2
    %p27 = por %p25, %p26
    %p28 = scmp.ne.s32.totalorder %s20, %s23
    %p29 = scmp.eq.s32.totalorder %s10, 0
    %p30 = por %p28, %p29
    %p31 = scmp.ne.s32.totalorder %s20, %s23
    %p32 = scmp.eq.s32.totalorder %s15, 2
    %p33 = por %p31, %p32
    %p34 = scmp.ne.s32.totalorder %s23, %s24
    %p35 = scmp.eq.s32.totalorder %s15, 0
    %p36 = por %p34, %p35
    %p37 = scmp.ne.s32.totalorder %s23, %s24
    %p38 = scmp.eq.s32.totalorder %s16, 2
    %p39 = por %p37, %p38
    %p41 = scmp.ne.s32.totalorder %s24, %s40
    %p42 = scmp.eq.s32.totalorder %s16, 0
    %p43 = por %p41, %p42
    %s45 = sadd.s32 %s44, 1
    %p48 = scmp.eq.s32.totalorder %s10, 2
    %p49 = scmp.ne.s32.totalorder %s44, %s46
    %p50 = scmp.eq.s32.totalorder %s10, 0
    %p51 = por %p49, %p50
    %p52 = scmp.ne.s32.totalorder %s44, %s46
    %p53 = scmp.eq.s32.totalorder %s15, 2
    %p54 = por %p52, %p53
    %p55 = scmp.ne.s32.totalorder %s46, %s47
    %p56 = scmp.eq.s32.totalorder %s15, 0
    %p57 = por %p55, %p56
    %p58 = scmp.ne.s32.totalorder %s46, %s47
    %p59 = scmp.eq.s32.totalorder %s16, 2
    %p60 = por %p58, %p59
    %p62 = scmp.ne.s32.totalorder %s47, %s61
    %p63 = scmp.eq.s32.totalorder %s16, 0
    %p64 = por %p62, %p63
    %s65 = ssub.s32 %s10, %s17
    %p66 = scmp.eq.s32.totalorder %s65, 0
    %s68 = sadd.s32 %s67, 1
    %s69 = scalar_select %p66, %s67, %s68
    %p72 = pneg %p66
    %p73 = scmp.eq.s32.totalorder %s10, 2
    %p74 = por %p72, %p73
    %p75 = scmp.ne.s32.totalorder %s67, %s70
    %p76 = scmp.eq.s32.totalorder %s10, 0
    %p77 = por %p75, %p76
    %p78 = scmp.ne.s32.totalorder %s67, %s70
    %p79 = scmp.eq.s32.totalorder %s15, 2
    %p80 = por %p78, %p79
    %p81 = scmp.ne.s32.totalorder %s70, %s71
    %p82 = scmp.eq.s32.totalorder %s15, 0
    %p83 = por %p81, %p82
    %p84 = scmp.ne.s32.totalorder %s70, %s71
    %p85 = scmp.eq.s32.totalorder %s16, 2
    %p86 = por %p84, %p85
    %p88 = scmp.ne.s32.totalorder %s71, %s87
    %p89 = scmp.eq.s32.totalorder %s16, 0
    %p90 = por %p88, %p89
    %s91 = ssub.s32 %s10, %s17
    %p92 = scmp.eq.s32.totalorder %s91, 0
    %s94 = sadd.s32 %s93, 1
    %s95 = scalar_select %p92, %s93, %s94
    %p98 = pneg %p92
    %p99 = scmp.eq.s32.totalorder %s10, 2
    %p100 = por %p98, %p99
    %p101 = scmp.ne.s32.totalorder %s93, %s96
    %p102 = scmp.eq.s32.totalorder %s10, 0
    %p103 = por %p101, %p102
    %p104 = scmp.ne.s32.totalorder %s93, %s96
    %p105 = scmp.eq.s32.totalorder %s15, 2
    %p106 = por %p104, %p105
    %p107 = scmp.ne.s32.totalorder %s96, %s97
    %p108 = scmp.eq.s32.totalorder %s15, 0
    %p109 = por %p107, %p108
    %p110 = scmp.ne.s32.totalorder %s96, %s97
    %p111 = scmp.eq.s32.totalorder %s16, 2
    %p112 = por %p110, %p111
    %p114 = scmp.ne.s32.totalorder %s97, %s113
    %p115 = scmp.eq.s32.totalorder %s16, 0
    %p116 = por %p114, %p115
    %p117 = scmp.le.s32.totalorder 1, %s10
    %p118 = scmp.lt.s32.totalorder %s10, 4
    %p119 = pnand %p117, %p118
    %p120 = pneg %p119
    // Predicated region
    $region9: #{gat_layer_pallas.3} parent=5 // pred_check
      _
    $region10: #{gat_layer_pallas.3} parent=5 // pred_check_branch
      %122 = sbr.rel (%p119) target = $region12
    $region11: #{gat_layer_pallas.3} parent=5 // pred_region
      %s123 = ssub.s32 %s10, 1
      // Predicated region
      $region13: #{gat_layer_pallas.3} parent=11 // pred_check
        %p124 = pneg %p57
      $region14: #{gat_layer_pallas.3} parent=11 // pred_check_branch
        %126 = sbr.rel (%p124) target = $region16
      $region15: #{gat_layer_pallas.3} parent=11 // pred_region
        _
      $region16: #{gat_layer_pallas.3} parent=11 // pred_fallthru
        _
    $region12: #{gat_layer_pallas.3} parent=5 // pred_fallthru
      _
    %p127 = scmp.lt.s32.totalorder %s10, 3
    // Predicated region
    $region17: #{gat_layer_pallas.3} parent=5 // pred_check
      %p128 = pneg %p127
    $region18: #{gat_layer_pallas.3} parent=5 // pred_check_branch
      %130 = sbr.rel (%p128) target = $region20
    $region19: #{gat_layer_pallas.3} parent=5 // pred_region
      // Predicated region
      $region21: #{gat_layer_pallas.3} parent=19 // pred_check
        %p131 = pneg %p30
      $region22: #{gat_layer_pallas.3} parent=19 // pred_check_branch
        %133 = sbr.rel (%p131) target = $region24
      $region23: #{gat_layer_pallas.3} parent=19 // pred_region
        %s134 = smul.u32 32, %s10
        %p135 = scmp.lt.s32.totalorder %s134, 95
        %s136 = scalar_select %p135, %s134, 95
        %s137 = smul.addr %s136, 8
        %s138 = scalar_lea.vmem %s0, %s137
        %s139 = smul.u32 32, %s10
      $region24: #{gat_layer_pallas.3} parent=19 // pred_fallthru
        _
    $region20: #{gat_layer_pallas.3} parent=5 // pred_fallthru
      _
    %p140 = scmp.le.s32.totalorder 1, %s10
    %p141 = scmp.lt.s32.totalorder %s10, 4
    %p142 = pnand %p140, %p141
    %p143 = pneg %p142
    // Predicated region
    $region25: #{gat_layer_pallas.3} parent=5 // pred_check
      _
    $region26: #{gat_layer_pallas.3} parent=5 // pred_check_branch
      %145 = sbr.rel (%p142) target = $region28
    $region27: #{gat_layer_pallas.3} parent=5 // pred_region
      %s146 = ssub.s32 %s10, 1
      %s147 = smul.u32 32, %s15
      %p148 = scmp.lt.s32.totalorder %s147, 95
      %s149 = scalar_select %p148, %s147, 95
      %s150 = smul.addr %s149, 8
      %s151 = scalar_lea.vmem %s0, %s150
      %p152 = pneg %p36
      %p153 = pneg %p33
      %p154 = pneg %p57
      %p155 = pneg %p54
      %p156 = pneg %p83
      %p157 = pneg %p80
      %s158 = smul.u32 32, %s15
      %p159 = scmp.lt.s32.totalorder %s158, 95
      %s160 = scalar_select %p159, %s158, 95
      %s161 = smul.addr %s160, 4
      %s162 = scalar_lea.vmem %s2, %s161
      %p163 = pneg %p109
      %p164 = pneg %p106
      %s165 = smul.u32 32, %s15
      %p166 = scmp.lt.s32.totalorder %s165, 95
      %s167 = scalar_select %p166, %s165, 95
      %s168 = smul.addr %s167, 8
      %s169 = scalar_lea.vmem %s3, %s168
      %s170 = smul.u32 32, %s15
      %p171 = scmp.lt.s32.totalorder %s170, 95
      %s172 = scalar_select %p171, %s170, 95
      %s173 = smul.addr %s172, 8
      %s174 = scalar_lea.vmem %s0, %s173
      %s175 = smul.u32 32, %s15
      %s176 = smul.u32 32, %s15
      %p177 = scmp.lt.s32.totalorder %s176, 95
      %s178 = scalar_select %p177, %s176, 95
      %s179 = smul.addr %s178, 4
      %s180 = scalar_lea.vmem %s2, %s179
      %s181 = smul.u32 32, %s15
      %s182 = smul.u32 32, %s15
      %p183 = scmp.lt.s32.totalorder %s182, 95
      %s184 = scalar_select %p183, %s182, 95
      %s185 = smul.addr %s184, 8
      %s186 = scalar_lea.vmem %s3, %s185
      %s187 = smul.u32 32, %s15
      %v188 = vld [vmem:[%s174] sm:$0xff]
      %v189 = vld [vmem:[%s174 + $0x8] sm:$0xff]
      %v190 = vld [vmem:[%s174 + $0x10] sm:$0xff]
      %v191 = vld [vmem:[%s174 + $0x18] sm:$0xff]
      %v192 = vld [vmem:[%s174 + $0x20] sm:$0xff]
      %v193 = vld [vmem:[%s174 + $0x28] sm:$0xff]
      %v194 = vld [vmem:[%s174 + $0x30] sm:$0xff]
      %v195 = vld [vmem:[%s174 + $0x38] sm:$0xff]
      %v196 = vld [vmem:[%s174 + $0x40] sm:$0xff]
      %v197 = vld [vmem:[%s174 + $0x48] sm:$0xff]
      %v198 = vld [vmem:[%s174 + $0x50] sm:$0xff]
      %v199 = vld [vmem:[%s174 + $0x58] sm:$0xff]
      %v200 = vld [vmem:[%s174 + $0x60] sm:$0xff]
      %v201 = vld [vmem:[%s174 + $0x68] sm:$0xff]
      %v202 = vld [vmem:[%s174 + $0x70] sm:$0xff]
      %v203 = vld [vmem:[%s174 + $0x78] sm:$0xff]
      %v204 = vld [vmem:[%s174 + $0x80] sm:$0xff]
      %v205 = vld [vmem:[%s174 + $0x88] sm:$0xff]
      %v206 = vld [vmem:[%s174 + $0x90] sm:$0xff]
      %v207 = vld [vmem:[%s174 + $0x98] sm:$0xff]
      %v208 = vld [vmem:[%s174 + $0xa0] sm:$0xff]
      %v209 = vld [vmem:[%s174 + $0xa8] sm:$0xff]
      %v210 = vld [vmem:[%s174 + $0xb0] sm:$0xff]
      %v211 = vld [vmem:[%s174 + $0xb8] sm:$0xff]
      %v212 = vld [vmem:[%s174 + $0xc0] sm:$0xff]
      %v213 = vld [vmem:[%s174 + $0xc8] sm:$0xff]
      %v214 = vld [vmem:[%s174 + $0xd0] sm:$0xff]
      %v215 = vld [vmem:[%s174 + $0xd8] sm:$0xff]
      %v216 = vld [vmem:[%s174 + $0xe0] sm:$0xff]
      %v217 = vld [vmem:[%s174 + $0xe8] sm:$0xff]
      %v218 = vld [vmem:[%s174 + $0xf0] sm:$0xff]
      %v219 = vld [vmem:[%s174 + $0xf8] sm:$0xff]
      %v220 = vld [vmem:[%s1] sm:$0xff]
      %v221 = vld [vmem:[%s1 + $0x8] sm:$0xff]
      %v222 = vld [vmem:[%s1 + $0x10] sm:$0xff]
      %v223 = vld [vmem:[%s1 + $0x18] sm:$0xff]
      %vm224 = vcmask 261120
      %v226 = vsel %vm224, %v188, 0
      %v229 = vsel %vm224, %v189, 0
      %v232 = vsel %vm224, %v190, 0
      %v235 = vsel %vm224, %v191, 0
      %v238 = vsel %vm224, %v192, 0
      %v241 = vsel %vm224, %v193, 0
      %v244 = vsel %vm224, %v194, 0
      %v247 = vsel %vm224, %v195, 0
      %v250 = vsel %vm224, %v196, 0
      %v253 = vsel %vm224, %v197, 0
      %v256 = vsel %vm224, %v198, 0
      %v259 = vsel %vm224, %v199, 0
      %v262 = vsel %vm224, %v200, 0
      %v265 = vsel %vm224, %v201, 0
      %v268 = vsel %vm224, %v202, 0
      %v271 = vsel %vm224, %v203, 0
      %v274 = vsel %vm224, %v204, 0
      %v277 = vsel %vm224, %v205, 0
      %v280 = vsel %vm224, %v206, 0
      %v283 = vsel %vm224, %v207, 0
      %v286 = vsel %vm224, %v208, 0
      %v289 = vsel %vm224, %v209, 0
      %v292 = vsel %vm224, %v210, 0
      %v295 = vsel %vm224, %v211, 0
      %v298 = vsel %vm224, %v212, 0
      %v301 = vsel %vm224, %v213, 0
      %v304 = vsel %vm224, %v214, 0
      %v307 = vsel %vm224, %v215, 0
      %v310 = vsel %vm224, %v216, 0
      %v313 = vsel %vm224, %v217, 0
      %v316 = vsel %vm224, %v218, 0
      %v319 = vsel %vm224, %v219, 0
      %321 = vmatprep.subr.mxu0 0.0
      %322 = vmatpush1.msra.mxu0 %v220
      %323 = vmatprep.subr.mxu0 0.0
      %324 = vmatpush1.msra.mxu0 %v221
      %325 = vmatprep.subr.mxu0 0.0
      %326 = vmatpush1.msra.mxu0 %v222
      %327 = vmatprep.subr.mxu0 0.0
      %328 = vmatpush1.msra.mxu0 %v223
      %329 = vmatprep.subr.mxu0 0.0
      %330 = vmatpush1.msra.mxu0 0.0
      %331 = vmatprep.subr.mxu0 0.0
      %332 = vmatpush1.msra.mxu0 0.0
      %333 = vmatprep.subr.mxu0 0.0
      %334 = vmatpush1.msra.mxu0 0.0
      %335 = vmatprep.subr.mxu0 0.0
      %336 = vmatpush1.msra.mxu0 0.0
      %337 = vmatprep.subr.mxu0 0.0
      %338 = vmatpush1.msra.mxu0 0.0
      %339 = vmatprep.subr.mxu0 0.0
      %340 = vmatpush1.msra.mxu0 0.0
      %341 = vmatprep.subr.mxu0 0.0
      %342 = vmatpush1.msra.mxu0 0.0
      %343 = vmatprep.subr.mxu0 0.0
      %344 = vmatpush1.msra.mxu0 0.0
      %345 = vmatprep.subr.mxu0 0.0
      %346 = vmatpush1.msra.mxu0 0.0
      %347 = vmatprep.subr.mxu0 0.0
      %348 = vmatpush1.msra.mxu0 0.0
      %349 = vmatprep.subr.mxu0 0.0
      %350 = vmatpush1.msra.mxu0 0.0
      %351 = vmatprep.subr.mxu0 0.0
      %352 = vmatpush1.msra.mxu0 0.0
      %353 = vmatprep.subr.mxu0 0.0
      %354 = vmatpush1.msra.mxu0 0.0
      %355 = vmatprep.subr.mxu0 0.0
      %356 = vmatpush1.msra.mxu0 0.0
      %357 = vmatprep.subr.mxu0 0.0
      %358 = vmatpush1.msra.mxu0 0.0
      %359 = vmatprep.subr.mxu0 0.0
      %360 = vmatpush1.msra.mxu0 0.0
      %361 = vmatprep.subr.mxu0 0.0
      %362 = vmatpush1.msra.mxu0 0.0
      %363 = vmatprep.subr.mxu0 0.0
      %364 = vmatpush1.msra.mxu0 0.0
      %365 = vmatprep.subr.mxu0 0.0
      %366 = vmatpush1.msra.mxu0 0.0
      %367 = vmatprep.subr.mxu0 0.0
      %368 = vmatpush1.msra.mxu0 0.0
      %369 = vmatprep.subr.mxu0 0.0
      %370 = vmatpush1.msra.mxu0 0.0
      %371 = vmatprep.subr.mxu0 0.0
      %372 = vmatpush1.msra.mxu0 0.0
      %373 = vmatprep.subr.mxu0 0.0
      %374 = vmatpush1.msra.mxu0 0.0
      %375 = vmatprep.subr.mxu0 0.0
      %376 = vmatpush1.msra.mxu0 0.0
      %377 = vmatprep.subr.mxu0 0.0
      %378 = vmatpush1.msra.mxu0 0.0
      %379 = vmatprep.subr.mxu0 0.0
      %380 = vmatpush1.msra.mxu0 0.0
      %381 = vmatprep.subr.mxu0 0.0
      %382 = vmatpush1.msra.mxu0 0.0
      %383 = vmatprep.subr.mxu0 0.0
      %384 = vmatpush1.msra.mxu0 0.0
      %385 = vmatprep.mubr.f32.mxu0 0.0
      %386 = vmatmul.mubr.f32.gmra.mrb[0].mxu0 %v226
      %v387 = vpop.f32.mrb[0].mxu0
      %v388 = vadd.f32 0.0, %v387
      %v389 = vpop.f32.mrb[0].mxu0
      %390 = vmatprep.mubr.f32.mxu0 0.0
      %391 = vmatmul.mubr.f32.gmra.mrb[0].mxu0 %v229
      %v392 = vpop.f32.mrb[0].mxu0
      %v393 = vadd.f32 0.0, %v392
      %v394 = vpop.f32.mrb[0].mxu0
      %395 = vmatprep.mubr.f32.mxu0 0.0
      %396 = vmatmul.mubr.f32.gmra.mrb[0].mxu0 %v232
      %v397 = vpop.f32.mrb[0].mxu0
      %v398 = vadd.f32 0.0, %v397
      %v399 = vpop.f32.mrb[0].mxu0
      %400 = vmatprep.mubr.f32.mxu0 0.0
      %401 = vmatmul.mubr.f32.gmra.mrb[0].mxu0 %v235
      %v402 = vpop.f32.mrb[0].mxu0
      %v403 = vadd.f32 0.0, %v402
      %v404 = vpop.f32.mrb[0].mxu0
      %405 = vmatprep.mubr.f32.mxu0 0.0
      %406 = vmatmul.mubr.f32.gmra.mrb[0].mxu0 %v238
      %v407 = vpop.f32.mrb[0].mxu0
      %v408 = vadd.f32 0.0, %v407
      %v409 = vpop.f32.mrb[0].mxu0
      %410 = vmatprep.mubr.f32.mxu0 0.0
      %411 = vmatmul.mubr.f32.gmra.mrb[0].mxu0 %v241
      %v412 = vpop.f32.mrb[0].mxu0
      %v413 = vadd.f32 0.0, %v412
      %v414 = vpop.f32.mrb[0].mxu0
      %415 = vmatprep.mubr.f32.mxu0 0.0
      %416 = vmatmul.mubr.f32.gmra.mrb[0].mxu0 %v244
      %v417 = vpop.f32.mrb[0].mxu0
      %v418 = vadd.f32 0.0, %v417
      %v419 = vpop.f32.mrb[0].mxu0
      %420 = vmatprep.mubr.f32.mxu0 0.0
      %421 = vmatmul.mubr.f32.gmra.mrb[0].mxu0 %v247
      %v422 = vpop.f32.mrb[0].mxu0
      %v423 = vadd.f32 0.0, %v422
      %v424 = vpop.f32.mrb[0].mxu0
      %425 = vmatprep.mubr.f32.mxu0 0.0
      %426 = vmatmul.mubr.f32.gmra.mrb[0].mxu0 %v250
      %v427 = vpop.f32.mrb[0].mxu0
      %v428 = vadd.f32 0.0, %v427
      %v429 = vpop.f32.mrb[0].mxu0
      %430 = vmatprep.mubr.f32.mxu0 0.0
      %431 = vmatmul.mubr.f32.gmra.mrb[0].mxu0 %v253
      %v432 = vpop.f32.mrb[0].mxu0
      %v433 = vadd.f32 0.0, %v432
      %v434 = vpop.f32.mrb[0].mxu0
      %435 = vmatprep.mubr.f32.mxu0 0.0
      %436 = vmatmul.mubr.f32.gmra.mrb[0].mxu0 %v256
      %v437 = vpop.f32.mrb[0].mxu0
      %v438 = vadd.f32 0.0, %v437
      %v439 = vpop.f32.mrb[0].mxu0
      %440 = vmatprep.mubr.f32.mxu0 0.0
      %441 = vmatmul.mubr.f32.gmra.mrb[0].mxu0 %v259
      %v442 = vpop.f32.mrb[0].mxu0
      %v443 = vadd.f32 0.0, %v442
      %v444 = vpop.f32.mrb[0].mxu0
      %445 = vmatprep.mubr.f32.mxu0 0.0
      %446 = vmatmul.mubr.f32.gmra.mrb[0].mxu0 %v262
      %v447 = vpop.f32.mrb[0].mxu0
      %v448 = vadd.f32 0.0, %v447
      %v449 = vpop.f32.mrb[0].mxu0
      %450 = vmatprep.mubr.f32.mxu0 0.0
      %451 = vmatmul.mubr.f32.gmra.mrb[0].mxu0 %v265
      %v452 = vpop.f32.mrb[0].mxu0
      %v453 = vadd.f32 0.0, %v452
      %v454 = vpop.f32.mrb[0].mxu0
      %455 = vmatprep.mubr.f32.mxu0 0.0
      %456 = vmatmul.mubr.f32.gmra.mrb[0].mxu0 %v268
      %v457 = vpop.f32.mrb[0].mxu0
      %v458 = vadd.f32 0.0, %v457
      %v459 = vpop.f32.mrb[0].mxu0
      %460 = vmatprep.mubr.f32.mxu0 0.0
      %461 = vmatmul.mubr.f32.gmra.mrb[0].mxu0 %v271
      %v462 = vpop.f32.mrb[0].mxu0
      %v463 = vadd.f32 0.0, %v462
      %v464 = vpop.f32.mrb[0].mxu0
      %465 = vmatprep.mubr.f32.mxu0 0.0
      %466 = vmatmul.mubr.f32.gmra.mrb[0].mxu0 %v274
      %v467 = vpop.f32.mrb[0].mxu0
      %v468 = vadd.f32 0.0, %v467
      %v469 = vpop.f32.mrb[0].mxu0
      %470 = vmatprep.mubr.f32.mxu0 0.0
      %471 = vmatmul.mubr.f32.gmra.mrb[0].mxu0 %v277
      %v472 = vpop.f32.mrb[0].mxu0
      %v473 = vadd.f32 0.0, %v472
      %v474 = vpop.f32.mrb[0].mxu0
      %475 = vmatprep.mubr.f32.mxu0 0.0
      %476 = vmatmul.mubr.f32.gmra.mrb[0].mxu0 %v280
      %v477 = vpop.f32.mrb[0].mxu0
      %v478 = vadd.f32 0.0, %v477
      %v479 = vpop.f32.mrb[0].mxu0
      %480 = vmatprep.mubr.f32.mxu0 0.0
      %481 = vmatmul.mubr.f32.gmra.mrb[0].mxu0 %v283
      %v482 = vpop.f32.mrb[0].mxu0
      %v483 = vadd.f32 0.0, %v482
      %v484 = vpop.f32.mrb[0].mxu0
      %485 = vmatprep.mubr.f32.mxu0 0.0
      %486 = vmatmul.mubr.f32.gmra.mrb[0].mxu0 %v286
      %v487 = vpop.f32.mrb[0].mxu0
      %v488 = vadd.f32 0.0, %v487
      %v489 = vpop.f32.mrb[0].mxu0
      %490 = vmatprep.mubr.f32.mxu0 0.0
      %491 = vmatmul.mubr.f32.gmra.mrb[0].mxu0 %v289
      %v492 = vpop.f32.mrb[0].mxu0
      %v493 = vadd.f32 0.0, %v492
      %v494 = vpop.f32.mrb[0].mxu0
      %495 = vmatprep.mubr.f32.mxu0 0.0
      %496 = vmatmul.mubr.f32.gmra.mrb[0].mxu0 %v292
      %v497 = vpop.f32.mrb[0].mxu0
      %v498 = vadd.f32 0.0, %v497
      %v499 = vpop.f32.mrb[0].mxu0
      %500 = vmatprep.mubr.f32.mxu0 0.0
      %501 = vmatmul.mubr.f32.gmra.mrb[0].mxu0 %v295
      %v502 = vpop.f32.mrb[0].mxu0
      %v503 = vadd.f32 0.0, %v502
      %v504 = vpop.f32.mrb[0].mxu0
      %505 = vmatprep.mubr.f32.mxu0 0.0
      %506 = vmatmul.mubr.f32.gmra.mrb[0].mxu0 %v298
      %v507 = vpop.f32.mrb[0].mxu0
      %v508 = vadd.f32 0.0, %v507
      %v509 = vpop.f32.mrb[0].mxu0
      %510 = vmatprep.mubr.f32.mxu0 0.0
      %511 = vmatmul.mubr.f32.gmra.mrb[0].mxu0 %v301
      %v512 = vpop.f32.mrb[0].mxu0
      %v513 = vadd.f32 0.0, %v512
      %v514 = vpop.f32.mrb[0].mxu0
      %515 = vmatprep.mubr.f32.mxu0 0.0
      %516 = vmatmul.mubr.f32.gmra.mrb[0].mxu0 %v304
      %v517 = vpop.f32.mrb[0].mxu0
      %v518 = vadd.f32 0.0, %v517
      %v519 = vpop.f32.mrb[0].mxu0
      %520 = vmatprep.mubr.f32.mxu0 0.0
      %521 = vmatmul.mubr.f32.gmra.mrb[0].mxu0 %v307
      %v522 = vpop.f32.mrb[0].mxu0
      %v523 = vadd.f32 0.0, %v522
      %v524 = vpop.f32.mrb[0].mxu0
      %525 = vmatprep.mubr.f32.mxu0 0.0
      %526 = vmatmul.mubr.f32.gmra.mrb[0].mxu0 %v310
      %v527 = vpop.f32.mrb[0].mxu0
      %v528 = vadd.f32 0.0, %v527
      %v529 = vpop.f32.mrb[0].mxu0
      %530 = vmatprep.mubr.f32.mxu0 0.0
      %531 = vmatmul.mubr.f32.gmra.mrb[0].mxu0 %v313
      %v532 = vpop.f32.mrb[0].mxu0
      %v533 = vadd.f32 0.0, %v532
      %v534 = vpop.f32.mrb[0].mxu0
      %535 = vmatprep.mubr.f32.mxu0 0.0
      %536 = vmatmul.mubr.f32.gmra.mrb[0].mxu0 %v316
      %v537 = vpop.f32.mrb[0].mxu0
      %v538 = vadd.f32 0.0, %v537
      %v539 = vpop.f32.mrb[0].mxu0
      %540 = vmatprep.mubr.f32.mxu0 0.0
      %541 = vmatmul.mubr.f32.gmra.mrb[0].mxu0 %v319
      %v542 = vpop.f32.mrb[0].mxu0
      %v543 = vadd.f32 0.0, %v542
      %v544 = vpop.f32.mrb[0].mxu0
      %545 = vdwg.mxu0
      %v546 = vpack.c.bf16 %v393, %v388
      %v547 = vpack.c.bf16 %v403, %v398
      %v548 = vpack.c.bf16 %v413, %v408
      %v549 = vpack.c.bf16 %v423, %v418
      %v550 = vpack.c.bf16 %v433, %v428
      %v551 = vpack.c.bf16 %v443, %v438
      %v552 = vpack.c.bf16 %v453, %v448
      %v553 = vpack.c.bf16 %v463, %v458
      %v554 = vpack.c.bf16 %v473, %v468
      %v555 = vpack.c.bf16 %v483, %v478
      %v556 = vpack.c.bf16 %v493, %v488
      %v557 = vpack.c.bf16 %v503, %v498
      %v558 = vpack.c.bf16 %v513, %v508
      %v559 = vpack.c.bf16 %v523, %v518
      %v560 = vpack.c.bf16 %v533, %v528
      %v561 = vpack.c.bf16 %v543, %v538
      %v578 = vunpack.c.l.b16 %v546
      %v579 = vunpack.c.h.b16 %v546
      %v580 = vunpack.c.l.b16 %v547
      %v581 = vunpack.c.h.b16 %v547
      %v582 = vunpack.c.l.b16 %v548
      %v583 = vunpack.c.h.b16 %v548
      %v584 = vunpack.c.l.b16 %v549
      %v585 = vunpack.c.h.b16 %v549
      %v586 = vunpack.c.l.b16 %v550
      %v587 = vunpack.c.h.b16 %v550
      %v588 = vunpack.c.l.b16 %v551
      %v589 = vunpack.c.h.b16 %v551
      %v590 = vunpack.c.l.b16 %v552
      %v591 = vunpack.c.h.b16 %v552
      %v592 = vunpack.c.l.b16 %v553
      %v593 = vunpack.c.h.b16 %v553
      %v594 = vunpack.c.l.b16 %v554
      %v595 = vunpack.c.h.b16 %v554
      %v596 = vunpack.c.l.b16 %v555
      %v597 = vunpack.c.h.b16 %v555
      %v598 = vunpack.c.l.b16 %v556
      %v599 = vunpack.c.h.b16 %v556
      %v600 = vunpack.c.l.b16 %v557
      %v601 = vunpack.c.h.b16 %v557
      %v602 = vunpack.c.l.b16 %v558
      %v603 = vunpack.c.h.b16 %v558
      %v604 = vunpack.c.l.b16 %v559
      %v605 = vunpack.c.h.b16 %v559
      %v606 = vunpack.c.l.b16 %v560
      %v607 = vunpack.c.h.b16 %v560
      %v608 = vunpack.c.l.b16 %v561
      %v609 = vunpack.c.h.b16 %v561
      %v610 = vpack.c.b16 %v578, %v578
      %v611 = vpack.c.b16 %v579, %v579
      %v612 = vpack.c.b16 %v580, %v580
      %v613 = vpack.c.b16 %v581, %v581
      %v614 = vpack.c.b16 %v582, %v582
      %v615 = vpack.c.b16 %v583, %v583
      %v616 = vpack.c.b16 %v584, %v584
      %v617 = vpack.c.b16 %v585, %v585
      %v618 = vpack.c.b16 %v586, %v586
      %v619 = vpack.c.b16 %v587, %v587
      %v620 = vpack.c.b16 %v588, %v588
      %v621 = vpack.c.b16 %v589, %v589
      %v622 = vpack.c.b16 %v590, %v590
      %v623 = vpack.c.b16 %v591, %v591
      %v624 = vpack.c.b16 %v592, %v592
      %v625 = vpack.c.b16 %v593, %v593
      %v626 = vpack.c.b16 %v594, %v594
      %v627 = vpack.c.b16 %v595, %v595
      %v628 = vpack.c.b16 %v596, %v596
      %v629 = vpack.c.b16 %v597, %v597
      %v630 = vpack.c.b16 %v598, %v598
      %v631 = vpack.c.b16 %v599, %v599
      %v632 = vpack.c.b16 %v600, %v600
      %v633 = vpack.c.b16 %v601, %v601
      %v634 = vpack.c.b16 %v602, %v602
      %v635 = vpack.c.b16 %v603, %v603
      %v636 = vpack.c.b16 %v604, %v604
      %v637 = vpack.c.b16 %v605, %v605
      %v638 = vpack.c.b16 %v606, %v606
      %v639 = vpack.c.b16 %v607, %v607
      %v640 = vpack.c.b16 %v608, %v608
      %v641 = vpack.c.b16 %v609, %v609
      %vm674 = vcmask 519168
      %675 = vst.msk [vmem:[%s180] sm:$0xf] %vm674, %v610
      %676 = vst.msk [vmem:[%s180 + $0x4] sm:$0xf] %vm674, %v611
      %677 = vst.msk [vmem:[%s180 + $0x8] sm:$0xf] %vm674, %v612
      %678 = vst.msk [vmem:[%s180 + $0xc] sm:$0xf] %vm674, %v613
      %679 = vst.msk [vmem:[%s180 + $0x10] sm:$0xf] %vm674, %v614
      %680 = vst.msk [vmem:[%s180 + $0x14] sm:$0xf] %vm674, %v615
      %681 = vst.msk [vmem:[%s180 + $0x18] sm:$0xf] %vm674, %v616
      %682 = vst.msk [vmem:[%s180 + $0x1c] sm:$0xf] %vm674, %v617
      %683 = vst.msk [vmem:[%s180 + $0x20] sm:$0xf] %vm674, %v618
      %684 = vst.msk [vmem:[%s180 + $0x24] sm:$0xf] %vm674, %v619
      %685 = vst.msk [vmem:[%s180 + $0x28] sm:$0xf] %vm674, %v620
      %686 = vst.msk [vmem:[%s180 + $0x2c] sm:$0xf] %vm674, %v621
      %687 = vst.msk [vmem:[%s180 + $0x30] sm:$0xf] %vm674, %v622
      %688 = vst.msk [vmem:[%s180 + $0x34] sm:$0xf] %vm674, %v623
      %689 = vst.msk [vmem:[%s180 + $0x38] sm:$0xf] %vm674, %v624
      %690 = vst.msk [vmem:[%s180 + $0x3c] sm:$0xf] %vm674, %v625
      %691 = vst.msk [vmem:[%s180 + $0x40] sm:$0xf] %vm674, %v626
      %692 = vst.msk [vmem:[%s180 + $0x44] sm:$0xf] %vm674, %v627
      %693 = vst.msk [vmem:[%s180 + $0x48] sm:$0xf] %vm674, %v628
      %694 = vst.msk [vmem:[%s180 + $0x4c] sm:$0xf] %vm674, %v629
      %695 = vst.msk [vmem:[%s180 + $0x50] sm:$0xf] %vm674, %v630
      %696 = vst.msk [vmem:[%s180 + $0x54] sm:$0xf] %vm674, %v631
      %697 = vst.msk [vmem:[%s180 + $0x58] sm:$0xf] %vm674, %v632
      %698 = vst.msk [vmem:[%s180 + $0x5c] sm:$0xf] %vm674, %v633
      %699 = vst.msk [vmem:[%s180 + $0x60] sm:$0xf] %vm674, %v634
      %700 = vst.msk [vmem:[%s180 + $0x64] sm:$0xf] %vm674, %v635
      %701 = vst.msk [vmem:[%s180 + $0x68] sm:$0xf] %vm674, %v636
      %702 = vst.msk [vmem:[%s180 + $0x6c] sm:$0xf] %vm674, %v637
      %703 = vst.msk [vmem:[%s180 + $0x70] sm:$0xf] %vm674, %v638
      %704 = vst.msk [vmem:[%s180 + $0x74] sm:$0xf] %vm674, %v639
      %705 = vst.msk [vmem:[%s180 + $0x78] sm:$0xf] %vm674, %v640
      %706 = vst.msk [vmem:[%s180 + $0x7c] sm:$0xf] %vm674, %v641
      %739 = vrot.lane.b32.xlu0 %v388, 64
      %v740 = vpop.permute.xlu0 %739
      %741 = vrot.lane.b32.xlu0 %v393, 64
      %v742 = vpop.permute.xlu0 %741
      %743 = vrot.lane.b32.xlu0 %v398, 64
      %v744 = vpop.permute.xlu0 %743
      %745 = vrot.lane.b32.xlu0 %v403, 64
      %v746 = vpop.permute.xlu0 %745
      %747 = vrot.lane.b32.xlu0 %v408, 64
      %v748 = vpop.permute.xlu0 %747
      %749 = vrot.lane.b32.xlu0 %v413, 64
      %v750 = vpop.permute.xlu0 %749
      %751 = vrot.lane.b32.xlu0 %v418, 64
      %v752 = vpop.permute.xlu0 %751
      %753 = vrot.lane.b32.xlu0 %v423, 64
      %v754 = vpop.permute.xlu0 %753
      %755 = vrot.lane.b32.xlu0 %v428, 64
      %v756 = vpop.permute.xlu0 %755
      %757 = vrot.lane.b32.xlu0 %v433, 64
      %v758 = vpop.permute.xlu0 %757
      %759 = vrot.lane.b32.xlu0 %v438, 64
      %v760 = vpop.permute.xlu0 %759
      %761 = vrot.lane.b32.xlu0 %v443, 64
      %v762 = vpop.permute.xlu0 %761
      %763 = vrot.lane.b32.xlu0 %v448, 64
      %v764 = vpop.permute.xlu0 %763
      %765 = vrot.lane.b32.xlu0 %v453, 64
      %v766 = vpop.permute.xlu0 %765
      %767 = vrot.lane.b32.xlu0 %v458, 64
      %v768 = vpop.permute.xlu0 %767
      %769 = vrot.lane.b32.xlu0 %v463, 64
      %v770 = vpop.permute.xlu0 %769
      %771 = vrot.lane.b32.xlu0 %v468, 64
      %v772 = vpop.permute.xlu0 %771
      %773 = vrot.lane.b32.xlu0 %v473, 64
      %v774 = vpop.permute.xlu0 %773
      %775 = vrot.lane.b32.xlu0 %v478, 64
      %v776 = vpop.permute.xlu0 %775
      %777 = vrot.lane.b32.xlu0 %v483, 64
      %v778 = vpop.permute.xlu0 %777
      %779 = vrot.lane.b32.xlu0 %v488, 64
      %v780 = vpop.permute.xlu0 %779
      %781 = vrot.lane.b32.xlu0 %v493, 64
      %v782 = vpop.permute.xlu0 %781
      %783 = vrot.lane.b32.xlu0 %v498, 64
      %v784 = vpop.permute.xlu0 %783
      %785 = vrot.lane.b32.xlu0 %v503, 64
      %v786 = vpop.permute.xlu0 %785
      %787 = vrot.lane.b32.xlu0 %v508, 64
      %v788 = vpop.permute.xlu0 %787
      %789 = vrot.lane.b32.xlu0 %v513, 64
      %v790 = vpop.permute.xlu0 %789
      %791 = vrot.lane.b32.xlu0 %v518, 64
      %v792 = vpop.permute.xlu0 %791
      %793 = vrot.lane.b32.xlu0 %v523, 64
      %v794 = vpop.permute.xlu0 %793
      %795 = vrot.lane.b32.xlu0 %v528, 64
      %v796 = vpop.permute.xlu0 %795
      %797 = vrot.lane.b32.xlu0 %v533, 64
      %v798 = vpop.permute.xlu0 %797
      %799 = vrot.lane.b32.xlu0 %v538, 64
      %v800 = vpop.permute.xlu0 %799
      %801 = vrot.lane.b32.xlu0 %v543, 64
      %v802 = vpop.permute.xlu0 %801
      %vm835 = vcmask 15360
      %836 = vst.msk [vmem:[%s186] sm:$0xff] %vm835, %v740
      %837 = vst.msk [vmem:[%s186 + $0x8] sm:$0xff] %vm835, %v742
      %838 = vst.msk [vmem:[%s186 + $0x10] sm:$0xff] %vm835, %v744
      %839 = vst.msk [vmem:[%s186 + $0x18] sm:$0xff] %vm835, %v746
      %840 = vst.msk [vmem:[%s186 + $0x20] sm:$0xff] %vm835, %v748
      %841 = vst.msk [vmem:[%s186 + $0x28] sm:$0xff] %vm835, %v750
      %842 = vst.msk [vmem:[%s186 + $0x30] sm:$0xff] %vm835, %v752
      %843 = vst.msk [vmem:[%s186 + $0x38] sm:$0xff] %vm835, %v754
      %844 = vst.msk [vmem:[%s186 + $0x40] sm:$0xff] %vm835, %v756
      %845 = vst.msk [vmem:[%s186 + $0x48] sm:$0xff] %vm835, %v758
      %846 = vst.msk [vmem:[%s186 + $0x50] sm:$0xff] %vm835, %v760
      %847 = vst.msk [vmem:[%s186 + $0x58] sm:$0xff] %vm835, %v762
      %848 = vst.msk [vmem:[%s186 + $0x60] sm:$0xff] %vm835, %v764
      %849 = vst.msk [vmem:[%s186 + $0x68] sm:$0xff] %vm835, %v766
      %850 = vst.msk [vmem:[%s186 + $0x70] sm:$0xff] %vm835, %v768
      %851 = vst.msk [vmem:[%s186 + $0x78] sm:$0xff] %vm835, %v770
      %852 = vst.msk [vmem:[%s186 + $0x80] sm:$0xff] %vm835, %v772
      %853 = vst.msk [vmem:[%s186 + $0x88] sm:$0xff] %vm835, %v774
      %854 = vst.msk [vmem:[%s186 + $0x90] sm:$0xff] %vm835, %v776
      %855 = vst.msk [vmem:[%s186 + $0x98] sm:$0xff] %vm835, %v778
      %856 = vst.msk [vmem:[%s186 + $0xa0] sm:$0xff] %vm835, %v780
      %857 = vst.msk [vmem:[%s186 + $0xa8] sm:$0xff] %vm835, %v782
      %858 = vst.msk [vmem:[%s186 + $0xb0] sm:$0xff] %vm835, %v784
      %859 = vst.msk [vmem:[%s186 + $0xb8] sm:$0xff] %vm835, %v786
      %860 = vst.msk [vmem:[%s186 + $0xc0] sm:$0xff] %vm835, %v788
      %861 = vst.msk [vmem:[%s186 + $0xc8] sm:$0xff] %vm835, %v790
      %862 = vst.msk [vmem:[%s186 + $0xd0] sm:$0xff] %vm835, %v792
      %863 = vst.msk [vmem:[%s186 + $0xd8] sm:$0xff] %vm835, %v794
      %864 = vst.msk [vmem:[%s186 + $0xe0] sm:$0xff] %vm835, %v796
      %865 = vst.msk [vmem:[%s186 + $0xe8] sm:$0xff] %vm835, %v798
      %866 = vst.msk [vmem:[%s186 + $0xf0] sm:$0xff] %vm835, %v800
      %867 = vst.msk [vmem:[%s186 + $0xf8] sm:$0xff] %vm835, %v802
      %s868 = smul.u32 32, %s15
      %p869 = scmp.lt.s32.totalorder %s868, 95
      %s870 = scalar_select %p869, %s868, 95
      %s871 = smul.addr %s870, 4
      %s872 = scalar_lea.vmem %s2, %s871
      %s873 = smul.u32 32, %s15
      %p874 = scmp.lt.s32.totalorder %s873, 95
      %s875 = scalar_select %p874, %s873, 95
      %s876 = smul.addr %s875, 8
      %s877 = scalar_lea.vmem %s3, %s876
      // Predicated region
      $region29: #{gat_layer_pallas.3} parent=27 // pred_check
        %p878 = pneg %p80
      $region30: #{gat_layer_pallas.3} parent=27 // pred_check_branch
        %880 = sbr.rel (%p878) target = $region32
      $region31: #{gat_layer_pallas.3} parent=27 // pred_region
        %s881 = smul.u32 32, %s15
      $region32: #{gat_layer_pallas.3} parent=27 // pred_fallthru
        _
      // Predicated region
      $region33: #{gat_layer_pallas.3} parent=27 // pred_check
        %p882 = pneg %p106
      $region34: #{gat_layer_pallas.3} parent=27 // pred_check_branch
        %884 = sbr.rel (%p882) target = $region36
      $region35: #{gat_layer_pallas.3} parent=27 // pred_region
        %s885 = smul.u32 32, %s15
      $region36: #{gat_layer_pallas.3} parent=27 // pred_fallthru
        _
    $region28: #{gat_layer_pallas.3} parent=5 // pred_fallthru
      _
    %p886 = scmp.le.s32.totalorder 2, %s10
    // Predicated region
    $region37: #{gat_layer_pallas.3} parent=5 // pred_check
      %p887 = pneg %p886
    $region38: #{gat_layer_pallas.3} parent=5 // pred_check_branch
      %889 = sbr.rel (%p887) target = $region40
    $region39: #{gat_layer_pallas.3} parent=5 // pred_region
      %s890 = ssub.s32 %s10, 2
      // Predicated region
      $region41: #{gat_layer_pallas.3} parent=39 // pred_check
        %p891 = pneg %p86
      $region42: #{gat_layer_pallas.3} parent=39 // pred_check_branch
        %893 = sbr.rel (%p891) target = $region44
      $region43: #{gat_layer_pallas.3} parent=39 // pred_region
        %s894 = smul.u32 32, %s16
        %p895 = scmp.lt.s32.totalorder %s894, 95
        %s896 = scalar_select %p895, %s894, 95
        %s897 = smul.addr %s896, 4
        %s898 = scalar_lea.vmem %s2, %s897
      $region44: #{gat_layer_pallas.3} parent=39 // pred_fallthru
        _
      // Predicated region
      $region45: #{gat_layer_pallas.3} parent=39 // pred_check
        %p899 = pneg %p112
      $region46: #{gat_layer_pallas.3} parent=39 // pred_check_branch
        %901 = sbr.rel (%p899) target = $region48
      $region47: #{gat_layer_pallas.3} parent=39 // pred_region
        %s902 = smul.u32 32, %s16
        %p903 = scmp.lt.s32.totalorder %s902, 95
        %s904 = scalar_select %p903, %s902, 95
        %s905 = smul.addr %s904, 8
        %s906 = scalar_lea.vmem %s3, %s905
      $region48: #{gat_layer_pallas.3} parent=39 // pred_fallthru
        _
    $region40: #{gat_layer_pallas.3} parent=5 // pred_fallthru
      _
  $region6: #{gat_layer_pallas.3} parent=0 // loop_footer
    %s14 = sadd.s32 1, %s10
  $region7: #{gat_layer_pallas.3} parent=0 // loop_footer_branch
    %9 = sbr.rel target = $region3
  $region8: #{gat_layer_pallas.3} parent=0 // loop_exit
    _

// kernel: gat_layer_pallas.5
$region0: #{gat_layer_pallas.5}
  #allocation0 [shape = 'u32[]', space=smem, size = 0x4, offset = 0x4, fixed_abs, tag = 'smem constant byte address 0x4 - core index']
  #allocation1 [shape = 'u32[144,128]{1,0:T(1,128)}', space=vmem, size = 0x12000, scoped, tag = 'internal scratch']
  #allocation2 [shape = 'f32[256,64]{1,0:T(8,128)}', space=vmem, size = 0x20000, scoped, tag = 'scratch operand']
  #allocation3 [shape = 'f32[256,64]{1,0:T(8,128)}', space=vmem, size = 0x20000, scoped, tag = 'scratch operand']
  %s0 = inlined_call_operand.vmem [shape: bf16[768,64], index: 0, kind: input, shape index: {}]
  %s1 = inlined_call_operand.vmem [shape: f32[2,768], index: 1, kind: input, shape index: {}]
  %s2 = inlined_call_operand.vmem [shape: f32[512,2], index: 2, kind: input, shape index: {}]
  %s3 = inlined_call_operand.vmem [shape: s8[512,768], index: 3, kind: input, shape index: {}]
  %s4 = inlined_call_operand.vmem [shape: f32[512,64], index: 4, kind: output, shape index: {}]
  %s5 = sld [smem:[#allocation0]]
  $region80: #{gat_layer_pallas.5} parent=0
    _
  %s7 = ssub.s32 1, %s5
  %s8 = scalar_select 0, %s7, %s5
  $region1: #{gat_layer_pallas.5} parent=0
    #allocation4 [shape = 'u8[131072]{0}', space=vmem, size = 0x20000, scoped, tag = 'input window, operand 3']
    loop: start=0, step=1, limit=8
    $region2: #{gat_layer_pallas.5} parent=1 // loop_pre_header
      _
    $region3: #{gat_layer_pallas.5} parent=1 // loop_header
      %s10 = sphi 0, %s14
      %p11 = scmp.ge.s32.totalorder %s10, 8
      %s17 = sphi 0, %s29
      %s18 = sphi 0, %s25
      %s19 = sphi 0, %s17
      %s20 = sphi 0, %s18
      %s21 = sphi 0, %s19
      %s22 = sphi 0, %s20
      %s32 = sphi 0, %s34
      %s35 = sphi 0, %s32
      %s36 = sphi 0, %s35
      %s52 = sphi 0, %s36
      %s58 = sphi 0, %s60
      %s61 = sphi 0, %s58
      %s62 = sphi 0, %s61
      %s78 = sphi 0, %s62
      %s84 = sphi 0, %s86
      %s87 = sphi 0, %s84
      %s88 = sphi 0, %s87
      %s104 = sphi 0, %s88
      %s112 = sphi 0, %s114
      %s115 = sphi 0, %s112
      %s116 = sphi 0, %s115
      %s132 = sphi 0, %s116
      %s138 = sphi 0, %s140
      %s141 = sphi 0, %s138
      %s142 = sphi 0, %s141
      %s158 = sphi 0, %s142
    $region4: #{gat_layer_pallas.5} parent=1 // loop_header_branch
      %13 = sbr.rel (%p11) target = $region8
    $region5: #{gat_layer_pallas.5} parent=1 // loop_body
      %s15 = ssub.s32 %s10, 1
      %s16 = ssub.s32 %s10, 2
      %s23 = sadd.s32 1, %s18
      %p24 = scmp.ge.s32.totalorder %s23, 3
      %s25 = scalar_select %p24, 0, %s23
      %s26 = sadd.s32 1, %s17
      %s27 = scalar_select %p24, %s26, %s17
      %p28 = scmp.ge.s32.totalorder %s27, 2
      %s29 = scalar_select %p28, 0, %s27
      %s30 = ssub.s32 %s18, %s25
      %p31 = scmp.eq.s32.totalorder %s30, 0
      %s33 = sadd.s32 %s32, 1
      %s34 = scalar_select %p31, %s32, %s33
      %p37 = pneg %p31
      %p38 = scmp.eq.s32.totalorder %s10, 5
      %p39 = por %p37, %p38
      %p40 = scmp.ne.s32.totalorder %s32, %s35
      %p41 = scmp.eq.s32.totalorder %s10, 0
      %p42 = por %p40, %p41
      %p43 = scmp.ne.s32.totalorder %s32, %s35
      %p44 = scmp.eq.s32.totalorder %s15, 5
      %p45 = por %p43, %p44
      %p46 = scmp.ne.s32.totalorder %s35, %s36
      %p47 = scmp.eq.s32.totalorder %s15, 0
      %p48 = por %p46, %p47
      %p49 = scmp.ne.s32.totalorder %s35, %s36
      %p50 = scmp.eq.s32.totalorder %s16, 5
      %p51 = por %p49, %p50
      %p53 = scmp.ne.s32.totalorder %s36, %s52
      %p54 = scmp.eq.s32.totalorder %s16, 0
      %p55 = por %p53, %p54
      %s56 = ssub.s32 %s18, %s25
      %p57 = scmp.eq.s32.totalorder %s56, 0
      %s59 = sadd.s32 %s58, 1
      %s60 = scalar_select %p57, %s58, %s59
      %p63 = pneg %p57
      %p64 = scmp.eq.s32.totalorder %s10, 5
      %p65 = por %p63, %p64
      %p66 = scmp.ne.s32.totalorder %s58, %s61
      %p67 = scmp.eq.s32.totalorder %s10, 0
      %p68 = por %p66, %p67
      %p69 = scmp.ne.s32.totalorder %s58, %s61
      %p70 = scmp.eq.s32.totalorder %s15, 5
      %p71 = por %p69, %p70
      %p72 = scmp.ne.s32.totalorder %s61, %s62
      %p73 = scmp.eq.s32.totalorder %s15, 0
      %p74 = por %p72, %p73
      %p75 = scmp.ne.s32.totalorder %s61, %s62
      %p76 = scmp.eq.s32.totalorder %s16, 5
      %p77 = por %p75, %p76
      %p79 = scmp.ne.s32.totalorder %s62, %s78
      %p80 = scmp.eq.s32.totalorder %s16, 0
      %p81 = por %p79, %p80
      %s82 = ssub.s32 %s17, %s29
      %p83 = scmp.eq.s32.totalorder %s82, 0
      %s85 = sadd.s32 %s84, 1
      %s86 = scalar_select %p83, %s84, %s85
      %p89 = pneg %p83
      %p90 = scmp.eq.s32.totalorder %s10, 5
      %p91 = por %p89, %p90
      %p92 = scmp.ne.s32.totalorder %s84, %s87
      %p93 = scmp.eq.s32.totalorder %s10, 0
      %p94 = por %p92, %p93
      %p95 = scmp.ne.s32.totalorder %s84, %s87
      %p96 = scmp.eq.s32.totalorder %s15, 5
      %p97 = por %p95, %p96
      %p98 = scmp.ne.s32.totalorder %s87, %s88
      %p99 = scmp.eq.s32.totalorder %s15, 0
      %p100 = por %p98, %p99
      %p101 = scmp.ne.s32.totalorder %s87, %s88
      %p102 = scmp.eq.s32.totalorder %s16, 5
      %p103 = por %p101, %p102
      %p105 = scmp.ne.s32.totalorder %s88, %s104
      %p106 = scmp.eq.s32.totalorder %s16, 0
      %p107 = por %p105, %p106
      %s108 = ssub.s32 %s17, %s29
      %s109 = ssub.s32 %s18, %s25
      %s110 = sor.u32 %s108, %s109
      %p111 = scmp.eq.s32.totalorder %s110, 0
      %s113 = sadd.s32 %s112, 1
      %s114 = scalar_select %p111, %s112, %s113
      %p117 = pneg %p111
      %p118 = scmp.eq.s32.totalorder %s10, 5
      %p119 = por %p117, %p118
      %p120 = scmp.ne.s32.totalorder %s112, %s115
      %p121 = scmp.eq.s32.totalorder %s10, 0
      %p122 = por %p120, %p121
      %p123 = scmp.ne.s32.totalorder %s112, %s115
      %p124 = scmp.eq.s32.totalorder %s15, 5
      %p125 = por %p123, %p124
      %p126 = scmp.ne.s32.totalorder %s115, %s116
      %p127 = scmp.eq.s32.totalorder %s15, 0
      %p128 = por %p126, %p127
      %p129 = scmp.ne.s32.totalorder %s115, %s116
      %p130 = scmp.eq.s32.totalorder %s16, 5
      %p131 = por %p129, %p130
      %p133 = scmp.ne.s32.totalorder %s116, %s132
      %p134 = scmp.eq.s32.totalorder %s16, 0
      %p135 = por %p133, %p134
      %s136 = ssub.s32 %s17, %s29
      %p137 = scmp.eq.s32.totalorder %s136, 0
      %s139 = sadd.s32 %s138, 1
      %s140 = scalar_select %p137, %s138, %s139
      %p143 = pneg %p137
      %p144 = scmp.eq.s32.totalorder %s10, 5
      %p145 = por %p143, %p144
      %p146 = scmp.ne.s32.totalorder %s138, %s141
      %p147 = scmp.eq.s32.totalorder %s10, 0
      %p148 = por %p146, %p147
      %p149 = scmp.ne.s32.totalorder %s138, %s141
      %p150 = scmp.eq.s32.totalorder %s15, 5
      %p151 = por %p149, %p150
      %p152 = scmp.ne.s32.totalorder %s141, %s142
      %p153 = scmp.eq.s32.totalorder %s15, 0
      %p154 = por %p152, %p153
      %p155 = scmp.ne.s32.totalorder %s141, %s142
      %p156 = scmp.eq.s32.totalorder %s16, 5
      %p157 = por %p155, %p156
      %p159 = scmp.ne.s32.totalorder %s142, %s158
      %p160 = scmp.eq.s32.totalorder %s16, 0
      %p161 = por %p159, %p160
      %p162 = scmp.le.s32.totalorder 1, %s10
      %p163 = scmp.lt.s32.totalorder %s10, 7
      %p164 = pnand %p162, %p163
      %p165 = pneg %p164
      // Predicated region
      $region9: #{gat_layer_pallas.5} parent=5 // pred_check
        _
      $region10: #{gat_layer_pallas.5} parent=5 // pred_check_branch
        %167 = sbr.rel (%p164) target = $region12
      $region11: #{gat_layer_pallas.5} parent=5 // pred_region
        %s168 = ssub.s32 %s10, 1
      $region12: #{gat_layer_pallas.5} parent=5 // pred_fallthru
        _
      %p169 = scmp.lt.s32.totalorder %s10, 6
      // Predicated region
      $region13: #{gat_layer_pallas.5} parent=5 // pred_check
        %p170 = pneg %p169
      $region14: #{gat_layer_pallas.5} parent=5 // pred_check_branch
        %172 = sbr.rel (%p170) target = $region16
      $region15: #{gat_layer_pallas.5} parent=5 // pred_region
        // Predicated region
        $region17: #{gat_layer_pallas.5} parent=15 // pred_check
          %p173 = pneg %p42
        $region18: #{gat_layer_pallas.5} parent=15 // pred_check_branch
          %175 = sbr.rel (%p173) target = $region20
        $region19: #{gat_layer_pallas.5} parent=15 // pred_region
          %s176 = smul.u32 32, %s18
          %p177 = scmp.lt.s32.totalorder %s176, 95
          %s178 = scalar_select %p177, %s176, 95
          %s179 = smul.addr %s178, 4
          %s180 = scalar_lea.vmem %s0, %s179
          %s181 = smul.u32 32, %s18
        $region20: #{gat_layer_pallas.5} parent=15 // pred_fallthru
          _
        // Predicated region
        $region21: #{gat_layer_pallas.5} parent=15 // pred_check
          %p182 = pneg %p68
        $region22: #{gat_layer_pallas.5} parent=15 // pred_check_branch
          %184 = sbr.rel (%p182) target = $region24
        $region23: #{gat_layer_pallas.5} parent=15 // pred_region
          %s185 = smul.u32 2, %s18
          %p186 = scmp.lt.s32.totalorder %s185, 5
          %s187 = scalar_select %p186, %s185, 5
          %s188 = smul.addr %s187, 2
          %s189 = scalar_lea.vmem %s1, %s188
          %s190 = smul.u32 2, %s18
        $region24: #{gat_layer_pallas.5} parent=15 // pred_fallthru
          _
        // Predicated region
        $region25: #{gat_layer_pallas.5} parent=15 // pred_check
          %p191 = pneg %p94
        $region26: #{gat_layer_pallas.5} parent=15 // pred_check_branch
          %193 = sbr.rel (%p191) target = $region28
        $region27: #{gat_layer_pallas.5} parent=15 // pred_region
          %s194 = smul.u32 32, %s17
          %p195 = scmp.lt.s32.totalorder %s194, 63
          %s196 = scalar_select %p195, %s194, 63
          %s197 = smul.addr %s196, 8
          %s198 = scalar_lea.vmem %s2, %s197
          %s199 = smul.u32 32, %s17
        $region28: #{gat_layer_pallas.5} parent=15 // pred_fallthru
          _
        // Predicated region
        $region29: #{gat_layer_pallas.5} parent=15 // pred_check
          %p200 = pneg %p122
        $region30: #{gat_layer_pallas.5} parent=15 // pred_check_branch
          %202 = sbr.rel (%p200) target = $region32
        $region31: #{gat_layer_pallas.5} parent=15 // pred_region
          %s203 = sand.u32 %s112, 1
          %s204 = sand.u32 %s112, 1
          %s205 = smul.addr %s204, 128
          %s206 = scalar_lea.vmem [#allocation4], %s205
          %s207 = smul.u32 8, %s17
          %s208 = smul.u32 2, %s18
          %s209 = smul.addr %s207, 6
          %s210 = sadd.s32 %s208, %s209
          %s211 = smul.addr %s210, 8
          %s212 = scalar_lea.vmem %s3, %s211
          // Predicated region
          $region33: #{gat_layer_pallas.5} parent=31 // pred_check
            _
          $region34: #{gat_layer_pallas.5} parent=31 // pred_check_branch
            %214 = sbr.rel (0) target = $region36
          $region35: #{gat_layer_pallas.5} parent=31 // pred_region
            // Predicated region
            $region37: #{gat_layer_pallas.5} parent=35 // pred_check
              _
            $region38: #{gat_layer_pallas.5} parent=35 // pred_check_branch
              %216 = sbr.rel (0) target = $region40
            $region39: #{gat_layer_pallas.5} parent=35 // pred_region
              loop: start=0, step=1, limit=1
              $region41: #{gat_layer_pallas.5} parent=39 // loop_pre_header
                _
              $region42: #{gat_layer_pallas.5} parent=39 // loop_header
                %s218 = sphi 0, %s222
                %p219 = scmp.ge.s32.totalorder %s218, 1
                %s223 = sphi %s212, %s212
                %s224 = sphi %s206, %s206
              $region43: #{gat_layer_pallas.5} parent=39 // loop_header_branch
                %221 = sbr.rel (%p219) target = $region47
              $region44: #{gat_layer_pallas.5} parent=39 // loop_body
                %v225 = vld [vmem:[%s223] sm:$0xff]
                %226 = vst [vmem:[%s224] sm:$0xff] %v225
                %v227 = vld [vmem:[%s223 + $0x8] sm:$0xff]
                %228 = vst [vmem:[%s224 + $0x8] sm:$0xff] %v227
                %v229 = vld [vmem:[%s223 + $0x30] sm:$0xff]
                %230 = vst [vmem:[%s224 + $0x10] sm:$0xff] %v229
                %v231 = vld [vmem:[%s223 + $0x38] sm:$0xff]
                %232 = vst [vmem:[%s224 + $0x18] sm:$0xff] %v231
                %v233 = vld [vmem:[%s223 + $0x60] sm:$0xff]
                %234 = vst [vmem:[%s224 + $0x20] sm:$0xff] %v233
                %v235 = vld [vmem:[%s223 + $0x68] sm:$0xff]
                %236 = vst [vmem:[%s224 + $0x28] sm:$0xff] %v235
                %v237 = vld [vmem:[%s223 + $0x90] sm:$0xff]
                %238 = vst [vmem:[%s224 + $0x30] sm:$0xff] %v237
                %v239 = vld [vmem:[%s223 + $0x98] sm:$0xff]
                %240 = vst [vmem:[%s224 + $0x38] sm:$0xff] %v239
                %v241 = vld [vmem:[%s223 + $0xc0] sm:$0xff]
                %242 = vst [vmem:[%s224 + $0x40] sm:$0xff] %v241
                %v243 = vld [vmem:[%s223 + $0xc8] sm:$0xff]
                %244 = vst [vmem:[%s224 + $0x48] sm:$0xff] %v243
                %v245 = vld [vmem:[%s223 + $0xf0] sm:$0xff]
                %246 = vst [vmem:[%s224 + $0x50] sm:$0xff] %v245
                %v247 = vld [vmem:[%s223 + $0xf8] sm:$0xff]
                %248 = vst [vmem:[%s224 + $0x58] sm:$0xff] %v247
                %v249 = vld [vmem:[%s223 + $0x120] sm:$0xff]
                %250 = vst [vmem:[%s224 + $0x60] sm:$0xff] %v249
                %v251 = vld [vmem:[%s223 + $0x128] sm:$0xff]
                %252 = vst [vmem:[%s224 + $0x68] sm:$0xff] %v251
                %v253 = vld [vmem:[%s223 + $0x150] sm:$0xff]
                %254 = vst [vmem:[%s224 + $0x70] sm:$0xff] %v253
                %v255 = vld [vmem:[%s223 + $0x158] sm:$0xff]
                %256 = vst [vmem:[%s224 + $0x78] sm:$0xff] %v255
              $region45: #{gat_layer_pallas.5} parent=39 // loop_footer
                %s222 = sadd.s32 1, %s218
              $region46: #{gat_layer_pallas.5} parent=39 // loop_footer_branch
                %217 = sbr.rel target = $region42
              $region47: #{gat_layer_pallas.5} parent=39 // loop_exit
                _
            $region40: #{gat_layer_pallas.5} parent=35 // pred_fallthru
              _
            // Predicated region
            $region48: #{gat_layer_pallas.5} parent=35 // pred_check
              _
            $region49: #{gat_layer_pallas.5} parent=35 // pred_check_branch
              %258 = sbr.rel target = $region51
            $region50: #{gat_layer_pallas.5} parent=35 // pred_region
              _
            $region51: #{gat_layer_pallas.5} parent=35 // pred_fallthru
              _
          $region36: #{gat_layer_pallas.5} parent=31 // pred_fallthru
            _
          %259 = vnop
        $region32: #{gat_layer_pallas.5} parent=15 // pred_fallthru
          _
      $region16: #{gat_layer_pallas.5} parent=5 // pred_fallthru
        _
      %p260 = scmp.le.s32.totalorder 1, %s10
      %p261 = scmp.lt.s32.totalorder %s10, 7
      %p262 = pnand %p260, %p261
      %p263 = pneg %p262
      // Predicated region
      $region52: #{gat_layer_pallas.5} parent=5 // pred_check
        _
      $region53: #{gat_layer_pallas.5} parent=5 // pred_check_branch
        %265 = sbr.rel (%p262) target = $region55
      $region54: #{gat_layer_pallas.5} parent=5 // pred_region
        %s266 = ssub.s32 %s10, 1
        %s267 = sand.u32 %s115, 1
        %s268 = sand.u32 %s115, 1
        %s269 = smul.addr %s268, 128
        %s270 = scalar_lea.vmem [#allocation4], %s269
        // Predicated region
        $region56: #{gat_layer_pallas.5} parent=54 // pred_check
          %p271 = pneg %p128
        $region57: #{gat_layer_pallas.5} parent=54 // pred_check_branch
          %273 = sbr.rel (%p271) target = $region59
        $region58: #{gat_layer_pallas.5} parent=54 // pred_region
          _
        $region59: #{gat_layer_pallas.5} parent=54 // pred_fallthru
          _
        %s274 = smul.u32 32, %s20
        %p275 = scmp.lt.s32.totalorder %s274, 95
        %s276 = scalar_select %p275, %s274, 95
        %s277 = smul.addr %s276, 4
        %s278 = scalar_lea.vmem %s0, %s277
        %p279 = pneg %p48
        %p280 = pneg %p45
        %s281 = smul.u32 2, %s20
        %p282 = scmp.lt.s32.totalorder %s281, 5
        %s283 = scalar_select %p282, %s281, 5
        %s284 = smul.addr %s283, 2
        %s285 = scalar_lea.vmem %s1, %s284
        %p286 = pneg %p74
        %p287 = pneg %p71
        %s288 = smul.u32 32, %s19
        %p289 = scmp.lt.s32.totalorder %s288, 63
        %s290 = scalar_select %p289, %s288, 63
        %s291 = smul.addr %s290, 8
        %s292 = scalar_lea.vmem %s2, %s291
        %p293 = pneg %p100
        %p294 = pneg %p97
        %s295 = sand.u32 %s115, 1
        %s296 = sand.u32 %s115, 1
        %s297 = smul.addr %s296, 128
        %s298 = scalar_lea.vmem [#allocation4], %s297
        %p299 = pneg %p128
        %p300 = pneg %p125
        %p301 = pneg %p154
        %p302 = pneg %p151
        %s303 = smul.u32 32, %s19
        %p304 = scmp.lt.s32.totalorder %s303, 63
        %s305 = scalar_select %p304, %s303, 63
        %s306 = smul.addr %s305, 8
        %s307 = scalar_lea.vmem %s4, %s306
        %s308 = smul.u32 32, %s20
        %p309 = scmp.lt.s32.totalorder %s308, 95
        %s310 = scalar_select %p309, %s308, 95
        %s311 = smul.addr %s310, 4
        %s312 = scalar_lea.vmem %s0, %s311
        %s313 = smul.u32 32, %s20
        %s314 = smul.u32 2, %s20
        %p315 = scmp.lt.s32.totalorder %s314, 5
        %s316 = scalar_select %p315, %s314, 5
        %s317 = smul.addr %s316, 2
        %s318 = scalar_lea.vmem %s1, %s317
        %s319 = smul.u32 2, %s20
        %s320 = smul.u32 32, %s19
        %p321 = scmp.lt.s32.totalorder %s320, 63
        %s322 = scalar_select %p321, %s320, 63
        %s323 = smul.addr %s322, 8
        %s324 = scalar_lea.vmem %s2, %s323
        %s325 = smul.u32 32, %s19
        %s326 = smul.u32 8, %s19
        %s327 = smul.u32 2, %s20
        %s328 = smul.u32 32, %s19
        %p329 = scmp.lt.s32.totalorder %s328, 63
        %s330 = scalar_select %p329, %s328, 63
        %s331 = smul.addr %s330, 8
        %s332 = scalar_lea.vmem %s4, %s331
        %s333 = smul.u32 32, %s19
        %p337 = scmp.eq.s32.totalorder %s20, 0
        // Predicated region
        $region60: #{gat_layer_pallas.5} parent=54 // pred_check
          %p338 = pneg %p337
        $region61: #{gat_layer_pallas.5} parent=54 // pred_check_branch
          %340 = sbr.rel (%p338) target = $region63
        $region62: #{gat_layer_pallas.5} parent=54 // pred_region
          %vm341 = vcmask 523264
          %342 = vst.msk [vmem:[#allocation2] sm:$0xff] %vm341, 0.0
          %343 = vst.msk [vmem:[#allocation2 + $0x8] sm:$0xff] %vm341, 0.0
          %344 = vst.msk [vmem:[#allocation2 + $0x10] sm:$0xff] %vm341, 0.0
          %345 = vst.msk [vmem:[#allocation2 + $0x18] sm:$0xff] %vm341, 0.0
          %346 = vst.msk [vmem:[#allocation2 + $0x20] sm:$0xff] %vm341, 0.0
          %347 = vst.msk [vmem:[#allocation2 + $0x28] sm:$0xff] %vm341, 0.0
          %348 = vst.msk [vmem:[#allocation2 + $0x30] sm:$0xff] %vm341, 0.0
          %349 = vst.msk [vmem:[#allocation2 + $0x38] sm:$0xff] %vm341, 0.0
          %350 = vst.msk [vmem:[#allocation2 + $0x40] sm:$0xff] %vm341, 0.0
          %351 = vst.msk [vmem:[#allocation2 + $0x48] sm:$0xff] %vm341, 0.0
          %352 = vst.msk [vmem:[#allocation2 + $0x50] sm:$0xff] %vm341, 0.0
          %353 = vst.msk [vmem:[#allocation2 + $0x58] sm:$0xff] %vm341, 0.0
          %354 = vst.msk [vmem:[#allocation2 + $0x60] sm:$0xff] %vm341, 0.0
          %355 = vst.msk [vmem:[#allocation2 + $0x68] sm:$0xff] %vm341, 0.0
          %356 = vst.msk [vmem:[#allocation2 + $0x70] sm:$0xff] %vm341, 0.0
          %357 = vst.msk [vmem:[#allocation2 + $0x78] sm:$0xff] %vm341, 0.0
          %358 = vst.msk [vmem:[#allocation2 + $0x80] sm:$0xff] %vm341, 0.0
          %359 = vst.msk [vmem:[#allocation2 + $0x88] sm:$0xff] %vm341, 0.0
          %360 = vst.msk [vmem:[#allocation2 + $0x90] sm:$0xff] %vm341, 0.0
          %361 = vst.msk [vmem:[#allocation2 + $0x98] sm:$0xff] %vm341, 0.0
          %362 = vst.msk [vmem:[#allocation2 + $0xa0] sm:$0xff] %vm341, 0.0
          %363 = vst.msk [vmem:[#allocation2 + $0xa8] sm:$0xff] %vm341, 0.0
          %364 = vst.msk [vmem:[#allocation2 + $0xb0] sm:$0xff] %vm341, 0.0
          %365 = vst.msk [vmem:[#allocation2 + $0xb8] sm:$0xff] %vm341, 0.0
          %366 = vst.msk [vmem:[#allocation2 + $0xc0] sm:$0xff] %vm341, 0.0
          %367 = vst.msk [vmem:[#allocation2 + $0xc8] sm:$0xff] %vm341, 0.0
          %368 = vst.msk [vmem:[#allocation2 + $0xd0] sm:$0xff] %vm341, 0.0
          %369 = vst.msk [vmem:[#allocation2 + $0xd8] sm:$0xff] %vm341, 0.0
          %370 = vst.msk [vmem:[#allocation2 + $0xe0] sm:$0xff] %vm341, 0.0
          %371 = vst.msk [vmem:[#allocation2 + $0xe8] sm:$0xff] %vm341, 0.0
          %372 = vst.msk [vmem:[#allocation2 + $0xf0] sm:$0xff] %vm341, 0.0
          %373 = vst.msk [vmem:[#allocation2 + $0xf8] sm:$0xff] %vm341, 0.0
          %374 = vst.msk [vmem:[#allocation3] sm:$0xff] %vm341, 0.0
          %375 = vst.msk [vmem:[#allocation3 + $0x8] sm:$0xff] %vm341, 0.0
          %376 = vst.msk [vmem:[#allocation3 + $0x10] sm:$0xff] %vm341, 0.0
          %377 = vst.msk [vmem:[#allocation3 + $0x18] sm:$0xff] %vm341, 0.0
          %378 = vst.msk [vmem:[#allocation3 + $0x20] sm:$0xff] %vm341, 0.0
          %379 = vst.msk [vmem:[#allocation3 + $0x28] sm:$0xff] %vm341, 0.0
          %380 = vst.msk [vmem:[#allocation3 + $0x30] sm:$0xff] %vm341, 0.0
          %381 = vst.msk [vmem:[#allocation3 + $0x38] sm:$0xff] %vm341, 0.0
          %382 = vst.msk [vmem:[#allocation3 + $0x40] sm:$0xff] %vm341, 0.0
          %383 = vst.msk [vmem:[#allocation3 + $0x48] sm:$0xff] %vm341, 0.0
          %384 = vst.msk [vmem:[#allocation3 + $0x50] sm:$0xff] %vm341, 0.0
          %385 = vst.msk [vmem:[#allocation3 + $0x58] sm:$0xff] %vm341, 0.0
          %386 = vst.msk [vmem:[#allocation3 + $0x60] sm:$0xff] %vm341, 0.0
          %387 = vst.msk [vmem:[#allocation3 + $0x68] sm:$0xff] %vm341, 0.0
          %388 = vst.msk [vmem:[#allocation3 + $0x70] sm:$0xff] %vm341, 0.0
          %389 = vst.msk [vmem:[#allocation3 + $0x78] sm:$0xff] %vm341, 0.0
          %390 = vst.msk [vmem:[#allocation3 + $0x80] sm:$0xff] %vm341, 0.0
          %391 = vst.msk [vmem:[#allocation3 + $0x88] sm:$0xff] %vm341, 0.0
          %392 = vst.msk [vmem:[#allocation3 + $0x90] sm:$0xff] %vm341, 0.0
          %393 = vst.msk [vmem:[#allocation3 + $0x98] sm:$0xff] %vm341, 0.0
          %394 = vst.msk [vmem:[#allocation3 + $0xa0] sm:$0xff] %vm341, 0.0
          %395 = vst.msk [vmem:[#allocation3 + $0xa8] sm:$0xff] %vm341, 0.0
          %396 = vst.msk [vmem:[#allocation3 + $0xb0] sm:$0xff] %vm341, 0.0
          %397 = vst.msk [vmem:[#allocation3 + $0xb8] sm:$0xff] %vm341, 0.0
          %398 = vst.msk [vmem:[#allocation3 + $0xc0] sm:$0xff] %vm341, 0.0
          %399 = vst.msk [vmem:[#allocation3 + $0xc8] sm:$0xff] %vm341, 0.0
          %400 = vst.msk [vmem:[#allocation3 + $0xd0] sm:$0xff] %vm341, 0.0
          %401 = vst.msk [vmem:[#allocation3 + $0xd8] sm:$0xff] %vm341, 0.0
          %402 = vst.msk [vmem:[#allocation3 + $0xe0] sm:$0xff] %vm341, 0.0
          %403 = vst.msk [vmem:[#allocation3 + $0xe8] sm:$0xff] %vm341, 0.0
          %404 = vst.msk [vmem:[#allocation3 + $0xf0] sm:$0xff] %vm341, 0.0
          %405 = vst.msk [vmem:[#allocation3 + $0xf8] sm:$0xff] %vm341, 0.0
        $region63: #{gat_layer_pallas.5} parent=54 // pred_fallthru
          _
        %v406 = vld [vmem:[%s270] sm:$0xff]
        %v407 = vld [vmem:[%s270 + $0x8] sm:$0xff]
        %v408 = vld [vmem:[%s270 + $0x10] sm:$0xff]
        %v409 = vld [vmem:[%s270 + $0x18] sm:$0xff]
        %v410 = vld [vmem:[%s270 + $0x20] sm:$0xff]
        %v411 = vld [vmem:[%s270 + $0x28] sm:$0xff]
        %v412 = vld [vmem:[%s270 + $0x30] sm:$0xff]
        %v413 = vld [vmem:[%s270 + $0x38] sm:$0xff]
        %v414 = vld [vmem:[%s270 + $0x40] sm:$0xff]
        %v415 = vld [vmem:[%s270 + $0x48] sm:$0xff]
        %v416 = vld [vmem:[%s270 + $0x50] sm:$0xff]
        %v417 = vld [vmem:[%s270 + $0x58] sm:$0xff]
        %v418 = vld [vmem:[%s270 + $0x60] sm:$0xff]
        %v419 = vld [vmem:[%s270 + $0x68] sm:$0xff]
        %v420 = vld [vmem:[%s270 + $0x70] sm:$0xff]
        %v421 = vld [vmem:[%s270 + $0x78] sm:$0xff]
        %vm422 = vnez %v406
        %vm423 = vnez %v407
        %vm424 = vnez %v408
        %vm425 = vnez %v409
        %vm426 = vnez %v410
        %vm427 = vnez %v411
        %vm428 = vnez %v412
        %vm429 = vnez %v413
        %vm430 = vnez %v414
        %vm431 = vnez %v415
        %vm432 = vnez %v416
        %vm433 = vnez %v417
        %vm434 = vnez %v418
        %vm435 = vnez %v419
        %vm436 = vnez %v420
        %vm437 = vnez %v421
        %v438 = vld [vmem:[%s312] sm:$0xf]
        %v439 = vld [vmem:[%s312 + $0x4] sm:$0xf]
        %v440 = vld [vmem:[%s312 + $0x8] sm:$0xf]
        %v441 = vld [vmem:[%s312 + $0xc] sm:$0xf]
        %v442 = vld [vmem:[%s312 + $0x10] sm:$0xf]
        %v443 = vld [vmem:[%s312 + $0x14] sm:$0xf]
        %v444 = vld [vmem:[%s312 + $0x18] sm:$0xf]
        %v445 = vld [vmem:[%s312 + $0x1c] sm:$0xf]
        %v446 = vld [vmem:[%s312 + $0x20] sm:$0xf]
        %v447 = vld [vmem:[%s312 + $0x24] sm:$0xf]
        %v448 = vld [vmem:[%s312 + $0x28] sm:$0xf]
        %v449 = vld [vmem:[%s312 + $0x2c] sm:$0xf]
        %v450 = vld [vmem:[%s312 + $0x30] sm:$0xf]
        %v451 = vld [vmem:[%s312 + $0x34] sm:$0xf]
        %v452 = vld [vmem:[%s312 + $0x38] sm:$0xf]
        %v453 = vld [vmem:[%s312 + $0x3c] sm:$0xf]
        %v454 = vld [vmem:[%s312 + $0x40] sm:$0xf]
        %v455 = vld [vmem:[%s312 + $0x44] sm:$0xf]
        %v456 = vld [vmem:[%s312 + $0x48] sm:$0xf]
        %v457 = vld [vmem:[%s312 + $0x4c] sm:$0xf]
        %v458 = vld [vmem:[%s312 + $0x50] sm:$0xf]
        %v459 = vld [vmem:[%s312 + $0x54] sm:$0xf]
        %v460 = vld [vmem:[%s312 + $0x58] sm:$0xf]
        %v461 = vld [vmem:[%s312 + $0x5c] sm:$0xf]
        %v462 = vld [vmem:[%s312 + $0x60] sm:$0xf]
        %v463 = vld [vmem:[%s312 + $0x64] sm:$0xf]
        %v464 = vld [vmem:[%s312 + $0x68] sm:$0xf]
        %v465 = vld [vmem:[%s312 + $0x6c] sm:$0xf]
        %v466 = vld [vmem:[%s312 + $0x70] sm:$0xf]
        %v467 = vld [vmem:[%s312 + $0x74] sm:$0xf]
        %v468 = vld [vmem:[%s312 + $0x78] sm:$0xf]
        %v469 = vld [vmem:[%s312 + $0x7c] sm:$0xf]
        %v470 = vld [vmem:[%s318] sm:$0xf]
        %v471 = vld [vmem:[%s324] sm:$0xff]
        %v472 = vld [vmem:[%s324 + $0x8] sm:$0xff]
        %v473 = vld [vmem:[%s324 + $0x10] sm:$0xff]
        %v474 = vld [vmem:[%s324 + $0x18] sm:$0xff]
        %v475 = vld [vmem:[%s324 + $0x20] sm:$0xff]
        %v476 = vld [vmem:[%s324 + $0x28] sm:$0xff]
        %v477 = vld [vmem:[%s324 + $0x30] sm:$0xff]
        %v478 = vld [vmem:[%s324 + $0x38] sm:$0xff]
        %v479 = vld [vmem:[%s324 + $0x40] sm:$0xff]
        %v480 = vld [vmem:[%s324 + $0x48] sm:$0xff]
        %v481 = vld [vmem:[%s324 + $0x50] sm:$0xff]
        %v482 = vld [vmem:[%s324 + $0x58] sm:$0xff]
        %v483 = vld [vmem:[%s324 + $0x60] sm:$0xff]
        %v484 = vld [vmem:[%s324 + $0x68] sm:$0xff]
        %v485 = vld [vmem:[%s324 + $0x70] sm:$0xff]
        %v486 = vld [vmem:[%s324 + $0x78] sm:$0xff]
        %v487 = vld [vmem:[%s324 + $0x80] sm:$0xff]
        %v488 = vld [vmem:[%s324 + $0x88] sm:$0xff]
        %v489 = vld [vmem:[%s324 + $0x90] sm:$0xff]
        %v490 = vld [vmem:[%s324 + $0x98] sm:$0xff]
        %v491 = vld [vmem:[%s324 + $0xa0] sm:$0xff]
        %v492 = vld [vmem:[%s324 + $0xa8] sm:$0xff]
        %v493 = vld [vmem:[%s324 + $0xb0] sm:$0xff]
        %v494 = vld [vmem:[%s324 + $0xb8] sm:$0xff]
        %v495 = vld [vmem:[%s324 + $0xc0] sm:$0xff]
        %v496 = vld [vmem:[%s324 + $0xc8] sm:$0xff]
        %v497 = vld [vmem:[%s324 + $0xd0] sm:$0xff]
        %v498 = vld [vmem:[%s324 + $0xd8] sm:$0xff]
        %v499 = vld [vmem:[%s324 + $0xe0] sm:$0xff]
        %v500 = vld [vmem:[%s324 + $0xe8] sm:$0xff]
        %v501 = vld [vmem:[%s324 + $0xf0] sm:$0xff]
        %v502 = vld [vmem:[%s324 + $0xf8] sm:$0xff]
        %504 = vset.pattern.permute.xlu0 0
        %505 = vperm.xlu0 %504, %v471
        %v506 = vpop.permute.xlu0 %505
        %509 = vset.pattern.permute.xlu0 0
        %510 = vperm.xlu0 %509, %v472
        %v511 = vpop.permute.xlu0 %510
        %514 = vset.pattern.permute.xlu0 0
        %515 = vperm.xlu0 %514, %v473
        %v516 = vpop.permute.xlu0 %515
        %519 = vset.pattern.permute.xlu0 0
        %520 = vperm.xlu0 %519, %v474
        %v521 = vpop.permute.xlu0 %520
        %524 = vset.pattern.permute.xlu0 0
        %525 = vperm.xlu0 %524, %v475
        %v526 = vpop.permute.xlu0 %525
        %529 = vset.pattern.permute.xlu0 0
        %530 = vperm.xlu0 %529, %v476
        %v531 = vpop.permute.xlu0 %530
        %534 = vset.pattern.permute.xlu0 0
        %535 = vperm.xlu0 %534, %v477
        %v536 = vpop.permute.xlu0 %535
        %539 = vset.pattern.permute.xlu0 0
        %540 = vperm.xlu0 %539, %v478
        %v541 = vpop.permute.xlu0 %540
        %544 = vset.pattern.permute.xlu0 0
        %545 = vperm.xlu0 %544, %v479
        %v546 = vpop.permute.xlu0 %545
        %549 = vset.pattern.permute.xlu0 0
        %550 = vperm.xlu0 %549, %v480
        %v551 = vpop.permute.xlu0 %550
        %554 = vset.pattern.permute.xlu0 0
        %555 = vperm.xlu0 %554, %v481
        %v556 = vpop.permute.xlu0 %555
        %559 = vset.pattern.permute.xlu0 0
        %560 = vperm.xlu0 %559, %v482
        %v561 = vpop.permute.xlu0 %560
        %564 = vset.pattern.permute.xlu0 0
        %565 = vperm.xlu0 %564, %v483
        %v566 = vpop.permute.xlu0 %565
        %569 = vset.pattern.permute.xlu0 0
        %570 = vperm.xlu0 %569, %v484
        %v571 = vpop.permute.xlu0 %570
        %574 = vset.pattern.permute.xlu0 0
        %575 = vperm.xlu0 %574, %v485
        %v576 = vpop.permute.xlu0 %575
        %579 = vset.pattern.permute.xlu0 0
        %580 = vperm.xlu0 %579, %v486
        %v581 = vpop.permute.xlu0 %580
        %584 = vset.pattern.permute.xlu0 0
        %585 = vperm.xlu0 %584, %v487
        %v586 = vpop.permute.xlu0 %585
        %589 = vset.pattern.permute.xlu0 0
        %590 = vperm.xlu0 %589, %v488
        %v591 = vpop.permute.xlu0 %590
        %594 = vset.pattern.permute.xlu0 0
        %595 = vperm.xlu0 %594, %v489
        %v596 = vpop.permute.xlu0 %595
        %599 = vset.pattern.permute.xlu0 0
        %600 = vperm.xlu0 %599, %v490
        %v601 = vpop.permute.xlu0 %600
        %604 = vset.pattern.permute.xlu0 0
        %605 = vperm.xlu0 %604, %v491
        %v606 = vpop.permute.xlu0 %605
        %609 = vset.pattern.permute.xlu0 0
        %610 = vperm.xlu0 %609, %v492
        %v611 = vpop.permute.xlu0 %610
        %614 = vset.pattern.permute.xlu0 0
        %615 = vperm.xlu0 %614, %v493
        %v616 = vpop.permute.xlu0 %615
        %619 = vset.pattern.permute.xlu0 0
        %620 = vperm.xlu0 %619, %v494
        %v621 = vpop.permute.xlu0 %620
        %624 = vset.pattern.permute.xlu0 0
        %625 = vperm.xlu0 %624, %v495
        %v626 = vpop.permute.xlu0 %625
        %629 = vset.pattern.permute.xlu0 0
        %630 = vperm.xlu0 %629, %v496
        %v631 = vpop.permute.xlu0 %630
        %634 = vset.pattern.permute.xlu0 0
        %635 = vperm.xlu0 %634, %v497
        %v636 = vpop.permute.xlu0 %635
        %639 = vset.pattern.permute.xlu0 0
        %640 = vperm.xlu0 %639, %v498
        %v641 = vpop.permute.xlu0 %640
        %644 = vset.pattern.permute.xlu0 0
        %645 = vperm.xlu0 %644, %v499
        %v646 = vpop.permute.xlu0 %645
        %649 = vset.pattern.permute.xlu0 0
        %650 = vperm.xlu0 %649, %v500
        %v651 = vpop.permute.xlu0 %650
        %654 = vset.pattern.permute.xlu0 0
        %655 = vperm.xlu0 %654, %v501
        %v656 = vpop.permute.xlu0 %655
        %659 = vset.pattern.permute.xlu0 0
        %660 = vperm.xlu0 %659, %v502
        %v661 = vpop.permute.xlu0 %660
        %v664 = vlaneseq
        %v665 = vshrl.u32 %v664, 7
        %v666 = vsub.s32 0, %v665
        %v667 = vrot.slane %v470, %v666
        %v668 = vlaneseq
        %v669 = vshrl.u32 %v668, 7
        %v670 = vsub.s32 2, %v669
        %v671 = vrot.slane %v470, %v670
        %v674 = vlaneseq
        %v675 = vshrl.u32 %v674, 7
        %v676 = vsub.s32 0, %v675
        %v677 = vrot.slane %v667, %v676
        %v678 = vlaneseq
        %v679 = vshrl.u32 %v678, 7
        %v680 = vsub.s32 0, %v679
        %v681 = vrot.slane %v671, %v680
        %v682 = vadd.f32 %v506, %v677
        %v683 = vadd.f32 %v506, %v681
        %v684 = vadd.f32 %v511, %v677
        %v685 = vadd.f32 %v511, %v681
        %v686 = vadd.f32 %v516, %v677
        %v687 = vadd.f32 %v516, %v681
        %v688 = vadd.f32 %v521, %v677
        %v689 = vadd.f32 %v521, %v681
        %v690 = vadd.f32 %v526, %v677
        %v691 = vadd.f32 %v526, %v681
        %v692 = vadd.f32 %v531, %v677
        %v693 = vadd.f32 %v531, %v681
        %v694 = vadd.f32 %v536, %v677
        %v695 = vadd.f32 %v536, %v681
        %v696 = vadd.f32 %v541, %v677
        %v697 = vadd.f32 %v541, %v681
        %v698 = vadd.f32 %v546, %v677
        %v699 = vadd.f32 %v546, %v681
        %v700 = vadd.f32 %v551, %v677
        %v701 = vadd.f32 %v551, %v681
        %v702 = vadd.f32 %v556, %v677
        %v703 = vadd.f32 %v556, %v681
        %v704 = vadd.f32 %v561, %v677
        %v705 = vadd.f32 %v561, %v681
        %v706 = vadd.f32 %v566, %v677
        %v707 = vadd.f32 %v566, %v681
        %v708 = vadd.f32 %v571, %v677
        %v709 = vadd.f32 %v571, %v681
        %v710 = vadd.f32 %v576, %v677
        %v711 = vadd.f32 %v576, %v681
        %v712 = vadd.f32 %v581, %v677
        %v713 = vadd.f32 %v581, %v681
        %v714 = vadd.f32 %v586, %v677
        %v715 = vadd.f32 %v586, %v681
        %v716 = vadd.f32 %v591, %v677
        %v717 = vadd.f32 %v591, %v681
        %v718 = vadd.f32 %v596, %v677
        %v719 = vadd.f32 %v596, %v681
        %v720 = vadd.f32 %v601, %v677
        %v721 = vadd.f32 %v601, %v681
        %v722 = vadd.f32 %v606, %v677
        %v723 = vadd.f32 %v606, %v681
        %v724 = vadd.f32 %v611, %v677
        %v725 = vadd.f32 %v611, %v681
        %v726 = vadd.f32 %v616, %v677
        %v727 = vadd.f32 %v616, %v681
        %v728 = vadd.f32 %v621, %v677
        %v729 = vadd.f32 %v621, %v681
        %v730 = vadd.f32 %v626, %v677
        %v731 = vadd.f32 %v626, %v681
        %v732 = vadd.f32 %v631, %v677
        %v733 = vadd.f32 %v631, %v681
        %v734 = vadd.f32 %v636, %v677
        %v735 = vadd.f32 %v636, %v681
        %v736 = vadd.f32 %v641, %v677
        %v737 = vadd.f32 %v641, %v681
        %v738 = vadd.f32 %v646, %v677
        %v739 = vadd.f32 %v646, %v681
        %v740 = vadd.f32 %v651, %v677
        %v741 = vadd.f32 %v651, %v681
        %v742 = vadd.f32 %v656, %v677
        %v743 = vadd.f32 %v656, %v681
        %v744 = vadd.f32 %v661, %v677
        %v745 = vadd.f32 %v661, %v681
        %vm746 = vcmp.gt.f32.partialorder %v682, 0.0
        %vm747 = vcmp.gt.f32.partialorder %v683, 0.0
        %vm748 = vcmp.gt.f32.partialorder %v684, 0.0
        %vm749 = vcmp.gt.f32.partialorder %v685, 0.0
        %vm750 = vcmp.gt.f32.partialorder %v686, 0.0
        %vm751 = vcmp.gt.f32.partialorder %v687, 0.0
        %vm752 = vcmp.gt.f32.partialorder %v688, 0.0
        %vm753 = vcmp.gt.f32.partialorder %v689, 0.0
        %vm754 = vcmp.gt.f32.partialorder %v690, 0.0
        %vm755 = vcmp.gt.f32.partialorder %v691, 0.0
        %vm756 = vcmp.gt.f32.partialorder %v692, 0.0
        %vm757 = vcmp.gt.f32.partialorder %v693, 0.0
        %vm758 = vcmp.gt.f32.partialorder %v694, 0.0
        %vm759 = vcmp.gt.f32.partialorder %v695, 0.0
        %vm760 = vcmp.gt.f32.partialorder %v696, 0.0
        %vm761 = vcmp.gt.f32.partialorder %v697, 0.0
        %vm762 = vcmp.gt.f32.partialorder %v698, 0.0
        %vm763 = vcmp.gt.f32.partialorder %v699, 0.0
        %vm764 = vcmp.gt.f32.partialorder %v700, 0.0
        %vm765 = vcmp.gt.f32.partialorder %v701, 0.0
        %vm766 = vcmp.gt.f32.partialorder %v702, 0.0
        %vm767 = vcmp.gt.f32.partialorder %v703, 0.0
        %vm768 = vcmp.gt.f32.partialorder %v704, 0.0
        %vm769 = vcmp.gt.f32.partialorder %v705, 0.0
        %vm770 = vcmp.gt.f32.partialorder %v706, 0.0
        %vm771 = vcmp.gt.f32.partialorder %v707, 0.0
        %vm772 = vcmp.gt.f32.partialorder %v708, 0.0
        %vm773 = vcmp.gt.f32.partialorder %v709, 0.0
        %vm774 = vcmp.gt.f32.partialorder %v710, 0.0
        %vm775 = vcmp.gt.f32.partialorder %v711, 0.0
        %vm776 = vcmp.gt.f32.partialorder %v712, 0.0
        %vm777 = vcmp.gt.f32.partialorder %v713, 0.0
        %vm778 = vcmp.gt.f32.partialorder %v714, 0.0
        %vm779 = vcmp.gt.f32.partialorder %v715, 0.0
        %vm780 = vcmp.gt.f32.partialorder %v716, 0.0
        %vm781 = vcmp.gt.f32.partialorder %v717, 0.0
        %vm782 = vcmp.gt.f32.partialorder %v718, 0.0
        %vm783 = vcmp.gt.f32.partialorder %v719, 0.0
        %vm784 = vcmp.gt.f32.partialorder %v720, 0.0
        %vm785 = vcmp.gt.f32.partialorder %v721, 0.0
        %vm786 = vcmp.gt.f32.partialorder %v722, 0.0
        %vm787 = vcmp.gt.f32.partialorder %v723, 0.0
        %vm788 = vcmp.gt.f32.partialorder %v724, 0.0
        %vm789 = vcmp.gt.f32.partialorder %v725, 0.0
        %vm790 = vcmp.gt.f32.partialorder %v726, 0.0
        %vm791 = vcmp.gt.f32.partialorder %v727, 0.0
        %vm792 = vcmp.gt.f32.partialorder %v728, 0.0
        %vm793 = vcmp.gt.f32.partialorder %v729, 0.0
        %vm794 = vcmp.gt.f32.partialorder %v730, 0.0
        %vm795 = vcmp.gt.f32.partialorder %v731, 0.0
        %vm796 = vcmp.gt.f32.partialorder %v732, 0.0
        %vm797 = vcmp.gt.f32.partialorder %v733, 0.0
        %vm798 = vcmp.gt.f32.partialorder %v734, 0.0
        %vm799 = vcmp.gt.f32.partialorder %v735, 0.0
        %vm800 = vcmp.gt.f32.partialorder %v736, 0.0
        %vm801 = vcmp.gt.f32.partialorder %v737, 0.0
        %vm802 = vcmp.gt.f32.partialorder %v738, 0.0
        %vm803 = vcmp.gt.f32.partialorder %v739, 0.0
        %vm804 = vcmp.gt.f32.partialorder %v740, 0.0
        %vm805 = vcmp.gt.f32.partialorder %v741, 0.0
        %vm806 = vcmp.gt.f32.partialorder %v742, 0.0
        %vm807 = vcmp.gt.f32.partialorder %v743, 0.0
        %vm808 = vcmp.gt.f32.partialorder %v744, 0.0
        %vm809 = vcmp.gt.f32.partialorder %v745, 0.0
        %v810 = vmul.f32 %v682, 0.2
        %v811 = vmul.f32 %v683, 0.2
        %v812 = vmul.f32 %v684, 0.2
        %v813 = vmul.f32 %v685, 0.2
        %v814 = vmul.f32 %v686, 0.2
        %v815 = vmul.f32 %v687, 0.2
        %v816 = vmul.f32 %v688, 0.2
        %v817 = vmul.f32 %v689, 0.2
        %v818 = vmul.f32 %v690, 0.2
        %v819 = vmul.f32 %v691, 0.2
        %v820 = vmul.f32 %v692, 0.2
        %v821 = vmul.f32 %v693, 0.2
        %v822 = vmul.f32 %v694, 0.2
        %v823 = vmul.f32 %v695, 0.2
        %v824 = vmul.f32 %v696, 0.2
        %v825 = vmul.f32 %v697, 0.2
        %v826 = vmul.f32 %v698, 0.2
        %v827 = vmul.f32 %v699, 0.2
        %v828 = vmul.f32 %v700, 0.2
        %v829 = vmul.f32 %v701, 0.2
        %v830 = vmul.f32 %v702, 0.2
        %v831 = vmul.f32 %v703, 0.2
        %v832 = vmul.f32 %v704, 0.2
        %v833 = vmul.f32 %v705, 0.2
        %v834 = vmul.f32 %v706, 0.2
        %v835 = vmul.f32 %v707, 0.2
        %v836 = vmul.f32 %v708, 0.2
        %v837 = vmul.f32 %v709, 0.2
        %v838 = vmul.f32 %v710, 0.2
        %v839 = vmul.f32 %v711, 0.2
        %v840 = vmul.f32 %v712, 0.2
        %v841 = vmul.f32 %v713, 0.2
        %v842 = vmul.f32 %v714, 0.2
        %v843 = vmul.f32 %v715, 0.2
        %v844 = vmul.f32 %v716, 0.2
        %v845 = vmul.f32 %v717, 0.2
        %v846 = vmul.f32 %v718, 0.2
        %v847 = vmul.f32 %v719, 0.2
        %v848 = vmul.f32 %v720, 0.2
        %v849 = vmul.f32 %v721, 0.2
        %v850 = vmul.f32 %v722, 0.2
        %v851 = vmul.f32 %v723, 0.2
        %v852 = vmul.f32 %v724, 0.2
        %v853 = vmul.f32 %v725, 0.2
        %v854 = vmul.f32 %v726, 0.2
        %v855 = vmul.f32 %v727, 0.2
        %v856 = vmul.f32 %v728, 0.2
        %v857 = vmul.f32 %v729, 0.2
        %v858 = vmul.f32 %v730, 0.2
        %v859 = vmul.f32 %v731, 0.2
        %v860 = vmul.f32 %v732, 0.2
        %v861 = vmul.f32 %v733, 0.2
        %v862 = vmul.f32 %v734, 0.2
        %v863 = vmul.f32 %v735, 0.2
        %v864 = vmul.f32 %v736, 0.2
        %v865 = vmul.f32 %v737, 0.2
        %v866 = vmul.f32 %v738, 0.2
        %v867 = vmul.f32 %v739, 0.2
        %v868 = vmul.f32 %v740, 0.2
        %v869 = vmul.f32 %v741, 0.2
        %v870 = vmul.f32 %v742, 0.2
        %v871 = vmul.f32 %v743, 0.2
        %v872 = vmul.f32 %v744, 0.2
        %v873 = vmul.f32 %v745, 0.2
        %v874 = vsel %vm746, %v682, %v810
        %v875 = vsel %vm747, %v683, %v811
        %v876 = vsel %vm748, %v684, %v812
        %v877 = vsel %vm749, %v685, %v813
        %v878 = vsel %vm750, %v686, %v814
        %v879 = vsel %vm751, %v687, %v815
        %v880 = vsel %vm752, %v688, %v816
        %v881 = vsel %vm753, %v689, %v817
        %v882 = vsel %vm754, %v690, %v818
        %v883 = vsel %vm755, %v691, %v819
        %v884 = vsel %vm756, %v692, %v820
        %v885 = vsel %vm757, %v693, %v821
        %v886 = vsel %vm758, %v694, %v822
        %v887 = vsel %vm759, %v695, %v823
        %v888 = vsel %vm760, %v696, %v824
        %v889 = vsel %vm761, %v697, %v825
        %v890 = vsel %vm762, %v698, %v826
        %v891 = vsel %vm763, %v699, %v827
        %v892 = vsel %vm764, %v700, %v828
        %v893 = vsel %vm765, %v701, %v829
        %v894 = vsel %vm766, %v702, %v830
        %v895 = vsel %vm767, %v703, %v831
        %v896 = vsel %vm768, %v704, %v832
        %v897 = vsel %vm769, %v705, %v833
        %v898 = vsel %vm770, %v706, %v834
        %v899 = vsel %vm771, %v707, %v835
        %v900 = vsel %vm772, %v708, %v836
        %v901 = vsel %vm773, %v709, %v837
        %v902 = vsel %vm774, %v710, %v838
        %v903 = vsel %vm775, %v711, %v839
        %v904 = vsel %vm776, %v712, %v840
        %v905 = vsel %vm777, %v713, %v841
        %v906 = vsel %vm778, %v714, %v842
        %v907 = vsel %vm779, %v715, %v843
        %v908 = vsel %vm780, %v716, %v844
        %v909 = vsel %vm781, %v717, %v845
        %v910 = vsel %vm782, %v718, %v846
        %v911 = vsel %vm783, %v719, %v847
        %v912 = vsel %vm784, %v720, %v848
        %v913 = vsel %vm785, %v721, %v849
        %v914 = vsel %vm786, %v722, %v850
        %v915 = vsel %vm787, %v723, %v851
        %v916 = vsel %vm788, %v724, %v852
        %v917 = vsel %vm789, %v725, %v853
        %v918 = vsel %vm790, %v726, %v854
        %v919 = vsel %vm791, %v727, %v855
        %v920 = vsel %vm792, %v728, %v856
        %v921 = vsel %vm793, %v729, %v857
        %v922 = vsel %vm794, %v730, %v858
        %v923 = vsel %vm795, %v731, %v859
        %v924 = vsel %vm796, %v732, %v860
        %v925 = vsel %vm797, %v733, %v861
        %v926 = vsel %vm798, %v734, %v862
        %v927 = vsel %vm799, %v735, %v863
        %v928 = vsel %vm800, %v736, %v864
        %v929 = vsel %vm801, %v737, %v865
        %v930 = vsel %vm802, %v738, %v866
        %v931 = vsel %vm803, %v739, %v867
        %v932 = vsel %vm804, %v740, %v868
        %v933 = vsel %vm805, %v741, %v869
        %v934 = vsel %vm806, %v742, %v870
        %v935 = vsel %vm807, %v743, %v871
        %v936 = vsel %vm808, %v744, %v872
        %v937 = vsel %vm809, %v745, %v873
        %v938 = vmul.f32 %v874, 1.442695
        %v939 = vpow.pop %v938
        %v940 = vmul.f32 %v875, 1.442695
        %v941 = vpow.pop %v940
        %v942 = vmul.f32 %v876, 1.442695
        %v943 = vpow.pop %v942
        %v944 = vmul.f32 %v877, 1.442695
        %v945 = vpow.pop %v944
        %v946 = vmul.f32 %v878, 1.442695
        %v947 = vpow.pop %v946
        %v948 = vmul.f32 %v879, 1.442695
        %v949 = vpow.pop %v948
        %v950 = vmul.f32 %v880, 1.442695
        %v951 = vpow.pop %v950
        %v952 = vmul.f32 %v881, 1.442695
        %v953 = vpow.pop %v952
        %v954 = vmul.f32 %v882, 1.442695
        %v955 = vpow.pop %v954
        %v956 = vmul.f32 %v883, 1.442695
        %v957 = vpow.pop %v956
        %v958 = vmul.f32 %v884, 1.442695
        %v959 = vpow.pop %v958
        %v960 = vmul.f32 %v885, 1.442695
        %v961 = vpow.pop %v960
        %v962 = vmul.f32 %v886, 1.442695
        %v963 = vpow.pop %v962
        %v964 = vmul.f32 %v887, 1.442695
        %v965 = vpow.pop %v964
        %v966 = vmul.f32 %v888, 1.442695
        %v967 = vpow.pop %v966
        %v968 = vmul.f32 %v889, 1.442695
        %v969 = vpow.pop %v968
        %v970 = vmul.f32 %v890, 1.442695
        %v971 = vpow.pop %v970
        %v972 = vmul.f32 %v891, 1.442695
        %v973 = vpow.pop %v972
        %v974 = vmul.f32 %v892, 1.442695
        %v975 = vpow.pop %v974
        %v976 = vmul.f32 %v893, 1.442695
        %v977 = vpow.pop %v976
        %v978 = vmul.f32 %v894, 1.442695
        %v979 = vpow.pop %v978
        %v980 = vmul.f32 %v895, 1.442695
        %v981 = vpow.pop %v980
        %v982 = vmul.f32 %v896, 1.442695
        %v983 = vpow.pop %v982
        %v984 = vmul.f32 %v897, 1.442695
        %v985 = vpow.pop %v984
        %v986 = vmul.f32 %v898, 1.442695
        %v987 = vpow.pop %v986
        %v988 = vmul.f32 %v899, 1.442695
        %v989 = vpow.pop %v988
        %v990 = vmul.f32 %v900, 1.442695
        %v991 = vpow.pop %v990
        %v992 = vmul.f32 %v901, 1.442695
        %v993 = vpow.pop %v992
        %v994 = vmul.f32 %v902, 1.442695
        %v995 = vpow.pop %v994
        %v996 = vmul.f32 %v903, 1.442695
        %v997 = vpow.pop %v996
        %v998 = vmul.f32 %v904, 1.442695
        %v999 = vpow.pop %v998
        %v1000 = vmul.f32 %v905, 1.442695
        %v1001 = vpow.pop %v1000
        %v1002 = vmul.f32 %v906, 1.442695
        %v1003 = vpow.pop %v1002
        %v1004 = vmul.f32 %v907, 1.442695
        %v1005 = vpow.pop %v1004
        %v1006 = vmul.f32 %v908, 1.442695
        %v1007 = vpow.pop %v1006
        %v1008 = vmul.f32 %v909, 1.442695
        %v1009 = vpow.pop %v1008
        %v1010 = vmul.f32 %v910, 1.442695
        %v1011 = vpow.pop %v1010
        %v1012 = vmul.f32 %v911, 1.442695
        %v1013 = vpow.pop %v1012
        %v1014 = vmul.f32 %v912, 1.442695
        %v1015 = vpow.pop %v1014
        %v1016 = vmul.f32 %v913, 1.442695
        %v1017 = vpow.pop %v1016
        %v1018 = vmul.f32 %v914, 1.442695
        %v1019 = vpow.pop %v1018
        %v1020 = vmul.f32 %v915, 1.442695
        %v1021 = vpow.pop %v1020
        %v1022 = vmul.f32 %v916, 1.442695
        %v1023 = vpow.pop %v1022
        %v1024 = vmul.f32 %v917, 1.442695
        %v1025 = vpow.pop %v1024
        %v1026 = vmul.f32 %v918, 1.442695
        %v1027 = vpow.pop %v1026
        %v1028 = vmul.f32 %v919, 1.442695
        %v1029 = vpow.pop %v1028
        %v1030 = vmul.f32 %v920, 1.442695
        %v1031 = vpow.pop %v1030
        %v1032 = vmul.f32 %v921, 1.442695
        %v1033 = vpow.pop %v1032
        %v1034 = vmul.f32 %v922, 1.442695
        %v1035 = vpow.pop %v1034
        %v1036 = vmul.f32 %v923, 1.442695
        %v1037 = vpow.pop %v1036
        %v1038 = vmul.f32 %v924, 1.442695
        %v1039 = vpow.pop %v1038
        %v1040 = vmul.f32 %v925, 1.442695
        %v1041 = vpow.pop %v1040
        %v1042 = vmul.f32 %v926, 1.442695
        %v1043 = vpow.pop %v1042
        %v1044 = vmul.f32 %v927, 1.442695
        %v1045 = vpow.pop %v1044
        %v1046 = vmul.f32 %v928, 1.442695
        %v1047 = vpow.pop %v1046
        %v1048 = vmul.f32 %v929, 1.442695
        %v1049 = vpow.pop %v1048
        %v1050 = vmul.f32 %v930, 1.442695
        %v1051 = vpow.pop %v1050
        %v1052 = vmul.f32 %v931, 1.442695
        %v1053 = vpow.pop %v1052
        %v1054 = vmul.f32 %v932, 1.442695
        %v1055 = vpow.pop %v1054
        %v1056 = vmul.f32 %v933, 1.442695
        %v1057 = vpow.pop %v1056
        %v1058 = vmul.f32 %v934, 1.442695
        %v1059 = vpow.pop %v1058
        %v1060 = vmul.f32 %v935, 1.442695
        %v1061 = vpow.pop %v1060
        %v1062 = vmul.f32 %v936, 1.442695
        %v1063 = vpow.pop %v1062
        %v1064 = vmul.f32 %v937, 1.442695
        %v1065 = vpow.pop %v1064
        %v1066 = vsel %vm422, 16843009, 0
        %v1067 = vsel %vm423, 16843009, 0
        %v1068 = vsel %vm424, 16843009, 0
        %v1069 = vsel %vm425, 16843009, 0
        %v1070 = vsel %vm426, 16843009, 0
        %v1071 = vsel %vm427, 16843009, 0
        %v1072 = vsel %vm428, 16843009, 0
        %v1073 = vsel %vm429, 16843009, 0
        %v1074 = vsel %vm430, 16843009, 0
        %v1075 = vsel %vm431, 16843009, 0
        %v1076 = vsel %vm432, 16843009, 0
        %v1077 = vsel %vm433, 16843009, 0
        %v1078 = vsel %vm434, 16843009, 0
        %v1079 = vsel %vm435, 16843009, 0
        %v1080 = vsel %vm436, 16843009, 0
        %v1081 = vsel %vm437, 16843009, 0
        %v1082 = vunpack.c.0.s8 %v1066
        %v1083 = vunpack.c.0.s8 %v1067
        %v1084 = vunpack.c.1.s8 %v1066
        %v1085 = vunpack.c.1.s8 %v1067
        %v1086 = vunpack.c.2.s8 %v1066
        %v1087 = vunpack.c.2.s8 %v1067
        %v1088 = vunpack.c.3.s8 %v1066
        %v1089 = vunpack.c.3.s8 %v1067
        %v1090 = vunpack.c.0.s8 %v1068
        %v1091 = vunpack.c.0.s8 %v1069
        %v1092 = vunpack.c.1.s8 %v1068
        %v1093 = vunpack.c.1.s8 %v1069
        %v1094 = vunpack.c.2.s8 %v1068
        %v1095 = vunpack.c.2.s8 %v1069
        %v1096 = vunpack.c.3.s8 %v1068
        %v1097 = vunpack.c.3.s8 %v1069
        %v1098 = vunpack.c.0.s8 %v1070
        %v1099 = vunpack.c.0.s8 %v1071
        %v1100 = vunpack.c.1.s8 %v1070
        %v1101 = vunpack.c.1.s8 %v1071
        %v1102 = vunpack.c.2.s8 %v1070
        %v1103 = vunpack.c.2.s8 %v1071
        %v1104 = vunpack.c.3.s8 %v1070
        %v1105 = vunpack.c.3.s8 %v1071
        %v1106 = vunpack.c.0.s8 %v1072
        %v1107 = vunpack.c.0.s8 %v1073
        %v1108 = vunpack.c.1.s8 %v1072
        %v1109 = vunpack.c.1.s8 %v1073
        %v1110 = vunpack.c.2.s8 %v1072
        %v1111 = vunpack.c.2.s8 %v1073
        %v1112 = vunpack.c.3.s8 %v1072
        %v1113 = vunpack.c.3.s8 %v1073
        %v1114 = vunpack.c.0.s8 %v1074
        %v1115 = vunpack.c.0.s8 %v1075
        %v1116 = vunpack.c.1.s8 %v1074
        %v1117 = vunpack.c.1.s8 %v1075
        %v1118 = vunpack.c.2.s8 %v1074
        %v1119 = vunpack.c.2.s8 %v1075
        %v1120 = vunpack.c.3.s8 %v1074
        %v1121 = vunpack.c.3.s8 %v1075
        %v1122 = vunpack.c.0.s8 %v1076
        %v1123 = vunpack.c.0.s8 %v1077
        %v1124 = vunpack.c.1.s8 %v1076
        %v1125 = vunpack.c.1.s8 %v1077
        %v1126 = vunpack.c.2.s8 %v1076
        %v1127 = vunpack.c.2.s8 %v1077
        %v1128 = vunpack.c.3.s8 %v1076
        %v1129 = vunpack.c.3.s8 %v1077
        %v1130 = vunpack.c.0.s8 %v1078
        %v1131 = vunpack.c.0.s8 %v1079
        %v1132 = vunpack.c.1.s8 %v1078
        %v1133 = vunpack.c.1.s8 %v1079
        %v1134 = vunpack.c.2.s8 %v1078
        %v1135 = vunpack.c.2.s8 %v1079
        %v1136 = vunpack.c.3.s8 %v1078
        %v1137 = vunpack.c.3.s8 %v1079
        %v1138 = vunpack.c.0.s8 %v1080
        %v1139 = vunpack.c.0.s8 %v1081
        %v1140 = vunpack.c.1.s8 %v1080
        %v1141 = vunpack.c.1.s8 %v1081
        %v1142 = vunpack.c.2.s8 %v1080
        %v1143 = vunpack.c.2.s8 %v1081
        %v1144 = vunpack.c.3.s8 %v1080
        %v1145 = vunpack.c.3.s8 %v1081
        %v1146 = vpack.c.b16 %v1083, %v1082
        %v1147 = vpack.c.b8 %v1146, %v1146
        %v1148 = vpack.c.b16 %v1085, %v1084
        %v1149 = vpack.c.b8 %v1148, %v1148
        %v1150 = vpack.c.b16 %v1087, %v1086
        %v1151 = vpack.c.b8 %v1150, %v1150
        %v1152 = vpack.c.b16 %v1089, %v1088
        %v1153 = vpack.c.b8 %v1152, %v1152
        %v1154 = vpack.c.b16 %v1091, %v1090
        %v1155 = vpack.c.b8 %v1154, %v1154
        %v1156 = vpack.c.b16 %v1093, %v1092
        %v1157 = vpack.c.b8 %v1156, %v1156
        %v1158 = vpack.c.b16 %v1095, %v1094
        %v1159 = vpack.c.b8 %v1158, %v1158
        %v1160 = vpack.c.b16 %v1097, %v1096
        %v1161 = vpack.c.b8 %v1160, %v1160
        %v1162 = vpack.c.b16 %v1099, %v1098
        %v1163 = vpack.c.b8 %v1162, %v1162
        %v1164 = vpack.c.b16 %v1101, %v1100
        %v1165 = vpack.c.b8 %v1164, %v1164
        %v1166 = vpack.c.b16 %v1103, %v1102
        %v1167 = vpack.c.b8 %v1166, %v1166
        %v1168 = vpack.c.b16 %v1105, %v1104
        %v1169 = vpack.c.b8 %v1168, %v1168
        %v1170 = vpack.c.b16 %v1107, %v1106
        %v1171 = vpack.c.b8 %v1170, %v1170
        %v1172 = vpack.c.b16 %v1109, %v1108
        %v1173 = vpack.c.b8 %v1172, %v1172
        %v1174 = vpack.c.b16 %v1111, %v1110
        %v1175 = vpack.c.b8 %v1174, %v1174
        %v1176 = vpack.c.b16 %v1113, %v1112
        %v1177 = vpack.c.b8 %v1176, %v1176
        %v1178 = vpack.c.b16 %v1115, %v1114
        %v1179 = vpack.c.b8 %v1178, %v1178
        %v1180 = vpack.c.b16 %v1117, %v1116
        %v1181 = vpack.c.b8 %v1180, %v1180
        %v1182 = vpack.c.b16 %v1119, %v1118
        %v1183 = vpack.c.b8 %v1182, %v1182
        %v1184 = vpack.c.b16 %v1121, %v1120
        %v1185 = vpack.c.b8 %v1184, %v1184
        %v1186 = vpack.c.b16 %v1123, %v1122
        %v1187 = vpack.c.b8 %v1186, %v1186
        %v1188 = vpack.c.b16 %v1125, %v1124
        %v1189 = vpack.c.b8 %v1188, %v1188
        %v1190 = vpack.c.b16 %v1127, %v1126
        %v1191 = vpack.c.b8 %v1190, %v1190
        %v1192 = vpack.c.b16 %v1129, %v1128
        %v1193 = vpack.c.b8 %v1192, %v1192
        %v1194 = vpack.c.b16 %v1131, %v1130
        %v1195 = vpack.c.b8 %v1194, %v1194
        %v1196 = vpack.c.b16 %v1133, %v1132
        %v1197 = vpack.c.b8 %v1196, %v1196
        %v1198 = vpack.c.b16 %v1135, %v1134
        %v1199 = vpack.c.b8 %v1198, %v1198
        %v1200 = vpack.c.b16 %v1137, %v1136
        %v1201 = vpack.c.b8 %v1200, %v1200
        %v1202 = vpack.c.b16 %v1139, %v1138
        %v1203 = vpack.c.b8 %v1202, %v1202
        %v1204 = vpack.c.b16 %v1141, %v1140
        %v1205 = vpack.c.b8 %v1204, %v1204
        %v1206 = vpack.c.b16 %v1143, %v1142
        %v1207 = vpack.c.b8 %v1206, %v1206
        %v1208 = vpack.c.b16 %v1145, %v1144
        %v1209 = vpack.c.b8 %v1208, %v1208
        %vm1210 = vnez %v1147
        %vm1211 = vnez %v1149
        %vm1212 = vnez %v1151
        %vm1213 = vnez %v1153
        %vm1214 = vnez %v1155
        %vm1215 = vnez %v1157
        %vm1216 = vnez %v1159
        %vm1217 = vnez %v1161
        %vm1218 = vnez %v1163
        %vm1219 = vnez %v1165
        %vm1220 = vnez %v1167
        %vm1221 = vnez %v1169
        %vm1222 = vnez %v1171
        %vm1223 = vnez %v1173
        %vm1224 = vnez %v1175
        %vm1225 = vnez %v1177
        %vm1226 = vnez %v1179
        %vm1227 = vnez %v1181
        %vm1228 = vnez %v1183
        %vm1229 = vnez %v1185
        %vm1230 = vnez %v1187
        %vm1231 = vnez %v1189
        %vm1232 = vnez %v1191
        %vm1233 = vnez %v1193
        %vm1234 = vnez %v1195
        %vm1235 = vnez %v1197
        %vm1236 = vnez %v1199
        %vm1237 = vnez %v1201
        %vm1238 = vnez %v1203
        %vm1239 = vnez %v1205
        %vm1240 = vnez %v1207
        %vm1241 = vnez %v1209
        %v1242 = vsel %vm1210, 16843009, 0
        %v1243 = vsel %vm1211, 16843009, 0
        %v1244 = vsel %vm1212, 16843009, 0
        %v1245 = vsel %vm1213, 16843009, 0
        %v1246 = vsel %vm1214, 16843009, 0
        %v1247 = vsel %vm1215, 16843009, 0
        %v1248 = vsel %vm1216, 16843009, 0
        %v1249 = vsel %vm1217, 16843009, 0
        %v1250 = vsel %vm1218, 16843009, 0
        %v1251 = vsel %vm1219, 16843009, 0
        %v1252 = vsel %vm1220, 16843009, 0
        %v1253 = vsel %vm1221, 16843009, 0
        %v1254 = vsel %vm1222, 16843009, 0
        %v1255 = vsel %vm1223, 16843009, 0
        %v1256 = vsel %vm1224, 16843009, 0
        %v1257 = vsel %vm1225, 16843009, 0
        %v1258 = vsel %vm1226, 16843009, 0
        %v1259 = vsel %vm1227, 16843009, 0
        %v1260 = vsel %vm1228, 16843009, 0
        %v1261 = vsel %vm1229, 16843009, 0
        %v1262 = vsel %vm1230, 16843009, 0
        %v1263 = vsel %vm1231, 16843009, 0
        %v1264 = vsel %vm1232, 16843009, 0
        %v1265 = vsel %vm1233, 16843009, 0
        %v1266 = vsel %vm1234, 16843009, 0
        %v1267 = vsel %vm1235, 16843009, 0
        %v1268 = vsel %vm1236, 16843009, 0
        %v1269 = vsel %vm1237, 16843009, 0
        %v1270 = vsel %vm1238, 16843009, 0
        %v1271 = vsel %vm1239, 16843009, 0
        %v1272 = vsel %vm1240, 16843009, 0
        %v1273 = vsel %vm1241, 16843009, 0
        %v1274 = vunpack.c.0.s8 %v1242
        %v1275 = vunpack.c.1.s8 %v1242
        %v1276 = vunpack.c.0.s8 %v1243
        %v1277 = vunpack.c.1.s8 %v1243
        %v1278 = vunpack.c.0.s8 %v1244
        %v1279 = vunpack.c.1.s8 %v1244
        %v1280 = vunpack.c.0.s8 %v1245
        %v1281 = vunpack.c.1.s8 %v1245
        %v1282 = vunpack.c.0.s8 %v1246
        %v1283 = vunpack.c.1.s8 %v1246
        %v1284 = vunpack.c.0.s8 %v1247
        %v1285 = vunpack.c.1.s8 %v1247
        %v1286 = vunpack.c.0.s8 %v1248
        %v1287 = vunpack.c.1.s8 %v1248
        %v1288 = vunpack.c.0.s8 %v1249
        %v1289 = vunpack.c.1.s8 %v1249
        %v1290 = vunpack.c.0.s8 %v1250
        %v1291 = vunpack.c.1.s8 %v1250
        %v1292 = vunpack.c.0.s8 %v1251
        %v1293 = vunpack.c.1.s8 %v1251
        %v1294 = vunpack.c.0.s8 %v1252
        %v1295 = vunpack.c.1.s8 %v1252
        %v1296 = vunpack.c.0.s8 %v1253
        %v1297 = vunpack.c.1.s8 %v1253
        %v1298 = vunpack.c.0.s8 %v1254
        %v1299 = vunpack.c.1.s8 %v1254
        %v1300 = vunpack.c.0.s8 %v1255
        %v1301 = vunpack.c.1.s8 %v1255
        %v1302 = vunpack.c.0.s8 %v1256
        %v1303 = vunpack.c.1.s8 %v1256
        %v1304 = vunpack.c.0.s8 %v1257
        %v1305 = vunpack.c.1.s8 %v1257
        %v1306 = vunpack.c.0.s8 %v1258
        %v1307 = vunpack.c.1.s8 %v1258
        %v1308 = vunpack.c.0.s8 %v1259
        %v1309 = vunpack.c.1.s8 %v1259
        %v1310 = vunpack.c.0.s8 %v1260
        %v1311 = vunpack.c.1.s8 %v1260
        %v1312 = vunpack.c.0.s8 %v1261
        %v1313 = vunpack.c.1.s8 %v1261
        %v1314 = vunpack.c.0.s8 %v1262
        %v1315 = vunpack.c.1.s8 %v1262
        %v1316 = vunpack.c.0.s8 %v1263
        %v1317 = vunpack.c.1.s8 %v1263
        %v1318 = vunpack.c.0.s8 %v1264
        %v1319 = vunpack.c.1.s8 %v1264
        %v1320 = vunpack.c.0.s8 %v1265
        %v1321 = vunpack.c.1.s8 %v1265
        %v1322 = vunpack.c.0.s8 %v1266
        %v1323 = vunpack.c.1.s8 %v1266
        %v1324 = vunpack.c.0.s8 %v1267
        %v1325 = vunpack.c.1.s8 %v1267
        %v1326 = vunpack.c.0.s8 %v1268
        %v1327 = vunpack.c.1.s8 %v1268
        %v1328 = vunpack.c.0.s8 %v1269
        %v1329 = vunpack.c.1.s8 %v1269
        %v1330 = vunpack.c.0.s8 %v1270
        %v1331 = vunpack.c.1.s8 %v1270
        %v1332 = vunpack.c.0.s8 %v1271
        %v1333 = vunpack.c.1.s8 %v1271
        %v1334 = vunpack.c.0.s8 %v1272
        %v1335 = vunpack.c.1.s8 %v1272
        %v1336 = vunpack.c.0.s8 %v1273
        %v1337 = vunpack.c.1.s8 %v1273
        %vm1338 = vcmp.ne.s32.totalorder %v1274, 0
        %vm1339 = vcmp.ne.s32.totalorder %v1275, 0
        %vm1340 = vcmp.ne.s32.totalorder %v1276, 0
        %vm1341 = vcmp.ne.s32.totalorder %v1277, 0
        %vm1342 = vcmp.ne.s32.totalorder %v1278, 0
        %vm1343 = vcmp.ne.s32.totalorder %v1279, 0
        %vm1344 = vcmp.ne.s32.totalorder %v1280, 0
        %vm1345 = vcmp.ne.s32.totalorder %v1281, 0
        %vm1346 = vcmp.ne.s32.totalorder %v1282, 0
        %vm1347 = vcmp.ne.s32.totalorder %v1283, 0
        %vm1348 = vcmp.ne.s32.totalorder %v1284, 0
        %vm1349 = vcmp.ne.s32.totalorder %v1285, 0
        %vm1350 = vcmp.ne.s32.totalorder %v1286, 0
        %vm1351 = vcmp.ne.s32.totalorder %v1287, 0
        %vm1352 = vcmp.ne.s32.totalorder %v1288, 0
        %vm1353 = vcmp.ne.s32.totalorder %v1289, 0
        %vm1354 = vcmp.ne.s32.totalorder %v1290, 0
        %vm1355 = vcmp.ne.s32.totalorder %v1291, 0
        %vm1356 = vcmp.ne.s32.totalorder %v1292, 0
        %vm1357 = vcmp.ne.s32.totalorder %v1293, 0
        %vm1358 = vcmp.ne.s32.totalorder %v1294, 0
        %vm1359 = vcmp.ne.s32.totalorder %v1295, 0
        %vm1360 = vcmp.ne.s32.totalorder %v1296, 0
        %vm1361 = vcmp.ne.s32.totalorder %v1297, 0
        %vm1362 = vcmp.ne.s32.totalorder %v1298, 0
        %vm1363 = vcmp.ne.s32.totalorder %v1299, 0
        %vm1364 = vcmp.ne.s32.totalorder %v1300, 0
        %vm1365 = vcmp.ne.s32.totalorder %v1301, 0
        %vm1366 = vcmp.ne.s32.totalorder %v1302, 0
        %vm1367 = vcmp.ne.s32.totalorder %v1303, 0
        %vm1368 = vcmp.ne.s32.totalorder %v1304, 0
        %vm1369 = vcmp.ne.s32.totalorder %v1305, 0
        %vm1370 = vcmp.ne.s32.totalorder %v1306, 0
        %vm1371 = vcmp.ne.s32.totalorder %v1307, 0
        %vm1372 = vcmp.ne.s32.totalorder %v1308, 0
        %vm1373 = vcmp.ne.s32.totalorder %v1309, 0
        %vm1374 = vcmp.ne.s32.totalorder %v1310, 0
        %vm1375 = vcmp.ne.s32.totalorder %v1311, 0
        %vm1376 = vcmp.ne.s32.totalorder %v1312, 0
        %vm1377 = vcmp.ne.s32.totalorder %v1313, 0
        %vm1378 = vcmp.ne.s32.totalorder %v1314, 0
        %vm1379 = vcmp.ne.s32.totalorder %v1315, 0
        %vm1380 = vcmp.ne.s32.totalorder %v1316, 0
        %vm1381 = vcmp.ne.s32.totalorder %v1317, 0
        %vm1382 = vcmp.ne.s32.totalorder %v1318, 0
        %vm1383 = vcmp.ne.s32.totalorder %v1319, 0
        %vm1384 = vcmp.ne.s32.totalorder %v1320, 0
        %vm1385 = vcmp.ne.s32.totalorder %v1321, 0
        %vm1386 = vcmp.ne.s32.totalorder %v1322, 0
        %vm1387 = vcmp.ne.s32.totalorder %v1323, 0
        %vm1388 = vcmp.ne.s32.totalorder %v1324, 0
        %vm1389 = vcmp.ne.s32.totalorder %v1325, 0
        %vm1390 = vcmp.ne.s32.totalorder %v1326, 0
        %vm1391 = vcmp.ne.s32.totalorder %v1327, 0
        %vm1392 = vcmp.ne.s32.totalorder %v1328, 0
        %vm1393 = vcmp.ne.s32.totalorder %v1329, 0
        %vm1394 = vcmp.ne.s32.totalorder %v1330, 0
        %vm1395 = vcmp.ne.s32.totalorder %v1331, 0
        %vm1396 = vcmp.ne.s32.totalorder %v1332, 0
        %vm1397 = vcmp.ne.s32.totalorder %v1333, 0
        %vm1398 = vcmp.ne.s32.totalorder %v1334, 0
        %vm1399 = vcmp.ne.s32.totalorder %v1335, 0
        %vm1400 = vcmp.ne.s32.totalorder %v1336, 0
        %vm1401 = vcmp.ne.s32.totalorder %v1337, 0
        %v1402 = vsel %vm1338, %v939, 0.0
        %v1403 = vsel %vm1339, %v941, 0.0
        %v1404 = vsel %vm1340, %v943, 0.0
        %v1405 = vsel %vm1341, %v945, 0.0
        %v1406 = vsel %vm1342, %v947, 0.0
        %v1407 = vsel %vm1343, %v949, 0.0
        %v1408 = vsel %vm1344, %v951, 0.0
        %v1409 = vsel %vm1345, %v953, 0.0
        %v1410 = vsel %vm1346, %v955, 0.0
        %v1411 = vsel %vm1347, %v957, 0.0
        %v1412 = vsel %vm1348, %v959, 0.0
        %v1413 = vsel %vm1349, %v961, 0.0
        %v1414 = vsel %vm1350, %v963, 0.0
        %v1415 = vsel %vm1351, %v965, 0.0
        %v1416 = vsel %vm1352, %v967, 0.0
        %v1417 = vsel %vm1353, %v969, 0.0
        %v1418 = vsel %vm1354, %v971, 0.0
        %v1419 = vsel %vm1355, %v973, 0.0
        %v1420 = vsel %vm1356, %v975, 0.0
        %v1421 = vsel %vm1357, %v977, 0.0
        %v1422 = vsel %vm1358, %v979, 0.0
        %v1423 = vsel %vm1359, %v981, 0.0
        %v1424 = vsel %vm1360, %v983, 0.0
        %v1425 = vsel %vm1361, %v985, 0.0
        %v1426 = vsel %vm1362, %v987, 0.0
        %v1427 = vsel %vm1363, %v989, 0.0
        %v1428 = vsel %vm1364, %v991, 0.0
        %v1429 = vsel %vm1365, %v993, 0.0
        %v1430 = vsel %vm1366, %v995, 0.0
        %v1431 = vsel %vm1367, %v997, 0.0
        %v1432 = vsel %vm1368, %v999, 0.0
        %v1433 = vsel %vm1369, %v1001, 0.0
        %v1434 = vsel %vm1370, %v1003, 0.0
        %v1435 = vsel %vm1371, %v1005, 0.0
        %v1436 = vsel %vm1372, %v1007, 0.0
        %v1437 = vsel %vm1373, %v1009, 0.0
        %v1438 = vsel %vm1374, %v1011, 0.0
        %v1439 = vsel %vm1375, %v1013, 0.0
        %v1440 = vsel %vm1376, %v1015, 0.0
        %v1441 = vsel %vm1377, %v1017, 0.0
        %v1442 = vsel %vm1378, %v1019, 0.0
        %v1443 = vsel %vm1379, %v1021, 0.0
        %v1444 = vsel %vm1380, %v1023, 0.0
        %v1445 = vsel %vm1381, %v1025, 0.0
        %v1446 = vsel %vm1382, %v1027, 0.0
        %v1447 = vsel %vm1383, %v1029, 0.0
        %v1448 = vsel %vm1384, %v1031, 0.0
        %v1449 = vsel %vm1385, %v1033, 0.0
        %v1450 = vsel %vm1386, %v1035, 0.0
        %v1451 = vsel %vm1387, %v1037, 0.0
        %v1452 = vsel %vm1388, %v1039, 0.0
        %v1453 = vsel %vm1389, %v1041, 0.0
        %v1454 = vsel %vm1390, %v1043, 0.0
        %v1455 = vsel %vm1391, %v1045, 0.0
        %v1456 = vsel %vm1392, %v1047, 0.0
        %v1457 = vsel %vm1393, %v1049, 0.0
        %v1458 = vsel %vm1394, %v1051, 0.0
        %v1459 = vsel %vm1395, %v1053, 0.0
        %v1460 = vsel %vm1396, %v1055, 0.0
        %v1461 = vsel %vm1397, %v1057, 0.0
        %v1462 = vsel %vm1398, %v1059, 0.0
        %v1463 = vsel %vm1399, %v1061, 0.0
        %v1464 = vsel %vm1400, %v1063, 0.0
        %v1465 = vsel %vm1401, %v1065, 0.0
        %v1466 = vld [vmem:[#allocation3] sm:$0xff]
        %v1467 = vld [vmem:[#allocation3 + $0x8] sm:$0xff]
        %v1468 = vld [vmem:[#allocation3 + $0x10] sm:$0xff]
        %v1469 = vld [vmem:[#allocation3 + $0x18] sm:$0xff]
        %v1470 = vld [vmem:[#allocation3 + $0x20] sm:$0xff]
        %v1471 = vld [vmem:[#allocation3 + $0x28] sm:$0xff]
        %v1472 = vld [vmem:[#allocation3 + $0x30] sm:$0xff]
        %v1473 = vld [vmem:[#allocation3 + $0x38] sm:$0xff]
        %v1474 = vld [vmem:[#allocation3 + $0x40] sm:$0xff]
        %v1475 = vld [vmem:[#allocation3 + $0x48] sm:$0xff]
        %v1476 = vld [vmem:[#allocation3 + $0x50] sm:$0xff]
        %v1477 = vld [vmem:[#allocation3 + $0x58] sm:$0xff]
        %v1478 = vld [vmem:[#allocation3 + $0x60] sm:$0xff]
        %v1479 = vld [vmem:[#allocation3 + $0x68] sm:$0xff]
        %v1480 = vld [vmem:[#allocation3 + $0x70] sm:$0xff]
        %v1481 = vld [vmem:[#allocation3 + $0x78] sm:$0xff]
        %v1482 = vld [vmem:[#allocation3 + $0x80] sm:$0xff]
        %v1483 = vld [vmem:[#allocation3 + $0x88] sm:$0xff]
        %v1484 = vld [vmem:[#allocation3 + $0x90] sm:$0xff]
        %v1485 = vld [vmem:[#allocation3 + $0x98] sm:$0xff]
        %v1486 = vld [vmem:[#allocation3 + $0xa0] sm:$0xff]
        %v1487 = vld [vmem:[#allocation3 + $0xa8] sm:$0xff]
        %v1488 = vld [vmem:[#allocation3 + $0xb0] sm:$0xff]
        %v1489 = vld [vmem:[#allocation3 + $0xb8] sm:$0xff]
        %v1490 = vld [vmem:[#allocation3 + $0xc0] sm:$0xff]
        %v1491 = vld [vmem:[#allocation3 + $0xc8] sm:$0xff]
        %v1492 = vld [vmem:[#allocation3 + $0xd0] sm:$0xff]
        %v1493 = vld [vmem:[#allocation3 + $0xd8] sm:$0xff]
        %v1494 = vld [vmem:[#allocation3 + $0xe0] sm:$0xff]
        %v1495 = vld [vmem:[#allocation3 + $0xe8] sm:$0xff]
        %v1496 = vld [vmem:[#allocation3 + $0xf0] sm:$0xff]
        %v1497 = vld [vmem:[#allocation3 + $0xf8] sm:$0xff]
        %v1498 = vadd.f32 %v1402, %v1403
        %1499 = vadd.xlane.f32.xlu0 %v1498
        %v1500 = vpop.xlane.xlu0 %1499
        %v1501 = vadd.f32 %v1404, %v1405
        %1502 = vadd.xlane.f32.xlu0 %v1501
        %v1503 = vpop.xlane.xlu0 %1502
        %v1504 = vadd.f32 %v1406, %v1407
        %1505 = vadd.xlane.f32.xlu0 %v1504
        %v1506 = vpop.xlane.xlu0 %1505
        %v1507 = vadd.f32 %v1408, %v1409
        %1508 = vadd.xlane.f32.xlu0 %v1507
        %v1509 = vpop.xlane.xlu0 %1508
        %v1510 = vadd.f32 %v1410, %v1411
        %1511 = vadd.xlane.f32.xlu0 %v1510
        %v1512 = vpop.xlane.xlu0 %1511
        %v1513 = vadd.f32 %v1412, %v1413
        %1514 = vadd.xlane.f32.xlu0 %v1513
        %v1515 = vpop.xlane.xlu0 %1514
        %v1516 = vadd.f32 %v1414, %v1415
        %1517 = vadd.xlane.f32.xlu0 %v1516
        %v1518 = vpop.xlane.xlu0 %1517
        %v1519 = vadd.f32 %v1416, %v1417
        %1520 = vadd.xlane.f32.xlu0 %v1519
        %v1521 = vpop.xlane.xlu0 %1520
        %v1522 = vadd.f32 %v1418, %v1419
        %1523 = vadd.xlane.f32.xlu0 %v1522
        %v1524 = vpop.xlane.xlu0 %1523
        %v1525 = vadd.f32 %v1420, %v1421
        %1526 = vadd.xlane.f32.xlu0 %v1525
        %v1527 = vpop.xlane.xlu0 %1526
        %v1528 = vadd.f32 %v1422, %v1423
        %1529 = vadd.xlane.f32.xlu0 %v1528
        %v1530 = vpop.xlane.xlu0 %1529
        %v1531 = vadd.f32 %v1424, %v1425
        %1532 = vadd.xlane.f32.xlu0 %v1531
        %v1533 = vpop.xlane.xlu0 %1532
        %v1534 = vadd.f32 %v1426, %v1427
        %1535 = vadd.xlane.f32.xlu0 %v1534
        %v1536 = vpop.xlane.xlu0 %1535
        %v1537 = vadd.f32 %v1428, %v1429
        %1538 = vadd.xlane.f32.xlu0 %v1537
        %v1539 = vpop.xlane.xlu0 %1538
        %v1540 = vadd.f32 %v1430, %v1431
        %1541 = vadd.xlane.f32.xlu0 %v1540
        %v1542 = vpop.xlane.xlu0 %1541
        %v1543 = vadd.f32 %v1432, %v1433
        %1544 = vadd.xlane.f32.xlu0 %v1543
        %v1545 = vpop.xlane.xlu0 %1544
        %v1546 = vadd.f32 %v1434, %v1435
        %1547 = vadd.xlane.f32.xlu0 %v1546
        %v1548 = vpop.xlane.xlu0 %1547
        %v1549 = vadd.f32 %v1436, %v1437
        %1550 = vadd.xlane.f32.xlu0 %v1549
        %v1551 = vpop.xlane.xlu0 %1550
        %v1552 = vadd.f32 %v1438, %v1439
        %1553 = vadd.xlane.f32.xlu0 %v1552
        %v1554 = vpop.xlane.xlu0 %1553
        %v1555 = vadd.f32 %v1440, %v1441
        %1556 = vadd.xlane.f32.xlu0 %v1555
        %v1557 = vpop.xlane.xlu0 %1556
        %v1558 = vadd.f32 %v1442, %v1443
        %1559 = vadd.xlane.f32.xlu0 %v1558
        %v1560 = vpop.xlane.xlu0 %1559
        %v1561 = vadd.f32 %v1444, %v1445
        %1562 = vadd.xlane.f32.xlu0 %v1561
        %v1563 = vpop.xlane.xlu0 %1562
        %v1564 = vadd.f32 %v1446, %v1447
        %1565 = vadd.xlane.f32.xlu0 %v1564
        %v1566 = vpop.xlane.xlu0 %1565
        %v1567 = vadd.f32 %v1448, %v1449
        %1568 = vadd.xlane.f32.xlu0 %v1567
        %v1569 = vpop.xlane.xlu0 %1568
        %v1570 = vadd.f32 %v1450, %v1451
        %1571 = vadd.xlane.f32.xlu0 %v1570
        %v1572 = vpop.xlane.xlu0 %1571
        %v1573 = vadd.f32 %v1452, %v1453
        %1574 = vadd.xlane.f32.xlu0 %v1573
        %v1575 = vpop.xlane.xlu0 %1574
        %v1576 = vadd.f32 %v1454, %v1455
        %1577 = vadd.xlane.f32.xlu0 %v1576
        %v1578 = vpop.xlane.xlu0 %1577
        %v1579 = vadd.f32 %v1456, %v1457
        %1580 = vadd.xlane.f32.xlu0 %v1579
        %v1581 = vpop.xlane.xlu0 %1580
        %v1582 = vadd.f32 %v1458, %v1459
        %1583 = vadd.xlane.f32.xlu0 %v1582
        %v1584 = vpop.xlane.xlu0 %1583
        %v1585 = vadd.f32 %v1460, %v1461
        %1586 = vadd.xlane.f32.xlu0 %v1585
        %v1587 = vpop.xlane.xlu0 %1586
        %v1588 = vadd.f32 %v1462, %v1463
        %1589 = vadd.xlane.f32.xlu0 %v1588
        %v1590 = vpop.xlane.xlu0 %1589
        %v1591 = vadd.f32 %v1464, %v1465
        %1592 = vadd.xlane.f32.xlu0 %v1591
        %v1593 = vpop.xlane.xlu0 %1592
        %v1594 = vadd.f32 %v1466, %v1500
        %v1595 = vadd.f32 %v1467, %v1503
        %v1596 = vadd.f32 %v1468, %v1506
        %v1597 = vadd.f32 %v1469, %v1509
        %v1598 = vadd.f32 %v1470, %v1512
        %v1599 = vadd.f32 %v1471, %v1515
        %v1600 = vadd.f32 %v1472, %v1518
        %v1601 = vadd.f32 %v1473, %v1521
        %v1602 = vadd.f32 %v1474, %v1524
        %v1603 = vadd.f32 %v1475, %v1527
        %v1604 = vadd.f32 %v1476, %v1530
        %v1605 = vadd.f32 %v1477, %v1533
        %v1606 = vadd.f32 %v1478, %v1536
        %v1607 = vadd.f32 %v1479, %v1539
        %v1608 = vadd.f32 %v1480, %v1542
        %v1609 = vadd.f32 %v1481, %v1545
        %v1610 = vadd.f32 %v1482, %v1548
        %v1611 = vadd.f32 %v1483, %v1551
        %v1612 = vadd.f32 %v1484, %v1554
        %v1613 = vadd.f32 %v1485, %v1557
        %v1614 = vadd.f32 %v1486, %v1560
        %v1615 = vadd.f32 %v1487, %v1563
        %v1616 = vadd.f32 %v1488, %v1566
        %v1617 = vadd.f32 %v1489, %v1569
        %v1618 = vadd.f32 %v1490, %v1572
        %v1619 = vadd.f32 %v1491, %v1575
        %v1620 = vadd.f32 %v1492, %v1578
        %v1621 = vadd.f32 %v1493, %v1581
        %v1622 = vadd.f32 %v1494, %v1584
        %v1623 = vadd.f32 %v1495, %v1587
        %v1624 = vadd.f32 %v1496, %v1590
        %v1625 = vadd.f32 %v1497, %v1593
        %vm1626 = vcmask 261120
        %1627 = vst.msk [vmem:[#allocation3] sm:$0xff] %vm1626, %v1594
        %1628 = vst.msk [vmem:[#allocation3 + $0x8] sm:$0xff] %vm1626, %v1595
        %1629 = vst.msk [vmem:[#allocation3 + $0x10] sm:$0xff] %vm1626, %v1596
        %1630 = vst.msk [vmem:[#allocation3 + $0x18] sm:$0xff] %vm1626, %v1597
        %1631 = vst.msk [vmem:[#allocation3 + $0x20] sm:$0xff] %vm1626, %v1598
        %1632 = vst.msk [vmem:[#allocation3 + $0x28] sm:$0xff] %vm1626, %v1599
        %1633 = vst.msk [vmem:[#allocation3 + $0x30] sm:$0xff] %vm1626, %v1600
        %1634 = vst.msk [vmem:[#allocation3 + $0x38] sm:$0xff] %vm1626, %v1601
        %1635 = vst.msk [vmem:[#allocation3 + $0x40] sm:$0xff] %vm1626, %v1602
        %1636 = vst.msk [vmem:[#allocation3 + $0x48] sm:$0xff] %vm1626, %v1603
        %1637 = vst.msk [vmem:[#allocation3 + $0x50] sm:$0xff] %vm1626, %v1604
        %1638 = vst.msk [vmem:[#allocation3 + $0x58] sm:$0xff] %vm1626, %v1605
        %1639 = vst.msk [vmem:[#allocation3 + $0x60] sm:$0xff] %vm1626, %v1606
        %1640 = vst.msk [vmem:[#allocation3 + $0x68] sm:$0xff] %vm1626, %v1607
        %1641 = vst.msk [vmem:[#allocation3 + $0x70] sm:$0xff] %vm1626, %v1608
        %1642 = vst.msk [vmem:[#allocation3 + $0x78] sm:$0xff] %vm1626, %v1609
        %1643 = vst.msk [vmem:[#allocation3 + $0x80] sm:$0xff] %vm1626, %v1610
        %1644 = vst.msk [vmem:[#allocation3 + $0x88] sm:$0xff] %vm1626, %v1611
        %1645 = vst.msk [vmem:[#allocation3 + $0x90] sm:$0xff] %vm1626, %v1612
        %1646 = vst.msk [vmem:[#allocation3 + $0x98] sm:$0xff] %vm1626, %v1613
        %1647 = vst.msk [vmem:[#allocation3 + $0xa0] sm:$0xff] %vm1626, %v1614
        %1648 = vst.msk [vmem:[#allocation3 + $0xa8] sm:$0xff] %vm1626, %v1615
        %1649 = vst.msk [vmem:[#allocation3 + $0xb0] sm:$0xff] %vm1626, %v1616
        %1650 = vst.msk [vmem:[#allocation3 + $0xb8] sm:$0xff] %vm1626, %v1617
        %1651 = vst.msk [vmem:[#allocation3 + $0xc0] sm:$0xff] %vm1626, %v1618
        %1652 = vst.msk [vmem:[#allocation3 + $0xc8] sm:$0xff] %vm1626, %v1619
        %1653 = vst.msk [vmem:[#allocation3 + $0xd0] sm:$0xff] %vm1626, %v1620
        %1654 = vst.msk [vmem:[#allocation3 + $0xd8] sm:$0xff] %vm1626, %v1621
        %1655 = vst.msk [vmem:[#allocation3 + $0xe0] sm:$0xff] %vm1626, %v1622
        %1656 = vst.msk [vmem:[#allocation3 + $0xe8] sm:$0xff] %vm1626, %v1623
        %1657 = vst.msk [vmem:[#allocation3 + $0xf0] sm:$0xff] %vm1626, %v1624
        %1658 = vst.msk [vmem:[#allocation3 + $0xf8] sm:$0xff] %vm1626, %v1625
        %v1659 = vld [vmem:[#allocation2] sm:$0xff]
        %v1660 = vld [vmem:[#allocation2 + $0x8] sm:$0xff]
        %v1661 = vld [vmem:[#allocation2 + $0x10] sm:$0xff]
        %v1662 = vld [vmem:[#allocation2 + $0x18] sm:$0xff]
        %v1663 = vld [vmem:[#allocation2 + $0x20] sm:$0xff]
        %v1664 = vld [vmem:[#allocation2 + $0x28] sm:$0xff]
        %v1665 = vld [vmem:[#allocation2 + $0x30] sm:$0xff]
        %v1666 = vld [vmem:[#allocation2 + $0x38] sm:$0xff]
        %v1667 = vld [vmem:[#allocation2 + $0x40] sm:$0xff]
        %v1668 = vld [vmem:[#allocation2 + $0x48] sm:$0xff]
        %v1669 = vld [vmem:[#allocation2 + $0x50] sm:$0xff]
        %v1670 = vld [vmem:[#allocation2 + $0x58] sm:$0xff]
        %v1671 = vld [vmem:[#allocation2 + $0x60] sm:$0xff]
        %v1672 = vld [vmem:[#allocation2 + $0x68] sm:$0xff]
        %v1673 = vld [vmem:[#allocation2 + $0x70] sm:$0xff]
        %v1674 = vld [vmem:[#allocation2 + $0x78] sm:$0xff]
        %v1675 = vld [vmem:[#allocation2 + $0x80] sm:$0xff]
        %v1676 = vld [vmem:[#allocation2 + $0x88] sm:$0xff]
        %v1677 = vld [vmem:[#allocation2 + $0x90] sm:$0xff]
        %v1678 = vld [vmem:[#allocation2 + $0x98] sm:$0xff]
        %v1679 = vld [vmem:[#allocation2 + $0xa0] sm:$0xff]
        %v1680 = vld [vmem:[#allocation2 + $0xa8] sm:$0xff]
        %v1681 = vld [vmem:[#allocation2 + $0xb0] sm:$0xff]
        %v1682 = vld [vmem:[#allocation2 + $0xb8] sm:$0xff]
        %v1683 = vld [vmem:[#allocation2 + $0xc0] sm:$0xff]
        %v1684 = vld [vmem:[#allocation2 + $0xc8] sm:$0xff]
        %v1685 = vld [vmem:[#allocation2 + $0xd0] sm:$0xff]
        %v1686 = vld [vmem:[#allocation2 + $0xd8] sm:$0xff]
        %v1687 = vld [vmem:[#allocation2 + $0xe0] sm:$0xff]
        %v1688 = vld [vmem:[#allocation2 + $0xe8] sm:$0xff]
        %v1689 = vld [vmem:[#allocation2 + $0xf0] sm:$0xff]
        %v1690 = vld [vmem:[#allocation2 + $0xf8] sm:$0xff]
        %v1691 = vpack.c.bf16 %v1404, %v1402
        %v1692 = vpack.c.bf16 %v1405, %v1403
        %v1693 = vpack.c.bf16 %v1408, %v1406
        %v1694 = vpack.c.bf16 %v1409, %v1407
        %v1695 = vpack.c.bf16 %v1412, %v1410
        %v1696 = vpack.c.bf16 %v1413, %v1411
        %v1697 = vpack.c.bf16 %v1416, %v1414
        %v1698 = vpack.c.bf16 %v1417, %v1415
        %v1699 = vpack.c.bf16 %v1420, %v1418
        %v1700 = vpack.c.bf16 %v1421, %v1419
        %v1701 = vpack.c.bf16 %v1424, %v1422
        %v1702 = vpack.c.bf16 %v1425, %v1423
        %v1703 = vpack.c.bf16 %v1428, %v1426
        %v1704 = vpack.c.bf16 %v1429, %v1427
        %v1705 = vpack.c.bf16 %v1432, %v1430
        %v1706 = vpack.c.bf16 %v1433, %v1431
        %v1707 = vpack.c.bf16 %v1436, %v1434
        %v1708 = vpack.c.bf16 %v1437, %v1435
        %v1709 = vpack.c.bf16 %v1440, %v1438
        %v1710 = vpack.c.bf16 %v1441, %v1439
        %v1711 = vpack.c.bf16 %v1444, %v1442
        %v1712 = vpack.c.bf16 %v1445, %v1443
        %v1713 = vpack.c.bf16 %v1448, %v1446
        %v1714 = vpack.c.bf16 %v1449, %v1447
        %v1715 = vpack.c.bf16 %v1452, %v1450
        %v1716 = vpack.c.bf16 %v1453, %v1451
        %v1717 = vpack.c.bf16 %v1456, %v1454
        %v1718 = vpack.c.bf16 %v1457, %v1455
        %v1719 = vpack.c.bf16 %v1460, %v1458
        %v1720 = vpack.c.bf16 %v1461, %v1459
        %v1721 = vpack.c.bf16 %v1464, %v1462
        %v1722 = vpack.c.bf16 %v1465, %v1463
        %v1755 = vunpack.c.l.b16 %v438
        %v1756 = vunpack.c.l.b16 %v439
        %v1757 = vunpack.c.l.b16 %v440
        %v1758 = vunpack.c.l.b16 %v441
        %v1759 = vunpack.c.l.b16 %v442
        %v1760 = vunpack.c.l.b16 %v443
        %v1761 = vunpack.c.l.b16 %v444
        %v1762 = vunpack.c.l.b16 %v445
        %v1763 = vunpack.c.l.b16 %v446
        %v1764 = vunpack.c.l.b16 %v447
        %v1765 = vunpack.c.l.b16 %v448
        %v1766 = vunpack.c.l.b16 %v449
        %v1767 = vunpack.c.l.b16 %v450
        %v1768 = vunpack.c.l.b16 %v451
        %v1769 = vunpack.c.l.b16 %v452
        %v1770 = vunpack.c.l.b16 %v453
        %v1771 = vunpack.c.l.b16 %v454
        %v1772 = vunpack.c.l.b16 %v455
        %v1773 = vunpack.c.l.b16 %v456
        %v1774 = vunpack.c.l.b16 %v457
        %v1775 = vunpack.c.l.b16 %v458
        %v1776 = vunpack.c.l.b16 %v459
        %v1777 = vunpack.c.l.b16 %v460
        %v1778 = vunpack.c.l.b16 %v461
        %v1779 = vunpack.c.l.b16 %v462
        %v1780 = vunpack.c.l.b16 %v463
        %v1781 = vunpack.c.l.b16 %v464
        %v1782 = vunpack.c.l.b16 %v465
        %v1783 = vunpack.c.l.b16 %v466
        %v1784 = vunpack.c.l.b16 %v467
        %v1785 = vunpack.c.l.b16 %v468
        %v1786 = vunpack.c.l.b16 %v469
        %v1787 = vpack.c.b16 %v1756, %v1755
        %v1788 = vpack.c.b16 %v1758, %v1757
        %v1789 = vpack.c.b16 %v1760, %v1759
        %v1790 = vpack.c.b16 %v1762, %v1761
        %v1791 = vpack.c.b16 %v1764, %v1763
        %v1792 = vpack.c.b16 %v1766, %v1765
        %v1793 = vpack.c.b16 %v1768, %v1767
        %v1794 = vpack.c.b16 %v1770, %v1769
        %v1795 = vpack.c.b16 %v1772, %v1771
        %v1796 = vpack.c.b16 %v1774, %v1773
        %v1797 = vpack.c.b16 %v1776, %v1775
        %v1798 = vpack.c.b16 %v1778, %v1777
        %v1799 = vpack.c.b16 %v1780, %v1779
        %v1800 = vpack.c.b16 %v1782, %v1781
        %v1801 = vpack.c.b16 %v1784, %v1783
        %v1802 = vpack.c.b16 %v1786, %v1785
        %1819 = vmatprep.subr.bf16.mxu0 0
        %1820 = vmatpush1.bf16.msra.mxu0 %v1787
        %1821 = vmatprep.subr.bf16.mxu0 0
        %1822 = vmatpush1.bf16.msra.mxu0 %v1788
        %1823 = vmatprep.subr.bf16.mxu0 0
        %1824 = vmatpush1.bf16.msra.mxu0 %v1789
        %1825 = vmatprep.subr.bf16.mxu0 0
        %1826 = vmatpush1.bf16.msra.mxu0 %v1790
        %1827 = vmatprep.subr.bf16.mxu0 0
        %1828 = vmatpush1.bf16.msra.mxu0 %v1791
        %1829 = vmatprep.subr.bf16.mxu0 0
        %1830 = vmatpush1.bf16.msra.mxu0 %v1792
        %1831 = vmatprep.subr.bf16.mxu0 0
        %1832 = vmatpush1.bf16.msra.mxu0 %v1793
        %1833 = vmatprep.subr.bf16.mxu0 0
        %1834 = vmatpush1.bf16.msra.mxu0 %v1794
        %1835 = vmatprep.subr.bf16.mxu0 0
        %1836 = vmatpush1.bf16.msra.mxu0 %v1795
        %1837 = vmatprep.subr.bf16.mxu0 0
        %1838 = vmatpush1.bf16.msra.mxu0 %v1796
        %1839 = vmatprep.subr.bf16.mxu0 0
        %1840 = vmatpush1.bf16.msra.mxu0 %v1797
        %1841 = vmatprep.subr.bf16.mxu0 0
        %1842 = vmatpush1.bf16.msra.mxu0 %v1798
        %1843 = vmatprep.subr.bf16.mxu0 0
        %1844 = vmatpush1.bf16.msra.mxu0 %v1799
        %1845 = vmatprep.subr.bf16.mxu0 0
        %1846 = vmatpush1.bf16.msra.mxu0 %v1800
        %1847 = vmatprep.subr.bf16.mxu0 0
        %1848 = vmatpush1.bf16.msra.mxu0 %v1801
        %1849 = vmatprep.subr.bf16.mxu0 0
        %1850 = vmatpush1.bf16.msra.mxu0 %v1802
        %1851 = vmatprep.mubr.bf16.mxu0 %v1692
        %1852 = vmatmul.mubr.bf16.gmra.mrb[0].mxu0 %v1691
        %v1853 = vpop.f32.mrb[0].mxu0
        %v1854 = vadd.f32 0.0, %v1853
        %v1855 = vpop.f32.mrb[0].mxu0
        %v1856 = vpop.f32.mrb[0].mxu0
        %v1857 = vadd.f32 0.0, %v1856
        %v1858 = vpop.f32.mrb[0].mxu0
        %1859 = vmatprep.mubr.bf16.mxu0 %v1694
        %1860 = vmatmul.mubr.bf16.gmra.mrb[0].mxu0 %v1693
        %v1861 = vpop.f32.mrb[0].mxu0
        %v1862 = vadd.f32 0.0, %v1861
        %v1863 = vpop.f32.mrb[0].mxu0
        %v1864 = vpop.f32.mrb[0].mxu0
        %v1865 = vadd.f32 0.0, %v1864
        %v1866 = vpop.f32.mrb[0].mxu0
        %1867 = vmatprep.mubr.bf16.mxu0 %v1696
        %1868 = vmatmul.mubr.bf16.gmra.mrb[0].mxu0 %v1695
        %v1869 = vpop.f32.mrb[0].mxu0
        %v1870 = vadd.f32 0.0, %v1869
        %v1871 = vpop.f32.mrb[0].mxu0
        %v1872 = vpop.f32.mrb[0].mxu0
        %v1873 = vadd.f32 0.0, %v1872
        %v1874 = vpop.f32.mrb[0].mxu0
        %1875 = vmatprep.mubr.bf16.mxu0 %v1698
        %1876 = vmatmul.mubr.bf16.gmra.mrb[0].mxu0 %v1697
        %v1877 = vpop.f32.mrb[0].mxu0
        %v1878 = vadd.f32 0.0, %v1877
        %v1879 = vpop.f32.mrb[0].mxu0
        %v1880 = vpop.f32.mrb[0].mxu0
        %v1881 = vadd.f32 0.0, %v1880
        %v1882 = vpop.f32.mrb[0].mxu0
        %1883 = vmatprep.mubr.bf16.mxu0 %v1700
        %1884 = vmatmul.mubr.bf16.gmra.mrb[0].mxu0 %v1699
        %v1885 = vpop.f32.mrb[0].mxu0
        %v1886 = vadd.f32 0.0, %v1885
        %v1887 = vpop.f32.mrb[0].mxu0
        %v1888 = vpop.f32.mrb[0].mxu0
        %v1889 = vadd.f32 0.0, %v1888
        %v1890 = vpop.f32.mrb[0].mxu0
        %1891 = vmatprep.mubr.bf16.mxu0 %v1702
        %1892 = vmatmul.mubr.bf16.gmra.mrb[0].mxu0 %v1701
        %v1893 = vpop.f32.mrb[0].mxu0
        %v1894 = vadd.f32 0.0, %v1893
        %v1895 = vpop.f32.mrb[0].mxu0
        %v1896 = vpop.f32.mrb[0].mxu0
        %v1897 = vadd.f32 0.0, %v1896
        %v1898 = vpop.f32.mrb[0].mxu0
        %1899 = vmatprep.mubr.bf16.mxu0 %v1704
        %1900 = vmatmul.mubr.bf16.gmra.mrb[0].mxu0 %v1703
        %v1901 = vpop.f32.mrb[0].mxu0
        %v1902 = vadd.f32 0.0, %v1901
        %v1903 = vpop.f32.mrb[0].mxu0
        %v1904 = vpop.f32.mrb[0].mxu0
        %v1905 = vadd.f32 0.0, %v1904
        %v1906 = vpop.f32.mrb[0].mxu0
        %1907 = vmatprep.mubr.bf16.mxu0 %v1706
        %1908 = vmatmul.mubr.bf16.gmra.mrb[0].mxu0 %v1705
        %v1909 = vpop.f32.mrb[0].mxu0
        %v1910 = vadd.f32 0.0, %v1909
        %v1911 = vpop.f32.mrb[0].mxu0
        %v1912 = vpop.f32.mrb[0].mxu0
        %v1913 = vadd.f32 0.0, %v1912
        %v1914 = vpop.f32.mrb[0].mxu0
        %1915 = vmatprep.mubr.bf16.mxu0 %v1708
        %1916 = vmatmul.mubr.bf16.gmra.mrb[0].mxu0 %v1707
        %v1917 = vpop.f32.mrb[0].mxu0
        %v1918 = vadd.f32 0.0, %v1917
        %v1919 = vpop.f32.mrb[0].mxu0
        %v1920 = vpop.f32.mrb[0].mxu0
        %v1921 = vadd.f32 0.0, %v1920
        %v1922 = vpop.f32.mrb[0].mxu0
        %1923 = vmatprep.mubr.bf16.mxu0 %v1710
        %1924 = vmatmul.mubr.bf16.gmra.mrb[0].mxu0 %v1709
        %v1925 = vpop.f32.mrb[0].mxu0
        %v1926 = vadd.f32 0.0, %v1925
        %v1927 = vpop.f32.mrb[0].mxu0
        %v1928 = vpop.f32.mrb[0].mxu0
        %v1929 = vadd.f32 0.0, %v1928
        %v1930 = vpop.f32.mrb[0].mxu0
        %1931 = vmatprep.mubr.bf16.mxu0 %v1712
        %1932 = vmatmul.mubr.bf16.gmra.mrb[0].mxu0 %v1711
        %v1933 = vpop.f32.mrb[0].mxu0
        %v1934 = vadd.f32 0.0, %v1933
        %v1935 = vpop.f32.mrb[0].mxu0
        %v1936 = vpop.f32.mrb[0].mxu0
        %v1937 = vadd.f32 0.0, %v1936
        %v1938 = vpop.f32.mrb[0].mxu0
        %1939 = vmatprep.mubr.bf16.mxu0 %v1714
        %1940 = vmatmul.mubr.bf16.gmra.mrb[0].mxu0 %v1713
        %v1941 = vpop.f32.mrb[0].mxu0
        %v1942 = vadd.f32 0.0, %v1941
        %v1943 = vpop.f32.mrb[0].mxu0
        %v1944 = vpop.f32.mrb[0].mxu0
        %v1945 = vadd.f32 0.0, %v1944
        %v1946 = vpop.f32.mrb[0].mxu0
        %1947 = vmatprep.mubr.bf16.mxu0 %v1716
        %1948 = vmatmul.mubr.bf16.gmra.mrb[0].mxu0 %v1715
        %v1949 = vpop.f32.mrb[0].mxu0
        %v1950 = vadd.f32 0.0, %v1949
        %v1951 = vpop.f32.mrb[0].mxu0
        %v1952 = vpop.f32.mrb[0].mxu0
        %v1953 = vadd.f32 0.0, %v1952
        %v1954 = vpop.f32.mrb[0].mxu0
        %1955 = vmatprep.mubr.bf16.mxu0 %v1718
        %1956 = vmatmul.mubr.bf16.gmra.mrb[0].mxu0 %v1717
        %v1957 = vpop.f32.mrb[0].mxu0
        %v1958 = vadd.f32 0.0, %v1957
        %v1959 = vpop.f32.mrb[0].mxu0
        %v1960 = vpop.f32.mrb[0].mxu0
        %v1961 = vadd.f32 0.0, %v1960
        %v1962 = vpop.f32.mrb[0].mxu0
        %1963 = vmatprep.mubr.bf16.mxu0 %v1720
        %1964 = vmatmul.mubr.bf16.gmra.mrb[0].mxu0 %v1719
        %v1965 = vpop.f32.mrb[0].mxu0
        %v1966 = vadd.f32 0.0, %v1965
        %v1967 = vpop.f32.mrb[0].mxu0
        %v1968 = vpop.f32.mrb[0].mxu0
        %v1969 = vadd.f32 0.0, %v1968
        %v1970 = vpop.f32.mrb[0].mxu0
        %1971 = vmatprep.mubr.bf16.mxu0 %v1722
        %1972 = vmatmul.mubr.bf16.gmra.mrb[0].mxu0 %v1721
        %v1973 = vpop.f32.mrb[0].mxu0
        %v1974 = vadd.f32 0.0, %v1973
        %v1975 = vpop.f32.mrb[0].mxu0
        %v1976 = vpop.f32.mrb[0].mxu0
        %v1977 = vadd.f32 0.0, %v1976
        %v1978 = vpop.f32.mrb[0].mxu0
        %1979 = vdwg.mxu0
        %v1980 = vadd.f32 %v1659, %v1854
        %v1981 = vadd.f32 %v1660, %v1857
        %v1982 = vadd.f32 %v1661, %v1862
        %v1983 = vadd.f32 %v1662, %v1865
        %v1984 = vadd.f32 %v1663, %v1870
        %v1985 = vadd.f32 %v1664, %v1873
        %v1986 = vadd.f32 %v1665, %v1878
        %v1987 = vadd.f32 %v1666, %v1881
        %v1988 = vadd.f32 %v1667, %v1886
        %v1989 = vadd.f32 %v1668, %v1889
        %v1990 = vadd.f32 %v1669, %v1894
        %v1991 = vadd.f32 %v1670, %v1897
        %v1992 = vadd.f32 %v1671, %v1902
        %v1993 = vadd.f32 %v1672, %v1905
        %v1994 = vadd.f32 %v1673, %v1910
        %v1995 = vadd.f32 %v1674, %v1913
        %v1996 = vadd.f32 %v1675, %v1918
        %v1997 = vadd.f32 %v1676, %v1921
        %v1998 = vadd.f32 %v1677, %v1926
        %v1999 = vadd.f32 %v1678, %v1929
        %v2000 = vadd.f32 %v1679, %v1934
        %v2001 = vadd.f32 %v1680, %v1937
        %v2002 = vadd.f32 %v1681, %v1942
        %v2003 = vadd.f32 %v1682, %v1945
        %v2004 = vadd.f32 %v1683, %v1950
        %v2005 = vadd.f32 %v1684, %v1953
        %v2006 = vadd.f32 %v1685, %v1958
        %v2007 = vadd.f32 %v1686, %v1961
        %v2008 = vadd.f32 %v1687, %v1966
        %v2009 = vadd.f32 %v1688, %v1969
        %v2010 = vadd.f32 %v1689, %v1974
        %v2011 = vadd.f32 %v1690, %v1977
        %2012 = vst.msk [vmem:[#allocation2] sm:$0xff] %vm1626, %v1980
        %2013 = vst.msk [vmem:[#allocation2 + $0x8] sm:$0xff] %vm1626, %v1981
        %2014 = vst.msk [vmem:[#allocation2 + $0x10] sm:$0xff] %vm1626, %v1982
        %2015 = vst.msk [vmem:[#allocation2 + $0x18] sm:$0xff] %vm1626, %v1983
        %2016 = vst.msk [vmem:[#allocation2 + $0x20] sm:$0xff] %vm1626, %v1984
        %2017 = vst.msk [vmem:[#allocation2 + $0x28] sm:$0xff] %vm1626, %v1985
        %2018 = vst.msk [vmem:[#allocation2 + $0x30] sm:$0xff] %vm1626, %v1986
        %2019 = vst.msk [vmem:[#allocation2 + $0x38] sm:$0xff] %vm1626, %v1987
        %2020 = vst.msk [vmem:[#allocation2 + $0x40] sm:$0xff] %vm1626, %v1988
        %2021 = vst.msk [vmem:[#allocation2 + $0x48] sm:$0xff] %vm1626, %v1989
        %2022 = vst.msk [vmem:[#allocation2 + $0x50] sm:$0xff] %vm1626, %v1990
        %2023 = vst.msk [vmem:[#allocation2 + $0x58] sm:$0xff] %vm1626, %v1991
        %2024 = vst.msk [vmem:[#allocation2 + $0x60] sm:$0xff] %vm1626, %v1992
        %2025 = vst.msk [vmem:[#allocation2 + $0x68] sm:$0xff] %vm1626, %v1993
        %2026 = vst.msk [vmem:[#allocation2 + $0x70] sm:$0xff] %vm1626, %v1994
        %2027 = vst.msk [vmem:[#allocation2 + $0x78] sm:$0xff] %vm1626, %v1995
        %2028 = vst.msk [vmem:[#allocation2 + $0x80] sm:$0xff] %vm1626, %v1996
        %2029 = vst.msk [vmem:[#allocation2 + $0x88] sm:$0xff] %vm1626, %v1997
        %2030 = vst.msk [vmem:[#allocation2 + $0x90] sm:$0xff] %vm1626, %v1998
        %2031 = vst.msk [vmem:[#allocation2 + $0x98] sm:$0xff] %vm1626, %v1999
        %2032 = vst.msk [vmem:[#allocation2 + $0xa0] sm:$0xff] %vm1626, %v2000
        %2033 = vst.msk [vmem:[#allocation2 + $0xa8] sm:$0xff] %vm1626, %v2001
        %2034 = vst.msk [vmem:[#allocation2 + $0xb0] sm:$0xff] %vm1626, %v2002
        %2035 = vst.msk [vmem:[#allocation2 + $0xb8] sm:$0xff] %vm1626, %v2003
        %2036 = vst.msk [vmem:[#allocation2 + $0xc0] sm:$0xff] %vm1626, %v2004
        %2037 = vst.msk [vmem:[#allocation2 + $0xc8] sm:$0xff] %vm1626, %v2005
        %2038 = vst.msk [vmem:[#allocation2 + $0xd0] sm:$0xff] %vm1626, %v2006
        %2039 = vst.msk [vmem:[#allocation2 + $0xd8] sm:$0xff] %vm1626, %v2007
        %2040 = vst.msk [vmem:[#allocation2 + $0xe0] sm:$0xff] %vm1626, %v2008
        %2041 = vst.msk [vmem:[#allocation2 + $0xe8] sm:$0xff] %vm1626, %v2009
        %2042 = vst.msk [vmem:[#allocation2 + $0xf0] sm:$0xff] %vm1626, %v2010
        %2043 = vst.msk [vmem:[#allocation2 + $0xf8] sm:$0xff] %vm1626, %v2011
        %2044 = vset.pattern.permute.xlu0 1
        %2045 = vperm.xlu0 %2044, %v471
        %v2046 = vpop.permute.xlu0 %2045
        %2048 = vset.pattern.permute.xlu0 1
        %2049 = vperm.xlu0 %2048, %v472
        %v2050 = vpop.permute.xlu0 %2049
        %2052 = vset.pattern.permute.xlu0 1
        %2053 = vperm.xlu0 %2052, %v473
        %v2054 = vpop.permute.xlu0 %2053
        %2056 = vset.pattern.permute.xlu0 1
        %2057 = vperm.xlu0 %2056, %v474
        %v2058 = vpop.permute.xlu0 %2057
        %2060 = vset.pattern.permute.xlu0 1
        %2061 = vperm.xlu0 %2060, %v475
        %v2062 = vpop.permute.xlu0 %2061
        %2064 = vset.pattern.permute.xlu0 1
        %2065 = vperm.xlu0 %2064, %v476
        %v2066 = vpop.permute.xlu0 %2065
        %2068 = vset.pattern.permute.xlu0 1
        %2069 = vperm.xlu0 %2068, %v477
        %v2070 = vpop.permute.xlu0 %2069
        %2072 = vset.pattern.permute.xlu0 1
        %2073 = vperm.xlu0 %2072, %v478
        %v2074 = vpop.permute.xlu0 %2073
        %2076 = vset.pattern.permute.xlu0 1
        %2077 = vperm.xlu0 %2076, %v479
        %v2078 = vpop.permute.xlu0 %2077
        %2080 = vset.pattern.permute.xlu0 1
        %2081 = vperm.xlu0 %2080, %v480
        %v2082 = vpop.permute.xlu0 %2081
        %2084 = vset.pattern.permute.xlu0 1
        %2085 = vperm.xlu0 %2084, %v481
        %v2086 = vpop.permute.xlu0 %2085
        %2088 = vset.pattern.permute.xlu0 1
        %2089 = vperm.xlu0 %2088, %v482
        %v2090 = vpop.permute.xlu0 %2089
        %2092 = vset.pattern.permute.xlu0 1
        %2093 = vperm.xlu0 %2092, %v483
        %v2094 = vpop.permute.xlu0 %2093
        %2096 = vset.pattern.permute.xlu0 1
        %2097 = vperm.xlu0 %2096, %v484
        %v2098 = vpop.permute.xlu0 %2097
        %2100 = vset.pattern.permute.xlu0 1
        %2101 = vperm.xlu0 %2100, %v485
        %v2102 = vpop.permute.xlu0 %2101
        %2104 = vset.pattern.permute.xlu0 1
        %2105 = vperm.xlu0 %2104, %v486
        %v2106 = vpop.permute.xlu0 %2105
        %2108 = vset.pattern.permute.xlu0 1
        %2109 = vperm.xlu0 %2108, %v487
        %v2110 = vpop.permute.xlu0 %2109
        %2112 = vset.pattern.permute.xlu0 1
        %2113 = vperm.xlu0 %2112, %v488
        %v2114 = vpop.permute.xlu0 %2113
        %2116 = vset.pattern.permute.xlu0 1
        %2117 = vperm.xlu0 %2116, %v489
        %v2118 = vpop.permute.xlu0 %2117
        %2120 = vset.pattern.permute.xlu0 1
        %2121 = vperm.xlu0 %2120, %v490
        %v2122 = vpop.permute.xlu0 %2121
        %2124 = vset.pattern.permute.xlu0 1
        %2125 = vperm.xlu0 %2124, %v491
        %v2126 = vpop.permute.xlu0 %2125
        %2128 = vset.pattern.permute.xlu0 1
        %2129 = vperm.xlu0 %2128, %v492
        %v2130 = vpop.permute.xlu0 %2129
        %2132 = vset.pattern.permute.xlu0 1
        %2133 = vperm.xlu0 %2132, %v493
        %v2134 = vpop.permute.xlu0 %2133
        %2136 = vset.pattern.permute.xlu0 1
        %2137 = vperm.xlu0 %2136, %v494
        %v2138 = vpop.permute.xlu0 %2137
        %2140 = vset.pattern.permute.xlu0 1
        %2141 = vperm.xlu0 %2140, %v495
        %v2142 = vpop.permute.xlu0 %2141
        %2144 = vset.pattern.permute.xlu0 1
        %2145 = vperm.xlu0 %2144, %v496
        %v2146 = vpop.permute.xlu0 %2145
        %2148 = vset.pattern.permute.xlu0 1
        %2149 = vperm.xlu0 %2148, %v497
        %v2150 = vpop.permute.xlu0 %2149
        %2152 = vset.pattern.permute.xlu0 1
        %2153 = vperm.xlu0 %2152, %v498
        %v2154 = vpop.permute.xlu0 %2153
        %2156 = vset.pattern.permute.xlu0 1
        %2157 = vperm.xlu0 %2156, %v499
        %v2158 = vpop.permute.xlu0 %2157
        %2160 = vset.pattern.permute.xlu0 1
        %2161 = vperm.xlu0 %2160, %v500
        %v2162 = vpop.permute.xlu0 %2161
        %2164 = vset.pattern.permute.xlu0 1
        %2165 = vperm.xlu0 %2164, %v501
        %v2166 = vpop.permute.xlu0 %2165
        %2168 = vset.pattern.permute.xlu0 1
        %2169 = vperm.xlu0 %2168, %v502
        %v2170 = vpop.permute.xlu0 %2169
        %v2172 = vlaneseq
        %v2173 = vshrl.u32 %v2172, 7
        %v2174 = vsub.s32 1, %v2173
        %v2175 = vrot.slane %v470, %v2174
        %v2176 = vlaneseq
        %v2177 = vshrl.u32 %v2176, 7
        %v2178 = vsub.s32 3, %v2177
        %v2179 = vrot.slane %v470, %v2178
        %v2182 = vlaneseq
        %v2183 = vshrl.u32 %v2182, 7
        %v2184 = vsub.s32 1, %v2183
        %v2185 = vrot.slane %v2175, %v2184
        %v2186 = vlaneseq
        %v2187 = vshrl.u32 %v2186, 7
        %v2188 = vsub.s32 1, %v2187
        %v2189 = vrot.slane %v2179, %v2188
        %v2190 = vadd.f32 %v2046, %v2185
        %v2191 = vadd.f32 %v2046, %v2189
        %v2192 = vadd.f32 %v2050, %v2185
        %v2193 = vadd.f32 %v2050, %v2189
        %v2194 = vadd.f32 %v2054, %v2185
        %v2195 = vadd.f32 %v2054, %v2189
        %v2196 = vadd.f32 %v2058, %v2185
        %v2197 = vadd.f32 %v2058, %v2189
        %v2198 = vadd.f32 %v2062, %v2185
        %v2199 = vadd.f32 %v2062, %v2189
        %v2200 = vadd.f32 %v2066, %v2185
        %v2201 = vadd.f32 %v2066, %v2189
        %v2202 = vadd.f32 %v2070, %v2185
        %v2203 = vadd.f32 %v2070, %v2189
        %v2204 = vadd.f32 %v2074, %v2185
        %v2205 = vadd.f32 %v2074, %v2189
        %v2206 = vadd.f32 %v2078, %v2185
        %v2207 = vadd.f32 %v2078, %v2189
        %v2208 = vadd.f32 %v2082, %v2185
        %v2209 = vadd.f32 %v2082, %v2189
        %v2210 = vadd.f32 %v2086, %v2185
        %v2211 = vadd.f32 %v2086, %v2189
        %v2212 = vadd.f32 %v2090, %v2185
        %v2213 = vadd.f32 %v2090, %v2189
        %v2214 = vadd.f32 %v2094, %v2185
        %v2215 = vadd.f32 %v2094, %v2189
        %v2216 = vadd.f32 %v2098, %v2185
        %v2217 = vadd.f32 %v2098, %v2189
        %v2218 = vadd.f32 %v2102, %v2185
        %v2219 = vadd.f32 %v2102, %v2189
        %v2220 = vadd.f32 %v2106, %v2185
        %v2221 = vadd.f32 %v2106, %v2189
        %v2222 = vadd.f32 %v2110, %v2185
        %v2223 = vadd.f32 %v2110, %v2189
        %v2224 = vadd.f32 %v2114, %v2185
        %v2225 = vadd.f32 %v2114, %v2189
        %v2226 = vadd.f32 %v2118, %v2185
        %v2227 = vadd.f32 %v2118, %v2189
        %v2228 = vadd.f32 %v2122, %v2185
        %v2229 = vadd.f32 %v2122, %v2189
        %v2230 = vadd.f32 %v2126, %v2185
        %v2231 = vadd.f32 %v2126, %v2189
        %v2232 = vadd.f32 %v2130, %v2185
        %v2233 = vadd.f32 %v2130, %v2189
        %v2234 = vadd.f32 %v2134, %v2185
        %v2235 = vadd.f32 %v2134, %v2189
        %v2236 = vadd.f32 %v2138, %v2185
        %v2237 = vadd.f32 %v2138, %v2189
        %v2238 = vadd.f32 %v2142, %v2185
        %v2239 = vadd.f32 %v2142, %v2189
        %v2240 = vadd.f32 %v2146, %v2185
        %v2241 = vadd.f32 %v2146, %v2189
        %v2242 = vadd.f32 %v2150, %v2185
        %v2243 = vadd.f32 %v2150, %v2189
        %v2244 = vadd.f32 %v2154, %v2185
        %v2245 = vadd.f32 %v2154, %v2189
        %v2246 = vadd.f32 %v2158, %v2185
        %v2247 = vadd.f32 %v2158, %v2189
        %v2248 = vadd.f32 %v2162, %v2185
        %v2249 = vadd.f32 %v2162, %v2189
        %v2250 = vadd.f32 %v2166, %v2185
        %v2251 = vadd.f32 %v2166, %v2189
        %v2252 = vadd.f32 %v2170, %v2185
        %v2253 = vadd.f32 %v2170, %v2189
        %vm2254 = vcmp.gt.f32.partialorder %v2190, 0.0
        %vm2255 = vcmp.gt.f32.partialorder %v2191, 0.0
        %vm2256 = vcmp.gt.f32.partialorder %v2192, 0.0
        %vm2257 = vcmp.gt.f32.partialorder %v2193, 0.0
        %vm2258 = vcmp.gt.f32.partialorder %v2194, 0.0
        %vm2259 = vcmp.gt.f32.partialorder %v2195, 0.0
        %vm2260 = vcmp.gt.f32.partialorder %v2196, 0.0
        %vm2261 = vcmp.gt.f32.partialorder %v2197, 0.0
        %vm2262 = vcmp.gt.f32.partialorder %v2198, 0.0
        %vm2263 = vcmp.gt.f32.partialorder %v2199, 0.0
        %vm2264 = vcmp.gt.f32.partialorder %v2200, 0.0
        %vm2265 = vcmp.gt.f32.partialorder %v2201, 0.0
        %vm2266 = vcmp.gt.f32.partialorder %v2202, 0.0
        %vm2267 = vcmp.gt.f32.partialorder %v2203, 0.0
        %vm2268 = vcmp.gt.f32.partialorder %v2204, 0.0
        %vm2269 = vcmp.gt.f32.partialorder %v2205, 0.0
        %vm2270 = vcmp.gt.f32.partialorder %v2206, 0.0
        %vm2271 = vcmp.gt.f32.partialorder %v2207, 0.0
        %vm2272 = vcmp.gt.f32.partialorder %v2208, 0.0
        %vm2273 = vcmp.gt.f32.partialorder %v2209, 0.0
        %vm2274 = vcmp.gt.f32.partialorder %v2210, 0.0
        %vm2275 = vcmp.gt.f32.partialorder %v2211, 0.0
        %vm2276 = vcmp.gt.f32.partialorder %v2212, 0.0
        %vm2277 = vcmp.gt.f32.partialorder %v2213, 0.0
        %vm2278 = vcmp.gt.f32.partialorder %v2214, 0.0
        %vm2279 = vcmp.gt.f32.partialorder %v2215, 0.0
        %vm2280 = vcmp.gt.f32.partialorder %v2216, 0.0
        %vm2281 = vcmp.gt.f32.partialorder %v2217, 0.0
        %vm2282 = vcmp.gt.f32.partialorder %v2218, 0.0
        %vm2283 = vcmp.gt.f32.partialorder %v2219, 0.0
        %vm2284 = vcmp.gt.f32.partialorder %v2220, 0.0
        %vm2285 = vcmp.gt.f32.partialorder %v2221, 0.0
        %vm2286 = vcmp.gt.f32.partialorder %v2222, 0.0
        %vm2287 = vcmp.gt.f32.partialorder %v2223, 0.0
        %vm2288 = vcmp.gt.f32.partialorder %v2224, 0.0
        %vm2289 = vcmp.gt.f32.partialorder %v2225, 0.0
        %vm2290 = vcmp.gt.f32.partialorder %v2226, 0.0
        %vm2291 = vcmp.gt.f32.partialorder %v2227, 0.0
        %vm2292 = vcmp.gt.f32.partialorder %v2228, 0.0
        %vm2293 = vcmp.gt.f32.partialorder %v2229, 0.0
        %vm2294 = vcmp.gt.f32.partialorder %v2230, 0.0
        %vm2295 = vcmp.gt.f32.partialorder %v2231, 0.0
        %vm2296 = vcmp.gt.f32.partialorder %v2232, 0.0
        %vm2297 = vcmp.gt.f32.partialorder %v2233, 0.0
        %vm2298 = vcmp.gt.f32.partialorder %v2234, 0.0
        %vm2299 = vcmp.gt.f32.partialorder %v2235, 0.0
        %vm2300 = vcmp.gt.f32.partialorder %v2236, 0.0
        %vm2301 = vcmp.gt.f32.partialorder %v2237, 0.0
        %vm2302 = vcmp.gt.f32.partialorder %v2238, 0.0
        %vm2303 = vcmp.gt.f32.partialorder %v2239, 0.0
        %vm2304 = vcmp.gt.f32.partialorder %v2240, 0.0
        %vm2305 = vcmp.gt.f32.partialorder %v2241, 0.0
        %vm2306 = vcmp.gt.f32.partialorder %v2242, 0.0
        %vm2307 = vcmp.gt.f32.partialorder %v2243, 0.0
        %vm2308 = vcmp.gt.f32.partialorder %v2244, 0.0
        %vm2309 = vcmp.gt.f32.partialorder %v2245, 0.0
        %vm2310 = vcmp.gt.f32.partialorder %v2246, 0.0
        %vm2311 = vcmp.gt.f32.partialorder %v2247, 0.0
        %vm2312 = vcmp.gt.f32.partialorder %v2248, 0.0
        %vm2313 = vcmp.gt.f32.partialorder %v2249, 0.0
        %vm2314 = vcmp.gt.f32.partialorder %v2250, 0.0
        %vm2315 = vcmp.gt.f32.partialorder %v2251, 0.0
        %vm2316 = vcmp.gt.f32.partialorder %v2252, 0.0
        %vm2317 = vcmp.gt.f32.partialorder %v2253, 0.0
        %v2318 = vmul.f32 %v2190, 0.2
        %v2319 = vmul.f32 %v2191, 0.2
        %v2320 = vmul.f32 %v2192, 0.2
        %v2321 = vmul.f32 %v2193, 0.2
        %v2322 = vmul.f32 %v2194, 0.2
        %v2323 = vmul.f32 %v2195, 0.2
        %v2324 = vmul.f32 %v2196, 0.2
        %v2325 = vmul.f32 %v2197, 0.2
        %v2326 = vmul.f32 %v2198, 0.2
        %v2327 = vmul.f32 %v2199, 0.2
        %v2328 = vmul.f32 %v2200, 0.2
        %v2329 = vmul.f32 %v2201, 0.2
        %v2330 = vmul.f32 %v2202, 0.2
        %v2331 = vmul.f32 %v2203, 0.2
        %v2332 = vmul.f32 %v2204, 0.2
        %v2333 = vmul.f32 %v2205, 0.2
        %v2334 = vmul.f32 %v2206, 0.2
        %v2335 = vmul.f32 %v2207, 0.2
        %v2336 = vmul.f32 %v2208, 0.2
        %v2337 = vmul.f32 %v2209, 0.2
        %v2338 = vmul.f32 %v2210, 0.2
        %v2339 = vmul.f32 %v2211, 0.2
        %v2340 = vmul.f32 %v2212, 0.2
        %v2341 = vmul.f32 %v2213, 0.2
        %v2342 = vmul.f32 %v2214, 0.2
        %v2343 = vmul.f32 %v2215, 0.2
        %v2344 = vmul.f32 %v2216, 0.2
        %v2345 = vmul.f32 %v2217, 0.2
        %v2346 = vmul.f32 %v2218, 0.2
        %v2347 = vmul.f32 %v2219, 0.2
        %v2348 = vmul.f32 %v2220, 0.2
        %v2349 = vmul.f32 %v2221, 0.2
        %v2350 = vmul.f32 %v2222, 0.2
        %v2351 = vmul.f32 %v2223, 0.2
        %v2352 = vmul.f32 %v2224, 0.2
        %v2353 = vmul.f32 %v2225, 0.2
        %v2354 = vmul.f32 %v2226, 0.2
        %v2355 = vmul.f32 %v2227, 0.2
        %v2356 = vmul.f32 %v2228, 0.2
        %v2357 = vmul.f32 %v2229, 0.2
        %v2358 = vmul.f32 %v2230, 0.2
        %v2359 = vmul.f32 %v2231, 0.2
        %v2360 = vmul.f32 %v2232, 0.2
        %v2361 = vmul.f32 %v2233, 0.2
        %v2362 = vmul.f32 %v2234, 0.2
        %v2363 = vmul.f32 %v2235, 0.2
        %v2364 = vmul.f32 %v2236, 0.2
        %v2365 = vmul.f32 %v2237, 0.2
        %v2366 = vmul.f32 %v2238, 0.2
        %v2367 = vmul.f32 %v2239, 0.2
        %v2368 = vmul.f32 %v2240, 0.2
        %v2369 = vmul.f32 %v2241, 0.2
        %v2370 = vmul.f32 %v2242, 0.2
        %v2371 = vmul.f32 %v2243, 0.2
        %v2372 = vmul.f32 %v2244, 0.2
        %v2373 = vmul.f32 %v2245, 0.2
        %v2374 = vmul.f32 %v2246, 0.2
        %v2375 = vmul.f32 %v2247, 0.2
        %v2376 = vmul.f32 %v2248, 0.2
        %v2377 = vmul.f32 %v2249, 0.2
        %v2378 = vmul.f32 %v2250, 0.2
        %v2379 = vmul.f32 %v2251, 0.2
        %v2380 = vmul.f32 %v2252, 0.2
        %v2381 = vmul.f32 %v2253, 0.2
        %v2382 = vsel %vm2254, %v2190, %v2318
        %v2383 = vsel %vm2255, %v2191, %v2319
        %v2384 = vsel %vm2256, %v2192, %v2320
        %v2385 = vsel %vm2257, %v2193, %v2321
        %v2386 = vsel %vm2258, %v2194, %v2322
        %v2387 = vsel %vm2259, %v2195, %v2323
        %v2388 = vsel %vm2260, %v2196, %v2324
        %v2389 = vsel %vm2261, %v2197, %v2325
        %v2390 = vsel %vm2262, %v2198, %v2326
        %v2391 = vsel %vm2263, %v2199, %v2327
        %v2392 = vsel %vm2264, %v2200, %v2328
        %v2393 = vsel %vm2265, %v2201, %v2329
        %v2394 = vsel %vm2266, %v2202, %v2330
        %v2395 = vsel %vm2267, %v2203, %v2331
        %v2396 = vsel %vm2268, %v2204, %v2332
        %v2397 = vsel %vm2269, %v2205, %v2333
        %v2398 = vsel %vm2270, %v2206, %v2334
        %v2399 = vsel %vm2271, %v2207, %v2335
        %v2400 = vsel %vm2272, %v2208, %v2336
        %v2401 = vsel %vm2273, %v2209, %v2337
        %v2402 = vsel %vm2274, %v2210, %v2338
        %v2403 = vsel %vm2275, %v2211, %v2339
        %v2404 = vsel %vm2276, %v2212, %v2340
        %v2405 = vsel %vm2277, %v2213, %v2341
        %v2406 = vsel %vm2278, %v2214, %v2342
        %v2407 = vsel %vm2279, %v2215, %v2343
        %v2408 = vsel %vm2280, %v2216, %v2344
        %v2409 = vsel %vm2281, %v2217, %v2345
        %v2410 = vsel %vm2282, %v2218, %v2346
        %v2411 = vsel %vm2283, %v2219, %v2347
        %v2412 = vsel %vm2284, %v2220, %v2348
        %v2413 = vsel %vm2285, %v2221, %v2349
        %v2414 = vsel %vm2286, %v2222, %v2350
        %v2415 = vsel %vm2287, %v2223, %v2351
        %v2416 = vsel %vm2288, %v2224, %v2352
        %v2417 = vsel %vm2289, %v2225, %v2353
        %v2418 = vsel %vm2290, %v2226, %v2354
        %v2419 = vsel %vm2291, %v2227, %v2355
        %v2420 = vsel %vm2292, %v2228, %v2356
        %v2421 = vsel %vm2293, %v2229, %v2357
        %v2422 = vsel %vm2294, %v2230, %v2358
        %v2423 = vsel %vm2295, %v2231, %v2359
        %v2424 = vsel %vm2296, %v2232, %v2360
        %v2425 = vsel %vm2297, %v2233, %v2361
        %v2426 = vsel %vm2298, %v2234, %v2362
        %v2427 = vsel %vm2299, %v2235, %v2363
        %v2428 = vsel %vm2300, %v2236, %v2364
        %v2429 = vsel %vm2301, %v2237, %v2365
        %v2430 = vsel %vm2302, %v2238, %v2366
        %v2431 = vsel %vm2303, %v2239, %v2367
        %v2432 = vsel %vm2304, %v2240, %v2368
        %v2433 = vsel %vm2305, %v2241, %v2369
        %v2434 = vsel %vm2306, %v2242, %v2370
        %v2435 = vsel %vm2307, %v2243, %v2371
        %v2436 = vsel %vm2308, %v2244, %v2372
        %v2437 = vsel %vm2309, %v2245, %v2373
        %v2438 = vsel %vm2310, %v2246, %v2374
        %v2439 = vsel %vm2311, %v2247, %v2375
        %v2440 = vsel %vm2312, %v2248, %v2376
        %v2441 = vsel %vm2313, %v2249, %v2377
        %v2442 = vsel %vm2314, %v2250, %v2378
        %v2443 = vsel %vm2315, %v2251, %v2379
        %v2444 = vsel %vm2316, %v2252, %v2380
        %v2445 = vsel %vm2317, %v2253, %v2381
        %v2446 = vmul.f32 %v2382, 1.442695
        %v2447 = vpow.pop %v2446
        %v2448 = vmul.f32 %v2383, 1.442695
        %v2449 = vpow.pop %v2448
        %v2450 = vmul.f32 %v2384, 1.442695
        %v2451 = vpow.pop %v2450
        %v2452 = vmul.f32 %v2385, 1.442695
        %v2453 = vpow.pop %v2452
        %v2454 = vmul.f32 %v2386, 1.442695
        %v2455 = vpow.pop %v2454
        %v2456 = vmul.f32 %v2387, 1.442695
        %v2457 = vpow.pop %v2456
        %v2458 = vmul.f32 %v2388, 1.442695
        %v2459 = vpow.pop %v2458
        %v2460 = vmul.f32 %v2389, 1.442695
        %v2461 = vpow.pop %v2460
        %v2462 = vmul.f32 %v2390, 1.442695
        %v2463 = vpow.pop %v2462
        %v2464 = vmul.f32 %v2391, 1.442695
        %v2465 = vpow.pop %v2464
        %v2466 = vmul.f32 %v2392, 1.442695
        %v2467 = vpow.pop %v2466
        %v2468 = vmul.f32 %v2393, 1.442695
        %v2469 = vpow.pop %v2468
        %v2470 = vmul.f32 %v2394, 1.442695
        %v2471 = vpow.pop %v2470
        %v2472 = vmul.f32 %v2395, 1.442695
        %v2473 = vpow.pop %v2472
        %v2474 = vmul.f32 %v2396, 1.442695
        %v2475 = vpow.pop %v2474
        %v2476 = vmul.f32 %v2397, 1.442695
        %v2477 = vpow.pop %v2476
        %v2478 = vmul.f32 %v2398, 1.442695
        %v2479 = vpow.pop %v2478
        %v2480 = vmul.f32 %v2399, 1.442695
        %v2481 = vpow.pop %v2480
        %v2482 = vmul.f32 %v2400, 1.442695
        %v2483 = vpow.pop %v2482
        %v2484 = vmul.f32 %v2401, 1.442695
        %v2485 = vpow.pop %v2484
        %v2486 = vmul.f32 %v2402, 1.442695
        %v2487 = vpow.pop %v2486
        %v2488 = vmul.f32 %v2403, 1.442695
        %v2489 = vpow.pop %v2488
        %v2490 = vmul.f32 %v2404, 1.442695
        %v2491 = vpow.pop %v2490
        %v2492 = vmul.f32 %v2405, 1.442695
        %v2493 = vpow.pop %v2492
        %v2494 = vmul.f32 %v2406, 1.442695
        %v2495 = vpow.pop %v2494
        %v2496 = vmul.f32 %v2407, 1.442695
        %v2497 = vpow.pop %v2496
        %v2498 = vmul.f32 %v2408, 1.442695
        %v2499 = vpow.pop %v2498
        %v2500 = vmul.f32 %v2409, 1.442695
        %v2501 = vpow.pop %v2500
        %v2502 = vmul.f32 %v2410, 1.442695
        %v2503 = vpow.pop %v2502
        %v2504 = vmul.f32 %v2411, 1.442695
        %v2505 = vpow.pop %v2504
        %v2506 = vmul.f32 %v2412, 1.442695
        %v2507 = vpow.pop %v2506
        %v2508 = vmul.f32 %v2413, 1.442695
        %v2509 = vpow.pop %v2508
        %v2510 = vmul.f32 %v2414, 1.442695
        %v2511 = vpow.pop %v2510
        %v2512 = vmul.f32 %v2415, 1.442695
        %v2513 = vpow.pop %v2512
        %v2514 = vmul.f32 %v2416, 1.442695
        %v2515 = vpow.pop %v2514
        %v2516 = vmul.f32 %v2417, 1.442695
        %v2517 = vpow.pop %v2516
        %v2518 = vmul.f32 %v2418, 1.442695
        %v2519 = vpow.pop %v2518
        %v2520 = vmul.f32 %v2419, 1.442695
        %v2521 = vpow.pop %v2520
        %v2522 = vmul.f32 %v2420, 1.442695
        %v2523 = vpow.pop %v2522
        %v2524 = vmul.f32 %v2421, 1.442695
        %v2525 = vpow.pop %v2524
        %v2526 = vmul.f32 %v2422, 1.442695
        %v2527 = vpow.pop %v2526
        %v2528 = vmul.f32 %v2423, 1.442695
        %v2529 = vpow.pop %v2528
        %v2530 = vmul.f32 %v2424, 1.442695
        %v2531 = vpow.pop %v2530
        %v2532 = vmul.f32 %v2425, 1.442695
        %v2533 = vpow.pop %v2532
        %v2534 = vmul.f32 %v2426, 1.442695
        %v2535 = vpow.pop %v2534
        %v2536 = vmul.f32 %v2427, 1.442695
        %v2537 = vpow.pop %v2536
        %v2538 = vmul.f32 %v2428, 1.442695
        %v2539 = vpow.pop %v2538
        %v2540 = vmul.f32 %v2429, 1.442695
        %v2541 = vpow.pop %v2540
        %v2542 = vmul.f32 %v2430, 1.442695
        %v2543 = vpow.pop %v2542
        %v2544 = vmul.f32 %v2431, 1.442695
        %v2545 = vpow.pop %v2544
        %v2546 = vmul.f32 %v2432, 1.442695
        %v2547 = vpow.pop %v2546
        %v2548 = vmul.f32 %v2433, 1.442695
        %v2549 = vpow.pop %v2548
        %v2550 = vmul.f32 %v2434, 1.442695
        %v2551 = vpow.pop %v2550
        %v2552 = vmul.f32 %v2435, 1.442695
        %v2553 = vpow.pop %v2552
        %v2554 = vmul.f32 %v2436, 1.442695
        %v2555 = vpow.pop %v2554
        %v2556 = vmul.f32 %v2437, 1.442695
        %v2557 = vpow.pop %v2556
        %v2558 = vmul.f32 %v2438, 1.442695
        %v2559 = vpow.pop %v2558
        %v2560 = vmul.f32 %v2439, 1.442695
        %v2561 = vpow.pop %v2560
        %v2562 = vmul.f32 %v2440, 1.442695
        %v2563 = vpow.pop %v2562
        %v2564 = vmul.f32 %v2441, 1.442695
        %v2565 = vpow.pop %v2564
        %v2566 = vmul.f32 %v2442, 1.442695
        %v2567 = vpow.pop %v2566
        %v2568 = vmul.f32 %v2443, 1.442695
        %v2569 = vpow.pop %v2568
        %v2570 = vmul.f32 %v2444, 1.442695
        %v2571 = vpow.pop %v2570
        %v2572 = vmul.f32 %v2445, 1.442695
        %v2573 = vpow.pop %v2572
        %v2574 = vsel %vm1338, %v2447, 0.0
        %v2575 = vsel %vm1339, %v2449, 0.0
        %v2576 = vsel %vm1340, %v2451, 0.0
        %v2577 = vsel %vm1341, %v2453, 0.0
        %v2578 = vsel %vm1342, %v2455, 0.0
        %v2579 = vsel %vm1343, %v2457, 0.0
        %v2580 = vsel %vm1344, %v2459, 0.0
        %v2581 = vsel %vm1345, %v2461, 0.0
        %v2582 = vsel %vm1346, %v2463, 0.0
        %v2583 = vsel %vm1347, %v2465, 0.0
        %v2584 = vsel %vm1348, %v2467, 0.0
        %v2585 = vsel %vm1349, %v2469, 0.0
        %v2586 = vsel %vm1350, %v2471, 0.0
        %v2587 = vsel %vm1351, %v2473, 0.0
        %v2588 = vsel %vm1352, %v2475, 0.0
        %v2589 = vsel %vm1353, %v2477, 0.0
        %v2590 = vsel %vm1354, %v2479, 0.0
        %v2591 = vsel %vm1355, %v2481, 0.0
        %v2592 = vsel %vm1356, %v2483, 0.0
        %v2593 = vsel %vm1357, %v2485, 0.0
        %v2594 = vsel %vm1358, %v2487, 0.0
        %v2595 = vsel %vm1359, %v2489, 0.0
        %v2596 = vsel %vm1360, %v2491, 0.0
        %v2597 = vsel %vm1361, %v2493, 0.0
        %v2598 = vsel %vm1362, %v2495, 0.0
        %v2599 = vsel %vm1363, %v2497, 0.0
        %v2600 = vsel %vm1364, %v2499, 0.0
        %v2601 = vsel %vm1365, %v2501, 0.0
        %v2602 = vsel %vm1366, %v2503, 0.0
        %v2603 = vsel %vm1367, %v2505, 0.0
        %v2604 = vsel %vm1368, %v2507, 0.0
        %v2605 = vsel %vm1369, %v2509, 0.0
        %v2606 = vsel %vm1370, %v2511, 0.0
        %v2607 = vsel %vm1371, %v2513, 0.0
        %v2608 = vsel %vm1372, %v2515, 0.0
        %v2609 = vsel %vm1373, %v2517, 0.0
        %v2610 = vsel %vm1374, %v2519, 0.0
        %v2611 = vsel %vm1375, %v2521, 0.0
        %v2612 = vsel %vm1376, %v2523, 0.0
        %v2613 = vsel %vm1377, %v2525, 0.0
        %v2614 = vsel %vm1378, %v2527, 0.0
        %v2615 = vsel %vm1379, %v2529, 0.0
        %v2616 = vsel %vm1380, %v2531, 0.0
        %v2617 = vsel %vm1381, %v2533, 0.0
        %v2618 = vsel %vm1382, %v2535, 0.0
        %v2619 = vsel %vm1383, %v2537, 0.0
        %v2620 = vsel %vm1384, %v2539, 0.0
        %v2621 = vsel %vm1385, %v2541, 0.0
        %v2622 = vsel %vm1386, %v2543, 0.0
        %v2623 = vsel %vm1387, %v2545, 0.0
        %v2624 = vsel %vm1388, %v2547, 0.0
        %v2625 = vsel %vm1389, %v2549, 0.0
        %v2626 = vsel %vm1390, %v2551, 0.0
        %v2627 = vsel %vm1391, %v2553, 0.0
        %v2628 = vsel %vm1392, %v2555, 0.0
        %v2629 = vsel %vm1393, %v2557, 0.0
        %v2630 = vsel %vm1394, %v2559, 0.0
        %v2631 = vsel %vm1395, %v2561, 0.0
        %v2632 = vsel %vm1396, %v2563, 0.0
        %v2633 = vsel %vm1397, %v2565, 0.0
        %v2634 = vsel %vm1398, %v2567, 0.0
        %v2635 = vsel %vm1399, %v2569, 0.0
        %v2636 = vsel %vm1400, %v2571, 0.0
        %v2637 = vsel %vm1401, %v2573, 0.0
        %v2638 = vld [vmem:[#allocation3] sm:$0xff]
        %v2639 = vld [vmem:[#allocation3 + $0x8] sm:$0xff]
        %v2640 = vld [vmem:[#allocation3 + $0x10] sm:$0xff]
        %v2641 = vld [vmem:[#allocation3 + $0x18] sm:$0xff]
        %v2642 = vld [vmem:[#allocation3 + $0x20] sm:$0xff]
        %v2643 = vld [vmem:[#allocation3 + $0x28] sm:$0xff]
        %v2644 = vld [vmem:[#allocation3 + $0x30] sm:$0xff]
        %v2645 = vld [vmem:[#allocation3 + $0x38] sm:$0xff]
        %v2646 = vld [vmem:[#allocation3 + $0x40] sm:$0xff]
        %v2647 = vld [vmem:[#allocation3 + $0x48] sm:$0xff]
        %v2648 = vld [vmem:[#allocation3 + $0x50] sm:$0xff]
        %v2649 = vld [vmem:[#allocation3 + $0x58] sm:$0xff]
        %v2650 = vld [vmem:[#allocation3 + $0x60] sm:$0xff]
        %v2651 = vld [vmem:[#allocation3 + $0x68] sm:$0xff]
        %v2652 = vld [vmem:[#allocation3 + $0x70] sm:$0xff]
        %v2653 = vld [vmem:[#allocation3 + $0x78] sm:$0xff]
        %v2654 = vld [vmem:[#allocation3 + $0x80] sm:$0xff]
        %v2655 = vld [vmem:[#allocation3 + $0x88] sm:$0xff]
        %v2656 = vld [vmem:[#allocation3 + $0x90] sm:$0xff]
        %v2657 = vld [vmem:[#allocation3 + $0x98] sm:$0xff]
        %v2658 = vld [vmem:[#allocation3 + $0xa0] sm:$0xff]
        %v2659 = vld [vmem:[#allocation3 + $0xa8] sm:$0xff]
        %v2660 = vld [vmem:[#allocation3 + $0xb0] sm:$0xff]
        %v2661 = vld [vmem:[#allocation3 + $0xb8] sm:$0xff]
        %v2662 = vld [vmem:[#allocation3 + $0xc0] sm:$0xff]
        %v2663 = vld [vmem:[#allocation3 + $0xc8] sm:$0xff]
        %v2664 = vld [vmem:[#allocation3 + $0xd0] sm:$0xff]
        %v2665 = vld [vmem:[#allocation3 + $0xd8] sm:$0xff]
        %v2666 = vld [vmem:[#allocation3 + $0xe0] sm:$0xff]
        %v2667 = vld [vmem:[#allocation3 + $0xe8] sm:$0xff]
        %v2668 = vld [vmem:[#allocation3 + $0xf0] sm:$0xff]
        %v2669 = vld [vmem:[#allocation3 + $0xf8] sm:$0xff]
        %v2670 = vadd.f32 %v2574, %v2575
        %2671 = vadd.xlane.f32.xlu0 %v2670
        %v2672 = vpop.xlane.xlu0 %2671
        %v2673 = vadd.f32 %v2576, %v2577
        %2674 = vadd.xlane.f32.xlu0 %v2673
        %v2675 = vpop.xlane.xlu0 %2674
        %v2676 = vadd.f32 %v2578, %v2579
        %2677 = vadd.xlane.f32.xlu0 %v2676
        %v2678 = vpop.xlane.xlu0 %2677
        %v2679 = vadd.f32 %v2580, %v2581
        %2680 = vadd.xlane.f32.xlu0 %v2679
        %v2681 = vpop.xlane.xlu0 %2680
        %v2682 = vadd.f32 %v2582, %v2583
        %2683 = vadd.xlane.f32.xlu0 %v2682
        %v2684 = vpop.xlane.xlu0 %2683
        %v2685 = vadd.f32 %v2584, %v2585
        %2686 = vadd.xlane.f32.xlu0 %v2685
        %v2687 = vpop.xlane.xlu0 %2686
        %v2688 = vadd.f32 %v2586, %v2587
        %2689 = vadd.xlane.f32.xlu0 %v2688
        %v2690 = vpop.xlane.xlu0 %2689
        %v2691 = vadd.f32 %v2588, %v2589
        %2692 = vadd.xlane.f32.xlu0 %v2691
        %v2693 = vpop.xlane.xlu0 %2692
        %v2694 = vadd.f32 %v2590, %v2591
        %2695 = vadd.xlane.f32.xlu0 %v2694
        %v2696 = vpop.xlane.xlu0 %2695
        %v2697 = vadd.f32 %v2592, %v2593
        %2698 = vadd.xlane.f32.xlu0 %v2697
        %v2699 = vpop.xlane.xlu0 %2698
        %v2700 = vadd.f32 %v2594, %v2595
        %2701 = vadd.xlane.f32.xlu0 %v2700
        %v2702 = vpop.xlane.xlu0 %2701
        %v2703 = vadd.f32 %v2596, %v2597
        %2704 = vadd.xlane.f32.xlu0 %v2703
        %v2705 = vpop.xlane.xlu0 %2704
        %v2706 = vadd.f32 %v2598, %v2599
        %2707 = vadd.xlane.f32.xlu0 %v2706
        %v2708 = vpop.xlane.xlu0 %2707
        %v2709 = vadd.f32 %v2600, %v2601
        %2710 = vadd.xlane.f32.xlu0 %v2709
        %v2711 = vpop.xlane.xlu0 %2710
        %v2712 = vadd.f32 %v2602, %v2603
        %2713 = vadd.xlane.f32.xlu0 %v2712
        %v2714 = vpop.xlane.xlu0 %2713
        %v2715 = vadd.f32 %v2604, %v2605
        %2716 = vadd.xlane.f32.xlu0 %v2715
        %v2717 = vpop.xlane.xlu0 %2716
        %v2718 = vadd.f32 %v2606, %v2607
        %2719 = vadd.xlane.f32.xlu0 %v2718
        %v2720 = vpop.xlane.xlu0 %2719
        %v2721 = vadd.f32 %v2608, %v2609
        %2722 = vadd.xlane.f32.xlu0 %v2721
        %v2723 = vpop.xlane.xlu0 %2722
        %v2724 = vadd.f32 %v2610, %v2611
        %2725 = vadd.xlane.f32.xlu0 %v2724
        %v2726 = vpop.xlane.xlu0 %2725
        %v2727 = vadd.f32 %v2612, %v2613
        %2728 = vadd.xlane.f32.xlu0 %v2727
        %v2729 = vpop.xlane.xlu0 %2728
        %v2730 = vadd.f32 %v2614, %v2615
        %2731 = vadd.xlane.f32.xlu0 %v2730
        %v2732 = vpop.xlane.xlu0 %2731
        %v2733 = vadd.f32 %v2616, %v2617
        %2734 = vadd.xlane.f32.xlu0 %v2733
        %v2735 = vpop.xlane.xlu0 %2734
        %v2736 = vadd.f32 %v2618, %v2619
        %2737 = vadd.xlane.f32.xlu0 %v2736
        %v2738 = vpop.xlane.xlu0 %2737
        %v2739 = vadd.f32 %v2620, %v2621
        %2740 = vadd.xlane.f32.xlu0 %v2739
        %v2741 = vpop.xlane.xlu0 %2740
        %v2742 = vadd.f32 %v2622, %v2623
        %2743 = vadd.xlane.f32.xlu0 %v2742
        %v2744 = vpop.xlane.xlu0 %2743
        %v2745 = vadd.f32 %v2624, %v2625
        %2746 = vadd.xlane.f32.xlu0 %v2745
        %v2747 = vpop.xlane.xlu0 %2746
        %v2748 = vadd.f32 %v2626, %v2627
        %2749 = vadd.xlane.f32.xlu0 %v2748
        %v2750 = vpop.xlane.xlu0 %2749
        %v2751 = vadd.f32 %v2628, %v2629
        %2752 = vadd.xlane.f32.xlu0 %v2751
        %v2753 = vpop.xlane.xlu0 %2752
        %v2754 = vadd.f32 %v2630, %v2631
        %2755 = vadd.xlane.f32.xlu0 %v2754
        %v2756 = vpop.xlane.xlu0 %2755
        %v2757 = vadd.f32 %v2632, %v2633
        %2758 = vadd.xlane.f32.xlu0 %v2757
        %v2759 = vpop.xlane.xlu0 %2758
        %v2760 = vadd.f32 %v2634, %v2635
        %2761 = vadd.xlane.f32.xlu0 %v2760
        %v2762 = vpop.xlane.xlu0 %2761
        %v2763 = vadd.f32 %v2636, %v2637
        %2764 = vadd.xlane.f32.xlu0 %v2763
        %v2765 = vpop.xlane.xlu0 %2764
        %v2766 = vadd.f32 %v2638, %v2672
        %v2767 = vadd.f32 %v2639, %v2675
        %v2768 = vadd.f32 %v2640, %v2678
        %v2769 = vadd.f32 %v2641, %v2681
        %v2770 = vadd.f32 %v2642, %v2684
        %v2771 = vadd.f32 %v2643, %v2687
        %v2772 = vadd.f32 %v2644, %v2690
        %v2773 = vadd.f32 %v2645, %v2693
        %v2774 = vadd.f32 %v2646, %v2696
        %v2775 = vadd.f32 %v2647, %v2699
        %v2776 = vadd.f32 %v2648, %v2702
        %v2777 = vadd.f32 %v2649, %v2705
        %v2778 = vadd.f32 %v2650, %v2708
        %v2779 = vadd.f32 %v2651, %v2711
        %v2780 = vadd.f32 %v2652, %v2714
        %v2781 = vadd.f32 %v2653, %v2717
        %v2782 = vadd.f32 %v2654, %v2720
        %v2783 = vadd.f32 %v2655, %v2723
        %v2784 = vadd.f32 %v2656, %v2726
        %v2785 = vadd.f32 %v2657, %v2729
        %v2786 = vadd.f32 %v2658, %v2732
        %v2787 = vadd.f32 %v2659, %v2735
        %v2788 = vadd.f32 %v2660, %v2738
        %v2789 = vadd.f32 %v2661, %v2741
        %v2790 = vadd.f32 %v2662, %v2744
        %v2791 = vadd.f32 %v2663, %v2747
        %v2792 = vadd.f32 %v2664, %v2750
        %v2793 = vadd.f32 %v2665, %v2753
        %v2794 = vadd.f32 %v2666, %v2756
        %v2795 = vadd.f32 %v2667, %v2759
        %v2796 = vadd.f32 %v2668, %v2762
        %v2797 = vadd.f32 %v2669, %v2765
        %vm2798 = vcmask 523520
        %2799 = vst.msk [vmem:[#allocation3] sm:$0xff] %vm2798, %v2766
        %2800 = vst.msk [vmem:[#allocation3 + $0x8] sm:$0xff] %vm2798, %v2767
        %2801 = vst.msk [vmem:[#allocation3 + $0x10] sm:$0xff] %vm2798, %v2768
        %2802 = vst.msk [vmem:[#allocation3 + $0x18] sm:$0xff] %vm2798, %v2769
        %2803 = vst.msk [vmem:[#allocation3 + $0x20] sm:$0xff] %vm2798, %v2770
        %2804 = vst.msk [vmem:[#allocation3 + $0x28] sm:$0xff] %vm2798, %v2771
        %2805 = vst.msk [vmem:[#allocation3 + $0x30] sm:$0xff] %vm2798, %v2772
        %2806 = vst.msk [vmem:[#allocation3 + $0x38] sm:$0xff] %vm2798, %v2773
        %2807 = vst.msk [vmem:[#allocation3 + $0x40] sm:$0xff] %vm2798, %v2774
        %2808 = vst.msk [vmem:[#allocation3 + $0x48] sm:$0xff] %vm2798, %v2775
        %2809 = vst.msk [vmem:[#allocation3 + $0x50] sm:$0xff] %vm2798, %v2776
        %2810 = vst.msk [vmem:[#allocation3 + $0x58] sm:$0xff] %vm2798, %v2777
        %2811 = vst.msk [vmem:[#allocation3 + $0x60] sm:$0xff] %vm2798, %v2778
        %2812 = vst.msk [vmem:[#allocation3 + $0x68] sm:$0xff] %vm2798, %v2779
        %2813 = vst.msk [vmem:[#allocation3 + $0x70] sm:$0xff] %vm2798, %v2780
        %2814 = vst.msk [vmem:[#allocation3 + $0x78] sm:$0xff] %vm2798, %v2781
        %2815 = vst.msk [vmem:[#allocation3 + $0x80] sm:$0xff] %vm2798, %v2782
        %2816 = vst.msk [vmem:[#allocation3 + $0x88] sm:$0xff] %vm2798, %v2783
        %2817 = vst.msk [vmem:[#allocation3 + $0x90] sm:$0xff] %vm2798, %v2784
        %2818 = vst.msk [vmem:[#allocation3 + $0x98] sm:$0xff] %vm2798, %v2785
        %2819 = vst.msk [vmem:[#allocation3 + $0xa0] sm:$0xff] %vm2798, %v2786
        %2820 = vst.msk [vmem:[#allocation3 + $0xa8] sm:$0xff] %vm2798, %v2787
        %2821 = vst.msk [vmem:[#allocation3 + $0xb0] sm:$0xff] %vm2798, %v2788
        %2822 = vst.msk [vmem:[#allocation3 + $0xb8] sm:$0xff] %vm2798, %v2789
        %2823 = vst.msk [vmem:[#allocation3 + $0xc0] sm:$0xff] %vm2798, %v2790
        %2824 = vst.msk [vmem:[#allocation3 + $0xc8] sm:$0xff] %vm2798, %v2791
        %2825 = vst.msk [vmem:[#allocation3 + $0xd0] sm:$0xff] %vm2798, %v2792
        %2826 = vst.msk [vmem:[#allocation3 + $0xd8] sm:$0xff] %vm2798, %v2793
        %2827 = vst.msk [vmem:[#allocation3 + $0xe0] sm:$0xff] %vm2798, %v2794
        %2828 = vst.msk [vmem:[#allocation3 + $0xe8] sm:$0xff] %vm2798, %v2795
        %2829 = vst.msk [vmem:[#allocation3 + $0xf0] sm:$0xff] %vm2798, %v2796
        %2830 = vst.msk [vmem:[#allocation3 + $0xf8] sm:$0xff] %vm2798, %v2797
        %v2831 = vld [vmem:[#allocation2] sm:$0xff]
        %v2832 = vld [vmem:[#allocation2 + $0x8] sm:$0xff]
        %v2833 = vld [vmem:[#allocation2 + $0x10] sm:$0xff]
        %v2834 = vld [vmem:[#allocation2 + $0x18] sm:$0xff]
        %v2835 = vld [vmem:[#allocation2 + $0x20] sm:$0xff]
        %v2836 = vld [vmem:[#allocation2 + $0x28] sm:$0xff]
        %v2837 = vld [vmem:[#allocation2 + $0x30] sm:$0xff]
        %v2838 = vld [vmem:[#allocation2 + $0x38] sm:$0xff]
        %v2839 = vld [vmem:[#allocation2 + $0x40] sm:$0xff]
        %v2840 = vld [vmem:[#allocation2 + $0x48] sm:$0xff]
        %v2841 = vld [vmem:[#allocation2 + $0x50] sm:$0xff]
        %v2842 = vld [vmem:[#allocation2 + $0x58] sm:$0xff]
        %v2843 = vld [vmem:[#allocation2 + $0x60] sm:$0xff]
        %v2844 = vld [vmem:[#allocation2 + $0x68] sm:$0xff]
        %v2845 = vld [vmem:[#allocation2 + $0x70] sm:$0xff]
        %v2846 = vld [vmem:[#allocation2 + $0x78] sm:$0xff]
        %v2847 = vld [vmem:[#allocation2 + $0x80] sm:$0xff]
        %v2848 = vld [vmem:[#allocation2 + $0x88] sm:$0xff]
        %v2849 = vld [vmem:[#allocation2 + $0x90] sm:$0xff]
        %v2850 = vld [vmem:[#allocation2 + $0x98] sm:$0xff]
        %v2851 = vld [vmem:[#allocation2 + $0xa0] sm:$0xff]
        %v2852 = vld [vmem:[#allocation2 + $0xa8] sm:$0xff]
        %v2853 = vld [vmem:[#allocation2 + $0xb0] sm:$0xff]
        %v2854 = vld [vmem:[#allocation2 + $0xb8] sm:$0xff]
        %v2855 = vld [vmem:[#allocation2 + $0xc0] sm:$0xff]
        %v2856 = vld [vmem:[#allocation2 + $0xc8] sm:$0xff]
        %v2857 = vld [vmem:[#allocation2 + $0xd0] sm:$0xff]
        %v2858 = vld [vmem:[#allocation2 + $0xd8] sm:$0xff]
        %v2859 = vld [vmem:[#allocation2 + $0xe0] sm:$0xff]
        %v2860 = vld [vmem:[#allocation2 + $0xe8] sm:$0xff]
        %v2861 = vld [vmem:[#allocation2 + $0xf0] sm:$0xff]
        %v2862 = vld [vmem:[#allocation2 + $0xf8] sm:$0xff]
        %v2863 = vpack.c.bf16 %v2576, %v2574
        %v2864 = vpack.c.bf16 %v2577, %v2575
        %v2865 = vpack.c.bf16 %v2580, %v2578
        %v2866 = vpack.c.bf16 %v2581, %v2579
        %v2867 = vpack.c.bf16 %v2584, %v2582
        %v2868 = vpack.c.bf16 %v2585, %v2583
        %v2869 = vpack.c.bf16 %v2588, %v2586
        %v2870 = vpack.c.bf16 %v2589, %v2587
        %v2871 = vpack.c.bf16 %v2592, %v2590
        %v2872 = vpack.c.bf16 %v2593, %v2591
        %v2873 = vpack.c.bf16 %v2596, %v2594
        %v2874 = vpack.c.bf16 %v2597, %v2595
        %v2875 = vpack.c.bf16 %v2600, %v2598
        %v2876 = vpack.c.bf16 %v2601, %v2599
        %v2877 = vpack.c.bf16 %v2604, %v2602
        %v2878 = vpack.c.bf16 %v2605, %v2603
        %v2879 = vpack.c.bf16 %v2608, %v2606
        %v2880 = vpack.c.bf16 %v2609, %v2607
        %v2881 = vpack.c.bf16 %v2612, %v2610
        %v2882 = vpack.c.bf16 %v2613, %v2611
        %v2883 = vpack.c.bf16 %v2616, %v2614
        %v2884 = vpack.c.bf16 %v2617, %v2615
        %v2885 = vpack.c.bf16 %v2620, %v2618
        %v2886 = vpack.c.bf16 %v2621, %v2619
        %v2887 = vpack.c.bf16 %v2624, %v2622
        %v2888 = vpack.c.bf16 %v2625, %v2623
        %v2889 = vpack.c.bf16 %v2628, %v2626
        %v2890 = vpack.c.bf16 %v2629, %v2627
        %v2891 = vpack.c.bf16 %v2632, %v2630
        %v2892 = vpack.c.bf16 %v2633, %v2631
        %v2893 = vpack.c.bf16 %v2636, %v2634
        %v2894 = vpack.c.bf16 %v2637, %v2635
        %2895 = vrot.lane.b32.xlu0 %v1787, 96
        %v2896 = vpop.permute.xlu0 %2895
        %2897 = vrot.lane.b32.xlu0 %v1788, 96
        %v2898 = vpop.permute.xlu0 %2897
        %2899 = vrot.lane.b32.xlu0 %v1789, 96
        %v2900 = vpop.permute.xlu0 %2899
        %2901 = vrot.lane.b32.xlu0 %v1790, 96
        %v2902 = vpop.permute.xlu0 %2901
        %2903 = vrot.lane.b32.xlu0 %v1791, 96
        %v2904 = vpop.permute.xlu0 %2903
        %2905 = vrot.lane.b32.xlu0 %v1792, 96
        %v2906 = vpop.permute.xlu0 %2905
        %2907 = vrot.lane.b32.xlu0 %v1793, 96
        %v2908 = vpop.permute.xlu0 %2907
        %2909 = vrot.lane.b32.xlu0 %v1794, 96
        %v2910 = vpop.permute.xlu0 %2909
        %2911 = vrot.lane.b32.xlu0 %v1795, 96
        %v2912 = vpop.permute.xlu0 %2911
        %2913 = vrot.lane.b32.xlu0 %v1796, 96
        %v2914 = vpop.permute.xlu0 %2913
        %2915 = vrot.lane.b32.xlu0 %v1797, 96
        %v2916 = vpop.permute.xlu0 %2915
        %2917 = vrot.lane.b32.xlu0 %v1798, 96
        %v2918 = vpop.permute.xlu0 %2917
        %2919 = vrot.lane.b32.xlu0 %v1799, 96
        %v2920 = vpop.permute.xlu0 %2919
        %2921 = vrot.lane.b32.xlu0 %v1800, 96
        %v2922 = vpop.permute.xlu0 %2921
        %2923 = vrot.lane.b32.xlu0 %v1801, 96
        %v2924 = vpop.permute.xlu0 %2923
        %2925 = vrot.lane.b32.xlu0 %v1802, 96
        %v2926 = vpop.permute.xlu0 %2925
        %2943 = vmatprep.subr.bf16.mxu0 0
        %2944 = vmatpush1.bf16.msra.mxu0 %v2896
        %2945 = vmatprep.subr.bf16.mxu0 0
        %2946 = vmatpush1.bf16.msra.mxu0 %v2898
        %2947 = vmatprep.subr.bf16.mxu0 0
        %2948 = vmatpush1.bf16.msra.mxu0 %v2900
        %2949 = vmatprep.subr.bf16.mxu0 0
        %2950 = vmatpush1.bf16.msra.mxu0 %v2902
        %2951 = vmatprep.subr.bf16.mxu0 0
        %2952 = vmatpush1.bf16.msra.mxu0 %v2904
        %2953 = vmatprep.subr.bf16.mxu0 0
        %2954 = vmatpush1.bf16.msra.mxu0 %v2906
        %2955 = vmatprep.subr.bf16.mxu0 0
        %2956 = vmatpush1.bf16.msra.mxu0 %v2908
        %2957 = vmatprep.subr.bf16.mxu0 0
        %2958 = vmatpush1.bf16.msra.mxu0 %v2910
        %2959 = vmatprep.subr.bf16.mxu0 0
        %2960 = vmatpush1.bf16.msra.mxu0 %v2912
        %2961 = vmatprep.subr.bf16.mxu0 0
        %2962 = vmatpush1.bf16.msra.mxu0 %v2914
        %2963 = vmatprep.subr.bf16.mxu0 0
        %2964 = vmatpush1.bf16.msra.mxu0 %v2916
        %2965 = vmatprep.subr.bf16.mxu0 0
        %2966 = vmatpush1.bf16.msra.mxu0 %v2918
        %2967 = vmatprep.subr.bf16.mxu0 0
        %2968 = vmatpush1.bf16.msra.mxu0 %v2920
        %2969 = vmatprep.subr.bf16.mxu0 0
        %2970 = vmatpush1.bf16.msra.mxu0 %v2922
        %2971 = vmatprep.subr.bf16.mxu0 0
        %2972 = vmatpush1.bf16.msra.mxu0 %v2924
        %2973 = vmatprep.subr.bf16.mxu0 0
        %2974 = vmatpush1.bf16.msra.mxu0 %v2926
        %2975 = vmatprep.mubr.bf16.mxu0 %v2864
        %2976 = vmatmul.mubr.bf16.gmra.mrb[0].mxu0 %v2863
        %v2977 = vpop.f32.mrb[0].mxu0
        %v2978 = vadd.f32 0.0, %v2977
        %v2979 = vpop.f32.mrb[0].mxu0
        %v2980 = vpop.f32.mrb[0].mxu0
        %v2981 = vadd.f32 0.0, %v2980
        %v2982 = vpop.f32.mrb[0].mxu0
        %2983 = vmatprep.mubr.bf16.mxu0 %v2866
        %2984 = vmatmul.mubr.bf16.gmra.mrb[0].mxu0 %v2865
        %v2985 = vpop.f32.mrb[0].mxu0
        %v2986 = vadd.f32 0.0, %v2985
        %v2987 = vpop.f32.mrb[0].mxu0
        %v2988 = vpop.f32.mrb[0].mxu0
        %v2989 = vadd.f32 0.0, %v2988
        %v2990 = vpop.f32.mrb[0].mxu0
        %2991 = vmatprep.mubr.bf16.mxu0 %v2868
        %2992 = vmatmul.mubr.bf16.gmra.mrb[0].mxu0 %v2867
        %v2993 = vpop.f32.mrb[0].mxu0
        %v2994 = vadd.f32 0.0, %v2993
        %v2995 = vpop.f32.mrb[0].mxu0
        %v2996 = vpop.f32.mrb[0].mxu0
        %v2997 = vadd.f32 0.0, %v2996
        %v2998 = vpop.f32.mrb[0].mxu0
        %2999 = vmatprep.mubr.bf16.mxu0 %v2870
        %3000 = vmatmul.mubr.bf16.gmra.mrb[0].mxu0 %v2869
        %v3001 = vpop.f32.mrb[0].mxu0
        %v3002 = vadd.f32 0.0, %v3001
        %v3003 = vpop.f32.mrb[0].mxu0
        %v3004 = vpop.f32.mrb[0].mxu0
        %v3005 = vadd.f32 0.0, %v3004
        %v3006 = vpop.f32.mrb[0].mxu0
        %3007 = vmatprep.mubr.bf16.mxu0 %v2872
        %3008 = vmatmul.mubr.bf16.gmra.mrb[0].mxu0 %v2871
        %v3009 = vpop.f32.mrb[0].mxu0
        %v3010 = vadd.f32 0.0, %v3009
        %v3011 = vpop.f32.mrb[0].mxu0
        %v3012 = vpop.f32.mrb[0].mxu0
        %v3013 = vadd.f32 0.0, %v3012
        %v3014 = vpop.f32.mrb[0].mxu0
        %3015 = vmatprep.mubr.bf16.mxu0 %v2874
        %3016 = vmatmul.mubr.bf16.gmra.mrb[0].mxu0 %v2873
        %v3017 = vpop.f32.mrb[0].mxu0
        %v3018 = vadd.f32 0.0, %v3017
        %v3019 = vpop.f32.mrb[0].mxu0
        %v3020 = vpop.f32.mrb[0].mxu0
        %v3021 = vadd.f32 0.0, %v3020
        %v3022 = vpop.f32.mrb[0].mxu0
        %3023 = vmatprep.mubr.bf16.mxu0 %v2876
        %3024 = vmatmul.mubr.bf16.gmra.mrb[0].mxu0 %v2875
        %v3025 = vpop.f32.mrb[0].mxu0
        %v3026 = vadd.f32 0.0, %v3025
        %v3027 = vpop.f32.mrb[0].mxu0
        %v3028 = vpop.f32.mrb[0].mxu0
        %v3029 = vadd.f32 0.0, %v3028
        %v3030 = vpop.f32.mrb[0].mxu0
        %3031 = vmatprep.mubr.bf16.mxu0 %v2878
        %3032 = vmatmul.mubr.bf16.gmra.mrb[0].mxu0 %v2877
        %v3033 = vpop.f32.mrb[0].mxu0
        %v3034 = vadd.f32 0.0, %v3033
        %v3035 = vpop.f32.mrb[0].mxu0
        %v3036 = vpop.f32.mrb[0].mxu0
        %v3037 = vadd.f32 0.0, %v3036
        %v3038 = vpop.f32.mrb[0].mxu0
        %3039 = vmatprep.mubr.bf16.mxu0 %v2880
        %3040 = vmatmul.mubr.bf16.gmra.mrb[0].mxu0 %v2879
        %v3041 = vpop.f32.mrb[0].mxu0
        %v3042 = vadd.f32 0.0, %v3041
        %v3043 = vpop.f32.mrb[0].mxu0
        %v3044 = vpop.f32.mrb[0].mxu0
        %v3045 = vadd.f32 0.0, %v3044
        %v3046 = vpop.f32.mrb[0].mxu0
        %3047 = vmatprep.mubr.bf16.mxu0 %v2882
        %3048 = vmatmul.mubr.bf16.gmra.mrb[0].mxu0 %v2881
        %v3049 = vpop.f32.mrb[0].mxu0
        %v3050 = vadd.f32 0.0, %v3049
        %v3051 = vpop.f32.mrb[0].mxu0
        %v3052 = vpop.f32.mrb[0].mxu0
        %v3053 = vadd.f32 0.0, %v3052
        %v3054 = vpop.f32.mrb[0].mxu0
        %3055 = vmatprep.mubr.bf16.mxu0 %v2884
        %3056 = vmatmul.mubr.bf16.gmra.mrb[0].mxu0 %v2883
        %v3057 = vpop.f32.mrb[0].mxu0
        %v3058 = vadd.f32 0.0, %v3057
        %v3059 = vpop.f32.mrb[0].mxu0
        %v3060 = vpop.f32.mrb[0].mxu0
        %v3061 = vadd.f32 0.0, %v3060
        %v3062 = vpop.f32.mrb[0].mxu0
        %3063 = vmatprep.mubr.bf16.mxu0 %v2886
        %3064 = vmatmul.mubr.bf16.gmra.mrb[0].mxu0 %v2885
        %v3065 = vpop.f32.mrb[0].mxu0
        %v3066 = vadd.f32 0.0, %v3065
        %v3067 = vpop.f32.mrb[0].mxu0
        %v3068 = vpop.f32.mrb[0].mxu0
        %v3069 = vadd.f32 0.0, %v3068
        %v3070 = vpop.f32.mrb[0].mxu0
        %3071 = vmatprep.mubr.bf16.mxu0 %v2888
        %3072 = vmatmul.mubr.bf16.gmra.mrb[0].mxu0 %v2887
        %v3073 = vpop.f32.mrb[0].mxu0
        %v3074 = vadd.f32 0.0, %v3073
        %v3075 = vpop.f32.mrb[0].mxu0
        %v3076 = vpop.f32.mrb[0].mxu0
        %v3077 = vadd.f32 0.0, %v3076
        %v3078 = vpop.f32.mrb[0].mxu0
        %3079 = vmatprep.mubr.bf16.mxu0 %v2890
        %3080 = vmatmul.mubr.bf16.gmra.mrb[0].mxu0 %v2889
        %v3081 = vpop.f32.mrb[0].mxu0
        %v3082 = vadd.f32 0.0, %v3081
        %v3083 = vpop.f32.mrb[0].mxu0
        %v3084 = vpop.f32.mrb[0].mxu0
        %v3085 = vadd.f32 0.0, %v3084
        %v3086 = vpop.f32.mrb[0].mxu0
        %3087 = vmatprep.mubr.bf16.mxu0 %v2892
        %3088 = vmatmul.mubr.bf16.gmra.mrb[0].mxu0 %v2891
        %v3089 = vpop.f32.mrb[0].mxu0
        %v3090 = vadd.f32 0.0, %v3089
        %v3091 = vpop.f32.mrb[0].mxu0
        %v3092 = vpop.f32.mrb[0].mxu0
        %v3093 = vadd.f32 0.0, %v3092
        %v3094 = vpop.f32.mrb[0].mxu0
        %3095 = vmatprep.mubr.bf16.mxu0 %v2894
        %3096 = vmatmul.mubr.bf16.gmra.mrb[0].mxu0 %v2893
        %v3097 = vpop.f32.mrb[0].mxu0
        %v3098 = vadd.f32 0.0, %v3097
        %v3099 = vpop.f32.mrb[0].mxu0
        %v3100 = vpop.f32.mrb[0].mxu0
        %v3101 = vadd.f32 0.0, %v3100
        %v3102 = vpop.f32.mrb[0].mxu0
        %3103 = vdwg.mxu0
        %3136 = vrot.lane.b32.xlu0 %v2978, 32
        %v3137 = vpop.permute.xlu0 %3136
        %3138 = vrot.lane.b32.xlu0 %v2981, 32
        %v3139 = vpop.permute.xlu0 %3138
        %3140 = vrot.lane.b32.xlu0 %v2986, 32
        %v3141 = vpop.permute.xlu0 %3140
        %3142 = vrot.lane.b32.xlu0 %v2989, 32
        %v3143 = vpop.permute.xlu0 %3142
        %3144 = vrot.lane.b32.xlu0 %v2994, 32
        %v3145 = vpop.permute.xlu0 %3144
        %3146 = vrot.lane.b32.xlu0 %v2997, 32
        %v3147 = vpop.permute.xlu0 %3146
        %3148 = vrot.lane.b32.xlu0 %v3002, 32
        %v3149 = vpop.permute.xlu0 %3148
        %3150 = vrot.lane.b32.xlu0 %v3005, 32
        %v3151 = vpop.permute.xlu0 %3150
        %3152 = vrot.lane.b32.xlu0 %v3010, 32
        %v3153 = vpop.permute.xlu0 %3152
        %3154 = vrot.lane.b32.xlu0 %v3013, 32
        %v3155 = vpop.permute.xlu0 %3154
        %3156 = vrot.lane.b32.xlu0 %v3018, 32
        %v3157 = vpop.permute.xlu0 %3156
        %3158 = vrot.lane.b32.xlu0 %v3021, 32
        %v3159 = vpop.permute.xlu0 %3158
        %3160 = vrot.lane.b32.xlu0 %v3026, 32
        %v3161 = vpop.permute.xlu0 %3160
        %3162 = vrot.lane.b32.xlu0 %v3029, 32
        %v3163 = vpop.permute.xlu0 %3162
        %3164 = vrot.lane.b32.xlu0 %v3034, 32
        %v3165 = vpop.permute.xlu0 %3164
        %3166 = vrot.lane.b32.xlu0 %v3037, 32
        %v3167 = vpop.permute.xlu0 %3166
        %3168 = vrot.lane.b32.xlu0 %v3042, 32
        %v3169 = vpop.permute.xlu0 %3168
        %3170 = vrot.lane.b32.xlu0 %v3045, 32
        %v3171 = vpop.permute.xlu0 %3170
        %3172 = vrot.lane.b32.xlu0 %v3050, 32
        %v3173 = vpop.permute.xlu0 %3172
        %3174 = vrot.lane.b32.xlu0 %v3053, 32
        %v3175 = vpop.permute.xlu0 %3174
        %3176 = vrot.lane.b32.xlu0 %v3058, 32
        %v3177 = vpop.permute.xlu0 %3176
        %3178 = vrot.lane.b32.xlu0 %v3061, 32
        %v3179 = vpop.permute.xlu0 %3178
        %3180 = vrot.lane.b32.xlu0 %v3066, 32
        %v3181 = vpop.permute.xlu0 %3180
        %3182 = vrot.lane.b32.xlu0 %v3069, 32
        %v3183 = vpop.permute.xlu0 %3182
        %3184 = vrot.lane.b32.xlu0 %v3074, 32
        %v3185 = vpop.permute.xlu0 %3184
        %3186 = vrot.lane.b32.xlu0 %v3077, 32
        %v3187 = vpop.permute.xlu0 %3186
        %3188 = vrot.lane.b32.xlu0 %v3082, 32
        %v3189 = vpop.permute.xlu0 %3188
        %3190 = vrot.lane.b32.xlu0 %v3085, 32
        %v3191 = vpop.permute.xlu0 %3190
        %3192 = vrot.lane.b32.xlu0 %v3090, 32
        %v3193 = vpop.permute.xlu0 %3192
        %3194 = vrot.lane.b32.xlu0 %v3093, 32
        %v3195 = vpop.permute.xlu0 %3194
        %3196 = vrot.lane.b32.xlu0 %v3098, 32
        %v3197 = vpop.permute.xlu0 %3196
        %3198 = vrot.lane.b32.xlu0 %v3101, 32
        %v3199 = vpop.permute.xlu0 %3198
        %v3232 = vadd.f32 %v2831, %v3137
        %v3233 = vadd.f32 %v2832, %v3139
        %v3234 = vadd.f32 %v2833, %v3141
        %v3235 = vadd.f32 %v2834, %v3143
        %v3236 = vadd.f32 %v2835, %v3145
        %v3237 = vadd.f32 %v2836, %v3147
        %v3238 = vadd.f32 %v2837, %v3149
        %v3239 = vadd.f32 %v2838, %v3151
        %v3240 = vadd.f32 %v2839, %v3153
        %v3241 = vadd.f32 %v2840, %v3155
        %v3242 = vadd.f32 %v2841, %v3157
        %v3243 = vadd.f32 %v2842, %v3159
        %v3244 = vadd.f32 %v2843, %v3161
        %v3245 = vadd.f32 %v2844, %v3163
        %v3246 = vadd.f32 %v2845, %v3165
        %v3247 = vadd.f32 %v2846, %v3167
        %v3248 = vadd.f32 %v2847, %v3169
        %v3249 = vadd.f32 %v2848, %v3171
        %v3250 = vadd.f32 %v2849, %v3173
        %v3251 = vadd.f32 %v2850, %v3175
        %v3252 = vadd.f32 %v2851, %v3177
        %v3253 = vadd.f32 %v2852, %v3179
        %v3254 = vadd.f32 %v2853, %v3181
        %v3255 = vadd.f32 %v2854, %v3183
        %v3256 = vadd.f32 %v2855, %v3185
        %v3257 = vadd.f32 %v2856, %v3187
        %v3258 = vadd.f32 %v2857, %v3189
        %v3259 = vadd.f32 %v2858, %v3191
        %v3260 = vadd.f32 %v2859, %v3193
        %v3261 = vadd.f32 %v2860, %v3195
        %v3262 = vadd.f32 %v2861, %v3197
        %v3263 = vadd.f32 %v2862, %v3199
        %3264 = vst.msk [vmem:[#allocation2] sm:$0xff] %vm2798, %v3232
        %3265 = vst.msk [vmem:[#allocation2 + $0x8] sm:$0xff] %vm2798, %v3233
        %3266 = vst.msk [vmem:[#allocation2 + $0x10] sm:$0xff] %vm2798, %v3234
        %3267 = vst.msk [vmem:[#allocation2 + $0x18] sm:$0xff] %vm2798, %v3235
        %3268 = vst.msk [vmem:[#allocation2 + $0x20] sm:$0xff] %vm2798, %v3236
        %3269 = vst.msk [vmem:[#allocation2 + $0x28] sm:$0xff] %vm2798, %v3237
        %3270 = vst.msk [vmem:[#allocation2 + $0x30] sm:$0xff] %vm2798, %v3238
        %3271 = vst.msk [vmem:[#allocation2 + $0x38] sm:$0xff] %vm2798, %v3239
        %3272 = vst.msk [vmem:[#allocation2 + $0x40] sm:$0xff] %vm2798, %v3240
        %3273 = vst.msk [vmem:[#allocation2 + $0x48] sm:$0xff] %vm2798, %v3241
        %3274 = vst.msk [vmem:[#allocation2 + $0x50] sm:$0xff] %vm2798, %v3242
        %3275 = vst.msk [vmem:[#allocation2 + $0x58] sm:$0xff] %vm2798, %v3243
        %3276 = vst.msk [vmem:[#allocation2 + $0x60] sm:$0xff] %vm2798, %v3244
        %3277 = vst.msk [vmem:[#allocation2 + $0x68] sm:$0xff] %vm2798, %v3245
        %3278 = vst.msk [vmem:[#allocation2 + $0x70] sm:$0xff] %vm2798, %v3246
        %3279 = vst.msk [vmem:[#allocation2 + $0x78] sm:$0xff] %vm2798, %v3247
        %3280 = vst.msk [vmem:[#allocation2 + $0x80] sm:$0xff] %vm2798, %v3248
        %3281 = vst.msk [vmem:[#allocation2 + $0x88] sm:$0xff] %vm2798, %v3249
        %3282 = vst.msk [vmem:[#allocation2 + $0x90] sm:$0xff] %vm2798, %v3250
        %3283 = vst.msk [vmem:[#allocation2 + $0x98] sm:$0xff] %vm2798, %v3251
        %3284 = vst.msk [vmem:[#allocation2 + $0xa0] sm:$0xff] %vm2798, %v3252
        %3285 = vst.msk [vmem:[#allocation2 + $0xa8] sm:$0xff] %vm2798, %v3253
        %3286 = vst.msk [vmem:[#allocation2 + $0xb0] sm:$0xff] %vm2798, %v3254
        %3287 = vst.msk [vmem:[#allocation2 + $0xb8] sm:$0xff] %vm2798, %v3255
        %3288 = vst.msk [vmem:[#allocation2 + $0xc0] sm:$0xff] %vm2798, %v3256
        %3289 = vst.msk [vmem:[#allocation2 + $0xc8] sm:$0xff] %vm2798, %v3257
        %3290 = vst.msk [vmem:[#allocation2 + $0xd0] sm:$0xff] %vm2798, %v3258
        %3291 = vst.msk [vmem:[#allocation2 + $0xd8] sm:$0xff] %vm2798, %v3259
        %3292 = vst.msk [vmem:[#allocation2 + $0xe0] sm:$0xff] %vm2798, %v3260
        %3293 = vst.msk [vmem:[#allocation2 + $0xe8] sm:$0xff] %vm2798, %v3261
        %3294 = vst.msk [vmem:[#allocation2 + $0xf0] sm:$0xff] %vm2798, %v3262
        %3295 = vst.msk [vmem:[#allocation2 + $0xf8] sm:$0xff] %vm2798, %v3263
        %p3296 = scmp.eq.s32.totalorder %s20, 2
        // Predicated region
        $region64: #{gat_layer_pallas.5} parent=54 // pred_check
          %p3297 = pneg %p3296
        $region65: #{gat_layer_pallas.5} parent=54 // pred_check_branch
          %3299 = sbr.rel (%p3297) target = $region67
        $region66: #{gat_layer_pallas.5} parent=54 // pred_region
          %v3300 = vld [vmem:[#allocation3] sm:$0xff]
          %v3301 = vld [vmem:[#allocation3 + $0x8] sm:$0xff]
          %v3302 = vld [vmem:[#allocation3 + $0x10] sm:$0xff]
          %v3303 = vld [vmem:[#allocation3 + $0x18] sm:$0xff]
          %v3304 = vld [vmem:[#allocation3 + $0x20] sm:$0xff]
          %v3305 = vld [vmem:[#allocation3 + $0x28] sm:$0xff]
          %v3306 = vld [vmem:[#allocation3 + $0x30] sm:$0xff]
          %v3307 = vld [vmem:[#allocation3 + $0x38] sm:$0xff]
          %v3308 = vld [vmem:[#allocation3 + $0x40] sm:$0xff]
          %v3309 = vld [vmem:[#allocation3 + $0x48] sm:$0xff]
          %v3310 = vld [vmem:[#allocation3 + $0x50] sm:$0xff]
          %v3311 = vld [vmem:[#allocation3 + $0x58] sm:$0xff]
          %v3312 = vld [vmem:[#allocation3 + $0x60] sm:$0xff]
          %v3313 = vld [vmem:[#allocation3 + $0x68] sm:$0xff]
          %v3314 = vld [vmem:[#allocation3 + $0x70] sm:$0xff]
          %v3315 = vld [vmem:[#allocation3 + $0x78] sm:$0xff]
          %v3316 = vld [vmem:[#allocation3 + $0x80] sm:$0xff]
          %v3317 = vld [vmem:[#allocation3 + $0x88] sm:$0xff]
          %v3318 = vld [vmem:[#allocation3 + $0x90] sm:$0xff]
          %v3319 = vld [vmem:[#allocation3 + $0x98] sm:$0xff]
          %v3320 = vld [vmem:[#allocation3 + $0xa0] sm:$0xff]
          %v3321 = vld [vmem:[#allocation3 + $0xa8] sm:$0xff]
          %v3322 = vld [vmem:[#allocation3 + $0xb0] sm:$0xff]
          %v3323 = vld [vmem:[#allocation3 + $0xb8] sm:$0xff]
          %v3324 = vld [vmem:[#allocation3 + $0xc0] sm:$0xff]
          %v3325 = vld [vmem:[#allocation3 + $0xc8] sm:$0xff]
          %v3326 = vld [vmem:[#allocation3 + $0xd0] sm:$0xff]
          %v3327 = vld [vmem:[#allocation3 + $0xd8] sm:$0xff]
          %v3328 = vld [vmem:[#allocation3 + $0xe0] sm:$0xff]
          %v3329 = vld [vmem:[#allocation3 + $0xe8] sm:$0xff]
          %v3330 = vld [vmem:[#allocation3 + $0xf0] sm:$0xff]
          %v3331 = vld [vmem:[#allocation3 + $0xf8] sm:$0xff]
          %vm3332 = vcmp.gt.f32.partialorder %v3300, 0.0
          %vm3333 = vcmp.gt.f32.partialorder %v3301, 0.0
          %vm3334 = vcmp.gt.f32.partialorder %v3302, 0.0
          %vm3335 = vcmp.gt.f32.partialorder %v3303, 0.0
          %vm3336 = vcmp.gt.f32.partialorder %v3304, 0.0
          %vm3337 = vcmp.gt.f32.partialorder %v3305, 0.0
          %vm3338 = vcmp.gt.f32.partialorder %v3306, 0.0
          %vm3339 = vcmp.gt.f32.partialorder %v3307, 0.0
          %vm3340 = vcmp.gt.f32.partialorder %v3308, 0.0
          %vm3341 = vcmp.gt.f32.partialorder %v3309, 0.0
          %vm3342 = vcmp.gt.f32.partialorder %v3310, 0.0
          %vm3343 = vcmp.gt.f32.partialorder %v3311, 0.0
          %vm3344 = vcmp.gt.f32.partialorder %v3312, 0.0
          %vm3345 = vcmp.gt.f32.partialorder %v3313, 0.0
          %vm3346 = vcmp.gt.f32.partialorder %v3314, 0.0
          %vm3347 = vcmp.gt.f32.partialorder %v3315, 0.0
          %vm3348 = vcmp.gt.f32.partialorder %v3316, 0.0
          %vm3349 = vcmp.gt.f32.partialorder %v3317, 0.0
          %vm3350 = vcmp.gt.f32.partialorder %v3318, 0.0
          %vm3351 = vcmp.gt.f32.partialorder %v3319, 0.0
          %vm3352 = vcmp.gt.f32.partialorder %v3320, 0.0
          %vm3353 = vcmp.gt.f32.partialorder %v3321, 0.0
          %vm3354 = vcmp.gt.f32.partialorder %v3322, 0.0
          %vm3355 = vcmp.gt.f32.partialorder %v3323, 0.0
          %vm3356 = vcmp.gt.f32.partialorder %v3324, 0.0
          %vm3357 = vcmp.gt.f32.partialorder %v3325, 0.0
          %vm3358 = vcmp.gt.f32.partialorder %v3326, 0.0
          %vm3359 = vcmp.gt.f32.partialorder %v3327, 0.0
          %vm3360 = vcmp.gt.f32.partialorder %v3328, 0.0
          %vm3361 = vcmp.gt.f32.partialorder %v3329, 0.0
          %vm3362 = vcmp.gt.f32.partialorder %v3330, 0.0
          %vm3363 = vcmp.gt.f32.partialorder %v3331, 0.0
          %v3364 = vsel %vm3332, %v3300, 1.0
          %v3365 = vsel %vm3333, %v3301, 1.0
          %v3366 = vsel %vm3334, %v3302, 1.0
          %v3367 = vsel %vm3335, %v3303, 1.0
          %v3368 = vsel %vm3336, %v3304, 1.0
          %v3369 = vsel %vm3337, %v3305, 1.0
          %v3370 = vsel %vm3338, %v3306, 1.0
          %v3371 = vsel %vm3339, %v3307, 1.0
          %v3372 = vsel %vm3340, %v3308, 1.0
          %v3373 = vsel %vm3341, %v3309, 1.0
          %v3374 = vsel %vm3342, %v3310, 1.0
          %v3375 = vsel %vm3343, %v3311, 1.0
          %v3376 = vsel %vm3344, %v3312, 1.0
          %v3377 = vsel %vm3345, %v3313, 1.0
          %v3378 = vsel %vm3346, %v3314, 1.0
          %v3379 = vsel %vm3347, %v3315, 1.0
          %v3380 = vsel %vm3348, %v3316, 1.0
          %v3381 = vsel %vm3349, %v3317, 1.0
          %v3382 = vsel %vm3350, %v3318, 1.0
          %v3383 = vsel %vm3351, %v3319, 1.0
          %v3384 = vsel %vm3352, %v3320, 1.0
          %v3385 = vsel %vm3353, %v3321, 1.0
          %v3386 = vsel %vm3354, %v3322, 1.0
          %v3387 = vsel %vm3355, %v3323, 1.0
          %v3388 = vsel %vm3356, %v3324, 1.0
          %v3389 = vsel %vm3357, %v3325, 1.0
          %v3390 = vsel %vm3358, %v3326, 1.0
          %v3391 = vsel %vm3359, %v3327, 1.0
          %v3392 = vsel %vm3360, %v3328, 1.0
          %v3393 = vsel %vm3361, %v3329, 1.0
          %v3394 = vsel %vm3362, %v3330, 1.0
          %v3395 = vsel %vm3363, %v3331, 1.0
          %v3396 = vrcp.pop %v3364
          %v3397 = vrcp.pop %v3365
          %v3398 = vrcp.pop %v3366
          %v3399 = vrcp.pop %v3367
          %v3400 = vrcp.pop %v3368
          %v3401 = vrcp.pop %v3369
          %v3402 = vrcp.pop %v3370
          %v3403 = vrcp.pop %v3371
          %v3404 = vrcp.pop %v3372
          %v3405 = vrcp.pop %v3373
          %v3406 = vrcp.pop %v3374
          %v3407 = vrcp.pop %v3375
          %v3408 = vrcp.pop %v3376
          %v3409 = vrcp.pop %v3377
          %v3410 = vrcp.pop %v3378
          %v3411 = vrcp.pop %v3379
          %v3412 = vrcp.pop %v3380
          %v3413 = vrcp.pop %v3381
          %v3414 = vrcp.pop %v3382
          %v3415 = vrcp.pop %v3383
          %v3416 = vrcp.pop %v3384
          %v3417 = vrcp.pop %v3385
          %v3418 = vrcp.pop %v3386
          %v3419 = vrcp.pop %v3387
          %v3420 = vrcp.pop %v3388
          %v3421 = vrcp.pop %v3389
          %v3422 = vrcp.pop %v3390
          %v3423 = vrcp.pop %v3391
          %v3424 = vrcp.pop %v3392
          %v3425 = vrcp.pop %v3393
          %v3426 = vrcp.pop %v3394
          %v3427 = vrcp.pop %v3395
          %v3428 = vsel %vm3332, %v3396, 0.0
          %v3429 = vsel %vm3333, %v3397, 0.0
          %v3430 = vsel %vm3334, %v3398, 0.0
          %v3431 = vsel %vm3335, %v3399, 0.0
          %v3432 = vsel %vm3336, %v3400, 0.0
          %v3433 = vsel %vm3337, %v3401, 0.0
          %v3434 = vsel %vm3338, %v3402, 0.0
          %v3435 = vsel %vm3339, %v3403, 0.0
          %v3436 = vsel %vm3340, %v3404, 0.0
          %v3437 = vsel %vm3341, %v3405, 0.0
          %v3438 = vsel %vm3342, %v3406, 0.0
          %v3439 = vsel %vm3343, %v3407, 0.0
          %v3440 = vsel %vm3344, %v3408, 0.0
          %v3441 = vsel %vm3345, %v3409, 0.0
          %v3442 = vsel %vm3346, %v3410, 0.0
          %v3443 = vsel %vm3347, %v3411, 0.0
          %v3444 = vsel %vm3348, %v3412, 0.0
          %v3445 = vsel %vm3349, %v3413, 0.0
          %v3446 = vsel %vm3350, %v3414, 0.0
          %v3447 = vsel %vm3351, %v3415, 0.0
          %v3448 = vsel %vm3352, %v3416, 0.0
          %v3449 = vsel %vm3353, %v3417, 0.0
          %v3450 = vsel %vm3354, %v3418, 0.0
          %v3451 = vsel %vm3355, %v3419, 0.0
          %v3452 = vsel %vm3356, %v3420, 0.0
          %v3453 = vsel %vm3357, %v3421, 0.0
          %v3454 = vsel %vm3358, %v3422, 0.0
          %v3455 = vsel %vm3359, %v3423, 0.0
          %v3456 = vsel %vm3360, %v3424, 0.0
          %v3457 = vsel %vm3361, %v3425, 0.0
          %v3458 = vsel %vm3362, %v3426, 0.0
          %v3459 = vsel %vm3363, %v3427, 0.0
          %v3460 = vld [vmem:[#allocation2] sm:$0xff]
          %v3461 = vld [vmem:[#allocation2 + $0x8] sm:$0xff]
          %v3462 = vld [vmem:[#allocation2 + $0x10] sm:$0xff]
          %v3463 = vld [vmem:[#allocation2 + $0x18] sm:$0xff]
          %v3464 = vld [vmem:[#allocation2 + $0x20] sm:$0xff]
          %v3465 = vld [vmem:[#allocation2 + $0x28] sm:$0xff]
          %v3466 = vld [vmem:[#allocation2 + $0x30] sm:$0xff]
          %v3467 = vld [vmem:[#allocation2 + $0x38] sm:$0xff]
          %v3468 = vld [vmem:[#allocation2 + $0x40] sm:$0xff]
          %v3469 = vld [vmem:[#allocation2 + $0x48] sm:$0xff]
          %v3470 = vld [vmem:[#allocation2 + $0x50] sm:$0xff]
          %v3471 = vld [vmem:[#allocation2 + $0x58] sm:$0xff]
          %v3472 = vld [vmem:[#allocation2 + $0x60] sm:$0xff]
          %v3473 = vld [vmem:[#allocation2 + $0x68] sm:$0xff]
          %v3474 = vld [vmem:[#allocation2 + $0x70] sm:$0xff]
          %v3475 = vld [vmem:[#allocation2 + $0x78] sm:$0xff]
          %v3476 = vld [vmem:[#allocation2 + $0x80] sm:$0xff]
          %v3477 = vld [vmem:[#allocation2 + $0x88] sm:$0xff]
          %v3478 = vld [vmem:[#allocation2 + $0x90] sm:$0xff]
          %v3479 = vld [vmem:[#allocation2 + $0x98] sm:$0xff]
          %v3480 = vld [vmem:[#allocation2 + $0xa0] sm:$0xff]
          %v3481 = vld [vmem:[#allocation2 + $0xa8] sm:$0xff]
          %v3482 = vld [vmem:[#allocation2 + $0xb0] sm:$0xff]
          %v3483 = vld [vmem:[#allocation2 + $0xb8] sm:$0xff]
          %v3484 = vld [vmem:[#allocation2 + $0xc0] sm:$0xff]
          %v3485 = vld [vmem:[#allocation2 + $0xc8] sm:$0xff]
          %v3486 = vld [vmem:[#allocation2 + $0xd0] sm:$0xff]
          %v3487 = vld [vmem:[#allocation2 + $0xd8] sm:$0xff]
          %v3488 = vld [vmem:[#allocation2 + $0xe0] sm:$0xff]
          %v3489 = vld [vmem:[#allocation2 + $0xe8] sm:$0xff]
          %v3490 = vld [vmem:[#allocation2 + $0xf0] sm:$0xff]
          %v3491 = vld [vmem:[#allocation2 + $0xf8] sm:$0xff]
          %v3492 = vmul.f32 %v3460, %v3428
          %v3493 = vmul.f32 %v3461, %v3429
          %v3494 = vmul.f32 %v3462, %v3430
          %v3495 = vmul.f32 %v3463, %v3431
          %v3496 = vmul.f32 %v3464, %v3432
          %v3497 = vmul.f32 %v3465, %v3433
          %v3498 = vmul.f32 %v3466, %v3434
          %v3499 = vmul.f32 %v3467, %v3435
          %v3500 = vmul.f32 %v3468, %v3436
          %v3501 = vmul.f32 %v3469, %v3437
          %v3502 = vmul.f32 %v3470, %v3438
          %v3503 = vmul.f32 %v3471, %v3439
          %v3504 = vmul.f32 %v3472, %v3440
          %v3505 = vmul.f32 %v3473, %v3441
          %v3506 = vmul.f32 %v3474, %v3442
          %v3507 = vmul.f32 %v3475, %v3443
          %v3508 = vmul.f32 %v3476, %v3444
          %v3509 = vmul.f32 %v3477, %v3445
          %v3510 = vmul.f32 %v3478, %v3446
          %v3511 = vmul.f32 %v3479, %v3447
          %v3512 = vmul.f32 %v3480, %v3448
          %v3513 = vmul.f32 %v3481, %v3449
          %v3514 = vmul.f32 %v3482, %v3450
          %v3515 = vmul.f32 %v3483, %v3451
          %v3516 = vmul.f32 %v3484, %v3452
          %v3517 = vmul.f32 %v3485, %v3453
          %v3518 = vmul.f32 %v3486, %v3454
          %v3519 = vmul.f32 %v3487, %v3455
          %v3520 = vmul.f32 %v3488, %v3456
          %v3521 = vmul.f32 %v3489, %v3457
          %v3522 = vmul.f32 %v3490, %v3458
          %v3523 = vmul.f32 %v3491, %v3459
          %vm3524 = vcmask 523264
          %3525 = vst.msk [vmem:[%s332] sm:$0xff] %vm3524, %v3492
          %3526 = vst.msk [vmem:[%s332 + $0x8] sm:$0xff] %vm3524, %v3493
          %3527 = vst.msk [vmem:[%s332 + $0x10] sm:$0xff] %vm3524, %v3494
          %3528 = vst.msk [vmem:[%s332 + $0x18] sm:$0xff] %vm3524, %v3495
          %3529 = vst.msk [vmem:[%s332 + $0x20] sm:$0xff] %vm3524, %v3496
          %3530 = vst.msk [vmem:[%s332 + $0x28] sm:$0xff] %vm3524, %v3497
          %3531 = vst.msk [vmem:[%s332 + $0x30] sm:$0xff] %vm3524, %v3498
          %3532 = vst.msk [vmem:[%s332 + $0x38] sm:$0xff] %vm3524, %v3499
          %3533 = vst.msk [vmem:[%s332 + $0x40] sm:$0xff] %vm3524, %v3500
          %3534 = vst.msk [vmem:[%s332 + $0x48] sm:$0xff] %vm3524, %v3501
          %3535 = vst.msk [vmem:[%s332 + $0x50] sm:$0xff] %vm3524, %v3502
          %3536 = vst.msk [vmem:[%s332 + $0x58] sm:$0xff] %vm3524, %v3503
          %3537 = vst.msk [vmem:[%s332 + $0x60] sm:$0xff] %vm3524, %v3504
          %3538 = vst.msk [vmem:[%s332 + $0x68] sm:$0xff] %vm3524, %v3505
          %3539 = vst.msk [vmem:[%s332 + $0x70] sm:$0xff] %vm3524, %v3506
          %3540 = vst.msk [vmem:[%s332 + $0x78] sm:$0xff] %vm3524, %v3507
          %3541 = vst.msk [vmem:[%s332 + $0x80] sm:$0xff] %vm3524, %v3508
          %3542 = vst.msk [vmem:[%s332 + $0x88] sm:$0xff] %vm3524, %v3509
          %3543 = vst.msk [vmem:[%s332 + $0x90] sm:$0xff] %vm3524, %v3510
          %3544 = vst.msk [vmem:[%s332 + $0x98] sm:$0xff] %vm3524, %v3511
          %3545 = vst.msk [vmem:[%s332 + $0xa0] sm:$0xff] %vm3524, %v3512
          %3546 = vst.msk [vmem:[%s332 + $0xa8] sm:$0xff] %vm3524, %v3513
          %3547 = vst.msk [vmem:[%s332 + $0xb0] sm:$0xff] %vm3524, %v3514
          %3548 = vst.msk [vmem:[%s332 + $0xb8] sm:$0xff] %vm3524, %v3515
          %3549 = vst.msk [vmem:[%s332 + $0xc0] sm:$0xff] %vm3524, %v3516
          %3550 = vst.msk [vmem:[%s332 + $0xc8] sm:$0xff] %vm3524, %v3517
          %3551 = vst.msk [vmem:[%s332 + $0xd0] sm:$0xff] %vm3524, %v3518
          %3552 = vst.msk [vmem:[%s332 + $0xd8] sm:$0xff] %vm3524, %v3519
          %3553 = vst.msk [vmem:[%s332 + $0xe0] sm:$0xff] %vm3524, %v3520
          %3554 = vst.msk [vmem:[%s332 + $0xe8] sm:$0xff] %vm3524, %v3521
          %3555 = vst.msk [vmem:[%s332 + $0xf0] sm:$0xff] %vm3524, %v3522
          %3556 = vst.msk [vmem:[%s332 + $0xf8] sm:$0xff] %vm3524, %v3523
        $region67: #{gat_layer_pallas.5} parent=54 // pred_fallthru
          _
        %s3557 = smul.u32 32, %s19
        %p3558 = scmp.lt.s32.totalorder %s3557, 63
        %s3559 = scalar_select %p3558, %s3557, 63
        %s3560 = smul.addr %s3559, 8
        %s3561 = scalar_lea.vmem %s4, %s3560
        // Predicated region
        $region68: #{gat_layer_pallas.5} parent=54 // pred_check
          %p3562 = pneg %p151
        $region69: #{gat_layer_pallas.5} parent=54 // pred_check_branch
          %3564 = sbr.rel (%p3562) target = $region71
        $region70: #{gat_layer_pallas.5} parent=54 // pred_region
          %s3565 = smul.u32 32, %s19
        $region71: #{gat_layer_pallas.5} parent=54 // pred_fallthru
          _
      $region55: #{gat_layer_pallas.5} parent=5 // pred_fallthru
        _
      %p3566 = scmp.le.s32.totalorder 2, %s10
      // Predicated region
      $region72: #{gat_layer_pallas.5} parent=5 // pred_check
        %p3567 = pneg %p3566
      $region73: #{gat_layer_pallas.5} parent=5 // pred_check_branch
        %3569 = sbr.rel (%p3567) target = $region75
      $region74: #{gat_layer_pallas.5} parent=5 // pred_region
        %s3570 = ssub.s32 %s10, 2
        // Predicated region
        $region76: #{gat_layer_pallas.5} parent=74 // pred_check
          %p3571 = pneg %p157
        $region77: #{gat_layer_pallas.5} parent=74 // pred_check_branch
          %3573 = sbr.rel (%p3571) target = $region79
        $region78: #{gat_layer_pallas.5} parent=74 // pred_region
          %s3574 = smul.u32 32, %s21
          %p3575 = scmp.lt.s32.totalorder %s3574, 63
          %s3576 = scalar_select %p3575, %s3574, 63
          %s3577 = smul.addr %s3576, 8
          %s3578 = scalar_lea.vmem %s4, %s3577
        $region79: #{gat_layer_pallas.5} parent=74 // pred_fallthru
          _
      $region75: #{gat_layer_pallas.5} parent=5 // pred_fallthru
        _
    $region6: #{gat_layer_pallas.5} parent=1 // loop_footer
      %s14 = sadd.s32 1, %s10
    $region7: #{gat_layer_pallas.5} parent=1 // loop_footer_branch
      %9 = sbr.rel target = $region3
    $region8: #{gat_layer_pallas.5} parent=1 // loop_exit
      _

</llo_original>
